<compile_context>
chip_gen: v6e
topology: v6e:2x2x1
jax: 0.10.0
libtpu: 0.0.40
codegen_flags: <defaults>
</compile_context>

<pallas_src>
import functools

import jax
import jax.numpy as jnp
from jax import lax
from jax.experimental import pallas as pl
from jax.experimental.pallas import tpu as pltpu


def basic_block_kernel(x_ref, w1_ref, w2_ref, s1_ref, b1_ref, s2_ref, b2_ref,
                       out_ref, xpad_ref, *, H, W, Cin, Cout):
    # x_ref   : (1, H, W, Cin)      f32  one NHWC image (also the residual)
    # w1_ref  : (9, Cin,  Cout)     bf16 conv1 weights, tap-major
    # w2_ref  : (9, Cout, Cout)     bf16 conv2 weights, tap-major
    # s*/b*   : (1, Cout)           f32  folded BN scale / bias
    # out_ref : (1, H, W, Cout)     f32
    # xpad_ref: (H+2, W+2, Cin)     f32  scratch with permanent zero border
    x = x_ref[0]                                            # (H, W, Cin)

    # one-time clear -> zero halo for both convs (interiors get overwritten)
    xpad_ref[...] = jnp.zeros_like(xpad_ref)

    def conv3x3(src, w_ref, C):
        """3x3 SAME conv: 9 shifted-window matmuls accumulated in f32."""
        xpad_ref[1:H + 1, 1:W + 1, :] = src                 # interior only
        xp = xpad_ref[...]                                  # (H+2, W+2, C)
        acc = jnp.zeros((H * W, Cout), jnp.float32)
        for ky in range(3):
            for kx in range(3):
                win = xp[ky:ky + H, kx:kx + W, :]           # (H, W, C)
                win = win.reshape(H * W, C).astype(jnp.bfloat16)
                acc = acc + jnp.dot(win, w_ref[ky * 3 + kx],
                                    preferred_element_type=jnp.float32)
        return acc                                          # (H*W, Cout) f32

    # ---- conv1 -> bn1 -> relu ------------------------------------------------
    acc1 = conv3x3(x, w1_ref, Cin)
    y = jnp.maximum(acc1 * s1_ref[...] + b1_ref[...], 0.0)

    # ---- conv2 -> bn2 -> +residual -> relu ----------------------------------
    acc2 = conv3x3(y.reshape(H, W, Cout), w2_ref, Cout)
    z = acc2 * s2_ref[...] + b2_ref[...] + x.reshape(H * W, Cin)   # Cin == Cout
    out_ref[0] = jnp.maximum(z, 0.0).reshape(H, W, Cout)


def basic_block_pallas_nhwc(x_nhwc, w1, w2, bn1, bn2, eps=1e-5):
    """NHWC entry point. w*: (3,3,I,O) HWIO. bn*: dicts gamma/beta/mean/var."""
    N, H, W, Cin = x_nhwc.shape
    Cout = w1.shape[-1]
    assert w1.shape == (3, 3, Cin, Cout) and w2.shape == (3, 3, Cout, Cout)
    assert Cin == Cout, "identity residual requires inplanes == planes"

    def fold(bn):
        scale = bn["gamma"] / jnp.sqrt(bn["var"] + eps)
        bias = bn["beta"] - bn["mean"] * scale
        return (scale.reshape(1, -1).astype(jnp.float32),
                bias.reshape(1, -1).astype(jnp.float32))

    s1, b1 = fold(bn1)
    s2, b2 = fold(bn2)

    # one-time: tap-major reshape + bf16 cast (MXU operand dtype)
    w1t = w1.reshape(9, Cin, Cout).astype(jnp.bfloat16)
    w2t = w2.reshape(9, Cout, Cout).astype(jnp.bfloat16)

    kernel = functools.partial(basic_block_kernel, H=H, W=W, Cin=Cin, Cout=Cout)

    return pl.pallas_call(
        kernel,
        out_shape=jax.ShapeDtypeStruct((N, H, W, Cout), jnp.float32),
        grid_spec=pltpu.PrefetchScalarGridSpec(
            num_scalar_prefetch=0,
            grid=(N,),
            in_specs=[
                pl.BlockSpec((1, H, W, Cin), lambda n: (n, 0, 0, 0)),
                pl.BlockSpec((9, Cin, Cout), lambda n: (0, 0, 0)),
                pl.BlockSpec((9, Cout, Cout), lambda n: (0, 0, 0)),
                pl.BlockSpec((1, Cout), lambda n: (0, 0)),
                pl.BlockSpec((1, Cout), lambda n: (0, 0)),
                pl.BlockSpec((1, Cout), lambda n: (0, 0)),
                pl.BlockSpec((1, Cout), lambda n: (0, 0)),
            ],
            out_specs=pl.BlockSpec((1, H, W, Cout), lambda n: (n, 0, 0, 0)),
            scratch_shapes=[pltpu.VMEM((H + 2, W + 2, Cin), jnp.float32)],
        ),
        compiler_params=pltpu.CompilerParams(
            dimension_semantics=("parallel",),
            vmem_limit_bytes=32 * 1024 * 1024),
    )(x_nhwc.astype(jnp.float32), w1t, w2t, s1, b1, s2, b2)


def basic_block_pallas(x_nchw, w1, w2, bn1, bn2, eps=1e-5):
    """Thin NCHW wrapper matching the PyTorch module's interface."""
    x_nhwc = jnp.transpose(x_nchw, (0, 2, 3, 1))
    out = basic_block_pallas_nhwc(x_nhwc, w1, w2, bn1, bn2, eps)
    return jnp.transpose(out, (0, 3, 1, 2))


def basic_block_ref(x_nchw, w1, w2, bn1, bn2, eps=1e-5):
    """Pure-JAX f32 reference (inference-mode BN)."""
    x = jnp.transpose(x_nchw, (0, 2, 3, 1))
    dn = ("NHWC", "HWIO", "NHWC")

    def bn(y, p):
        scale = p["gamma"] / jnp.sqrt(p["var"] + eps)
        return y * scale + (p["beta"] - p["mean"] * scale)

    out = lax.conv_general_dilated(x, w1, (1, 1), "SAME", dimension_numbers=dn)
    out = jax.nn.relu(bn(out, bn1))
    out = lax.conv_general_dilated(out, w2, (1, 1), "SAME", dimension_numbers=dn)
    out = jax.nn.relu(bn(out, bn2) + x)
    return jnp.transpose(out, (0, 3, 1, 2))


if __name__ == "__main__":
    key = jax.random.PRNGKey(0)
    N, C, H, W = 2, 8, 16, 16          # inplanes = planes = 8, stride = 1
    k = jax.random.split(key, 8)

    x = jax.random.normal(k[0], (N, C, H, W), jnp.float32)
    w1 = jax.random.normal(k[1], (3, 3, C, C), jnp.float32) * 0.1
    w2 = jax.random.normal(k[2], (3, 3, C, C), jnp.float32) * 0.1
    bn1 = dict(gamma=jax.random.uniform(k[3], (C,), jnp.float32, 0.5, 1.5),
               beta=jax.random.normal(k[4], (C,), jnp.float32) * 0.1,
               mean=jax.random.normal(k[5], (C,), jnp.float32) * 0.1,
               var=jax.random.uniform(k[6], (C,), jnp.float32, 0.5, 1.5))
    bn2 = dict(gamma=jnp.ones((C,), jnp.float32),
               beta=jnp.zeros((C,), jnp.float32),
               mean=jax.random.normal(k[7], (C,), jnp.float32) * 0.1,
               var=jnp.ones((C,), jnp.float32))

    out = jax.block_until_ready(basic_block_pallas(x, w1, w2, bn1, bn2))
    ref = jax.block_until_ready(basic_block_ref(x, w1, w2, bn1, bn2))
    assert out.shape == (N, C, H, W)
    # bf16 MXU operands (f32 accumulation) -> loose tolerance vs f32 reference
    err = float(jnp.max(jnp.abs(out - ref)))
    assert err < 1e-1, err
    print("KERNEL_OK")
</pallas_src>

<mosaic_0001>
module attributes {stable_mosaic.version = 11 : i64} {
  func.func @basic_block_kernel(%arg0: i32, %arg1: memref<1x16x16x8xf32, #tpu.memory_space<vmem>>, %arg2: memref<9x8x8xbf16, #tpu.memory_space<vmem>>, %arg3: memref<9x8x8xbf16, #tpu.memory_space<vmem>>, %arg4: memref<1x8xf32, #tpu.memory_space<vmem>>, %arg5: memref<1x8xf32, #tpu.memory_space<vmem>>, %arg6: memref<1x8xf32, #tpu.memory_space<vmem>>, %arg7: memref<1x8xf32, #tpu.memory_space<vmem>>, %arg8: memref<1x16x16x8xf32, #tpu.memory_space<vmem>>, %arg9: memref<18x18x8xf32, #tpu.memory_space<vmem>>) attributes {dimension_semantics = [#tpu.dimension_semantics<parallel>], iteration_bounds = array<i64: 2>, scalar_prefetch = 0 : i64, scratch_operands = 1 : i64, tpu.core_type = #tpu.core_type<tc>, window_params = [{transform_indices = @transform_0, window_bounds = array<i64: 1, 16, 16, 8>}, {pipeline_mode = #tpu.pipeline_mode<synchronous>, transform_indices = @transform_1, window_bounds = array<i64: 9, 8, 8>}, {pipeline_mode = #tpu.pipeline_mode<synchronous>, transform_indices = @transform_2, window_bounds = array<i64: 9, 8, 8>}, {pipeline_mode = #tpu.pipeline_mode<synchronous>, transform_indices = @transform_3, window_bounds = array<i64: 1, 8>}, {pipeline_mode = #tpu.pipeline_mode<synchronous>, transform_indices = @transform_4, window_bounds = array<i64: 1, 8>}, {pipeline_mode = #tpu.pipeline_mode<synchronous>, transform_indices = @transform_5, window_bounds = array<i64: 1, 8>}, {pipeline_mode = #tpu.pipeline_mode<synchronous>, transform_indices = @transform_6, window_bounds = array<i64: 1, 8>}, {transform_indices = @transform_7, window_bounds = array<i64: 1, 16, 16, 8>}]} {
    %c0 = arith.constant 0 : index
    %c0_0 = arith.constant 0 : index
    %c0_1 = arith.constant 0 : index
    %c0_2 = arith.constant 0 : index
    %0 = vector.load %arg1[%c0, %c0_0, %c0_1, %c0_2] : memref<1x16x16x8xf32, #tpu.memory_space<vmem>>, vector<1x16x16x8xf32>
    %1 = vector.shape_cast %0 : vector<1x16x16x8xf32> to vector<16x16x8xf32>
    %cst = arith.constant 0.000000e+00 : f32
    %2 = vector.broadcast %cst : f32 to vector<18x18x8xf32>
    %c0_3 = arith.constant 0 : index
    %c0_4 = arith.constant 0 : index
    %c0_5 = arith.constant 0 : index
    %3 = vector.load %arg9[%c0_3, %c0_4, %c0_5] : memref<18x18x8xf32, #tpu.memory_space<vmem>>, vector<18x18x8xf32>
    tpu.vector_store %arg9[%c0_3, %c0_4, %c0_5], %2 {strides = array<i32>} : memref<18x18x8xf32, #tpu.memory_space<vmem>>, vector<18x18x8xf32>,
    %c1 = arith.constant 1 : index
    %c1_6 = arith.constant 1 : index
    %c0_7 = arith.constant 0 : index
    %4 = vector.load %arg9[%c1, %c1_6, %c0_7] : memref<18x18x8xf32, #tpu.memory_space<vmem>>, vector<16x16x8xf32>
    tpu.vector_store %arg9[%c1, %c1_6, %c0_7], %1 {strides = array<i32>} : memref<18x18x8xf32, #tpu.memory_space<vmem>>, vector<16x16x8xf32>,
    %c0_8 = arith.constant 0 : index
    %c0_9 = arith.constant 0 : index
    %c0_10 = arith.constant 0 : index
    %5 = vector.load %arg9[%c0_8, %c0_9, %c0_10] : memref<18x18x8xf32, #tpu.memory_space<vmem>>, vector<18x18x8xf32>
    %cst_11 = arith.constant 0.000000e+00 : f32
    %6 = vector.broadcast %cst_11 : f32 to vector<256x8xf32>
    %7 = vector.extract_strided_slice %5 {offsets = [0, 0, 0], sizes = [16, 16, 8], strides = [1, 1, 1]} : vector<18x18x8xf32> to vector<16x16x8xf32>
    %8 = vector.shape_cast %7 : vector<16x16x8xf32> to vector<256x8xf32>
    %9 = arith.truncf %8 : vector<256x8xf32> to vector<256x8xbf16>
    %c0_12 = arith.constant 0 : index
    %c0_13 = arith.constant 0 : index
    %c0_14 = arith.constant 0 : index
    %10 = vector.load %arg2[%c0_12, %c0_13, %c0_14] : memref<9x8x8xbf16, #tpu.memory_space<vmem>>, vector<1x8x8xbf16>
    %11 = vector.shape_cast %10 : vector<1x8x8xbf16> to vector<8x8xbf16>
    %cst_15 = arith.constant dense<0.000000e+00> : vector<256x8xf32>
    %12 = tpu.matmul %9, %11, %cst_15 {dimension_numbers = #tpu.dot_dimension_numbers<[1], [0], [0], [1], [0, 0, 1, 1], [], []>} : vector<256x8xbf16>, vector<8x8xbf16>, vector<256x8xf32> -> vector<256x8xf32>
    %13 = arith.addf %6, %12 : vector<256x8xf32>
    %14 = vector.extract_strided_slice %5 {offsets = [0, 1, 0], sizes = [16, 16, 8], strides = [1, 1, 1]} : vector<18x18x8xf32> to vector<16x16x8xf32>
    %15 = vector.shape_cast %14 : vector<16x16x8xf32> to vector<256x8xf32>
    %16 = arith.truncf %15 : vector<256x8xf32> to vector<256x8xbf16>
    %c1_16 = arith.constant 1 : index
    %c0_17 = arith.constant 0 : index
    %c0_18 = arith.constant 0 : index
    %17 = vector.load %arg2[%c1_16, %c0_17, %c0_18] : memref<9x8x8xbf16, #tpu.memory_space<vmem>>, vector<1x8x8xbf16>
    %18 = vector.shape_cast %17 : vector<1x8x8xbf16> to vector<8x8xbf16>
    %cst_19 = arith.constant dense<0.000000e+00> : vector<256x8xf32>
    %19 = tpu.matmul %16, %18, %cst_19 {dimension_numbers = #tpu.dot_dimension_numbers<[1], [0], [0], [1], [0, 0, 1, 1], [], []>} : vector<256x8xbf16>, vector<8x8xbf16>, vector<256x8xf32> -> vector<256x8xf32>
    %20 = arith.addf %13, %19 : vector<256x8xf32>
    %21 = vector.extract_strided_slice %5 {offsets = [0, 2, 0], sizes = [16, 16, 8], strides = [1, 1, 1]} : vector<18x18x8xf32> to vector<16x16x8xf32>
    %22 = vector.shape_cast %21 : vector<16x16x8xf32> to vector<256x8xf32>
    %23 = arith.truncf %22 : vector<256x8xf32> to vector<256x8xbf16>
    %c2 = arith.constant 2 : index
    %c0_20 = arith.constant 0 : index
    %c0_21 = arith.constant 0 : index
    %24 = vector.load %arg2[%c2, %c0_20, %c0_21] : memref<9x8x8xbf16, #tpu.memory_space<vmem>>, vector<1x8x8xbf16>
    %25 = vector.shape_cast %24 : vector<1x8x8xbf16> to vector<8x8xbf16>
    %cst_22 = arith.constant dense<0.000000e+00> : vector<256x8xf32>
    %26 = tpu.matmul %23, %25, %cst_22 {dimension_numbers = #tpu.dot_dimension_numbers<[1], [0], [0], [1], [0, 0, 1, 1], [], []>} : vector<256x8xbf16>, vector<8x8xbf16>, vector<256x8xf32> -> vector<256x8xf32>
    %27 = arith.addf %20, %26 : vector<256x8xf32>
    %28 = vector.extract_strided_slice %5 {offsets = [1, 0, 0], sizes = [16, 16, 8], strides = [1, 1, 1]} : vector<18x18x8xf32> to vector<16x16x8xf32>
    %29 = vector.shape_cast %28 : vector<16x16x8xf32> to vector<256x8xf32>
    %30 = arith.truncf %29 : vector<256x8xf32> to vector<256x8xbf16>
    %c3 = arith.constant 3 : index
    %c0_23 = arith.constant 0 : index
    %c0_24 = arith.constant 0 : index
    %31 = vector.load %arg2[%c3, %c0_23, %c0_24] : memref<9x8x8xbf16, #tpu.memory_space<vmem>>, vector<1x8x8xbf16>
    %32 = vector.shape_cast %31 : vector<1x8x8xbf16> to vector<8x8xbf16>
    %cst_25 = arith.constant dense<0.000000e+00> : vector<256x8xf32>
    %33 = tpu.matmul %30, %32, %cst_25 {dimension_numbers = #tpu.dot_dimension_numbers<[1], [0], [0], [1], [0, 0, 1, 1], [], []>} : vector<256x8xbf16>, vector<8x8xbf16>, vector<256x8xf32> -> vector<256x8xf32>
    %34 = arith.addf %27, %33 : vector<256x8xf32>
    %35 = vector.extract_strided_slice %5 {offsets = [1, 1, 0], sizes = [16, 16, 8], strides = [1, 1, 1]} : vector<18x18x8xf32> to vector<16x16x8xf32>
    %36 = vector.shape_cast %35 : vector<16x16x8xf32> to vector<256x8xf32>
    %37 = arith.truncf %36 : vector<256x8xf32> to vector<256x8xbf16>
    %c4 = arith.constant 4 : index
    %c0_26 = arith.constant 0 : index
    %c0_27 = arith.constant 0 : index
    %38 = vector.load %arg2[%c4, %c0_26, %c0_27] : memref<9x8x8xbf16, #tpu.memory_space<vmem>>, vector<1x8x8xbf16>
    %39 = vector.shape_cast %38 : vector<1x8x8xbf16> to vector<8x8xbf16>
    %cst_28 = arith.constant dense<0.000000e+00> : vector<256x8xf32>
    %40 = tpu.matmul %37, %39, %cst_28 {dimension_numbers = #tpu.dot_dimension_numbers<[1], [0], [0], [1], [0, 0, 1, 1], [], []>} : vector<256x8xbf16>, vector<8x8xbf16>, vector<256x8xf32> -> vector<256x8xf32>
    %41 = arith.addf %34, %40 : vector<256x8xf32>
    %42 = vector.extract_strided_slice %5 {offsets = [1, 2, 0], sizes = [16, 16, 8], strides = [1, 1, 1]} : vector<18x18x8xf32> to vector<16x16x8xf32>
    %43 = vector.shape_cast %42 : vector<16x16x8xf32> to vector<256x8xf32>
    %44 = arith.truncf %43 : vector<256x8xf32> to vector<256x8xbf16>
    %c5 = arith.constant 5 : index
    %c0_29 = arith.constant 0 : index
    %c0_30 = arith.constant 0 : index
    %45 = vector.load %arg2[%c5, %c0_29, %c0_30] : memref<9x8x8xbf16, #tpu.memory_space<vmem>>, vector<1x8x8xbf16>
    %46 = vector.shape_cast %45 : vector<1x8x8xbf16> to vector<8x8xbf16>
    %cst_31 = arith.constant dense<0.000000e+00> : vector<256x8xf32>
    %47 = tpu.matmul %44, %46, %cst_31 {dimension_numbers = #tpu.dot_dimension_numbers<[1], [0], [0], [1], [0, 0, 1, 1], [], []>} : vector<256x8xbf16>, vector<8x8xbf16>, vector<256x8xf32> -> vector<256x8xf32>
    %48 = arith.addf %41, %47 : vector<256x8xf32>
    %49 = vector.extract_strided_slice %5 {offsets = [2, 0, 0], sizes = [16, 16, 8], strides = [1, 1, 1]} : vector<18x18x8xf32> to vector<16x16x8xf32>
    %50 = vector.shape_cast %49 : vector<16x16x8xf32> to vector<256x8xf32>
    %51 = arith.truncf %50 : vector<256x8xf32> to vector<256x8xbf16>
    %c6 = arith.constant 6 : index
    %c0_32 = arith.constant 0 : index
    %c0_33 = arith.constant 0 : index
    %52 = vector.load %arg2[%c6, %c0_32, %c0_33] : memref<9x8x8xbf16, #tpu.memory_space<vmem>>, vector<1x8x8xbf16>
    %53 = vector.shape_cast %52 : vector<1x8x8xbf16> to vector<8x8xbf16>
    %cst_34 = arith.constant dense<0.000000e+00> : vector<256x8xf32>
    %54 = tpu.matmul %51, %53, %cst_34 {dimension_numbers = #tpu.dot_dimension_numbers<[1], [0], [0], [1], [0, 0, 1, 1], [], []>} : vector<256x8xbf16>, vector<8x8xbf16>, vector<256x8xf32> -> vector<256x8xf32>
    %55 = arith.addf %48, %54 : vector<256x8xf32>
    %56 = vector.extract_strided_slice %5 {offsets = [2, 1, 0], sizes = [16, 16, 8], strides = [1, 1, 1]} : vector<18x18x8xf32> to vector<16x16x8xf32>
    %57 = vector.shape_cast %56 : vector<16x16x8xf32> to vector<256x8xf32>
    %58 = arith.truncf %57 : vector<256x8xf32> to vector<256x8xbf16>
    %c7 = arith.constant 7 : index
    %c0_35 = arith.constant 0 : index
    %c0_36 = arith.constant 0 : index
    %59 = vector.load %arg2[%c7, %c0_35, %c0_36] : memref<9x8x8xbf16, #tpu.memory_space<vmem>>, vector<1x8x8xbf16>
    %60 = vector.shape_cast %59 : vector<1x8x8xbf16> to vector<8x8xbf16>
    %cst_37 = arith.constant dense<0.000000e+00> : vector<256x8xf32>
    %61 = tpu.matmul %58, %60, %cst_37 {dimension_numbers = #tpu.dot_dimension_numbers<[1], [0], [0], [1], [0, 0, 1, 1], [], []>} : vector<256x8xbf16>, vector<8x8xbf16>, vector<256x8xf32> -> vector<256x8xf32>
    %62 = arith.addf %55, %61 : vector<256x8xf32>
    %63 = vector.extract_strided_slice %5 {offsets = [2, 2, 0], sizes = [16, 16, 8], strides = [1, 1, 1]} : vector<18x18x8xf32> to vector<16x16x8xf32>
    %64 = vector.shape_cast %63 : vector<16x16x8xf32> to vector<256x8xf32>
    %65 = arith.truncf %64 : vector<256x8xf32> to vector<256x8xbf16>
    %c8 = arith.constant 8 : index
    %c0_38 = arith.constant 0 : index
    %c0_39 = arith.constant 0 : index
    %66 = vector.load %arg2[%c8, %c0_38, %c0_39] : memref<9x8x8xbf16, #tpu.memory_space<vmem>>, vector<1x8x8xbf16>
    %67 = vector.shape_cast %66 : vector<1x8x8xbf16> to vector<8x8xbf16>
    %cst_40 = arith.constant dense<0.000000e+00> : vector<256x8xf32>
    %68 = tpu.matmul %65, %67, %cst_40 {dimension_numbers = #tpu.dot_dimension_numbers<[1], [0], [0], [1], [0, 0, 1, 1], [], []>} : vector<256x8xbf16>, vector<8x8xbf16>, vector<256x8xf32> -> vector<256x8xf32>
    %69 = arith.addf %62, %68 : vector<256x8xf32>
    %c0_41 = arith.constant 0 : index
    %c0_42 = arith.constant 0 : index
    %70 = vector.load %arg4[%c0_41, %c0_42] : memref<1x8xf32, #tpu.memory_space<vmem>>, vector<1x8xf32>
    %71 = vector.broadcast %70 : vector<1x8xf32> to vector<256x8xf32>
    %72 = arith.mulf %69, %71 : vector<256x8xf32>
    %c0_43 = arith.constant 0 : index
    %c0_44 = arith.constant 0 : index
    %73 = vector.load %arg5[%c0_43, %c0_44] : memref<1x8xf32, #tpu.memory_space<vmem>>, vector<1x8xf32>
    %74 = vector.broadcast %73 : vector<1x8xf32> to vector<256x8xf32>
    %75 = arith.addf %72, %74 : vector<256x8xf32>
    %cst_45 = arith.constant 0.000000e+00 : f32
    %76 = vector.broadcast %cst_45 : f32 to vector<256x8xf32>
    %77 = arith.maximumf %75, %76 : vector<256x8xf32>
    %78 = vector.shape_cast %77 : vector<256x8xf32> to vector<16x16x8xf32>
    %c1_46 = arith.constant 1 : index
    %c1_47 = arith.constant 1 : index
    %c0_48 = arith.constant 0 : index
    %79 = vector.load %arg9[%c1_46, %c1_47, %c0_48] : memref<18x18x8xf32, #tpu.memory_space<vmem>>, vector<16x16x8xf32>
    tpu.vector_store %arg9[%c1_46, %c1_47, %c0_48], %78 {strides = array<i32>} : memref<18x18x8xf32, #tpu.memory_space<vmem>>, vector<16x16x8xf32>,
    %c0_49 = arith.constant 0 : index
    %c0_50 = arith.constant 0 : index
    %c0_51 = arith.constant 0 : index
    %80 = vector.load %arg9[%c0_49, %c0_50, %c0_51] : memref<18x18x8xf32, #tpu.memory_space<vmem>>, vector<18x18x8xf32>
    %cst_52 = arith.constant 0.000000e+00 : f32
    %81 = vector.broadcast %cst_52 : f32 to vector<256x8xf32>
    %82 = vector.extract_strided_slice %80 {offsets = [0, 0, 0], sizes = [16, 16, 8], strides = [1, 1, 1]} : vector<18x18x8xf32> to vector<16x16x8xf32>
    %83 = vector.shape_cast %82 : vector<16x16x8xf32> to vector<256x8xf32>
    %84 = arith.truncf %83 : vector<256x8xf32> to vector<256x8xbf16>
    %c0_53 = arith.constant 0 : index
    %c0_54 = arith.constant 0 : index
    %c0_55 = arith.constant 0 : index
    %85 = vector.load %arg3[%c0_53, %c0_54, %c0_55] : memref<9x8x8xbf16, #tpu.memory_space<vmem>>, vector<1x8x8xbf16>
    %86 = vector.shape_cast %85 : vector<1x8x8xbf16> to vector<8x8xbf16>
    %cst_56 = arith.constant dense<0.000000e+00> : vector<256x8xf32>
    %87 = tpu.matmul %84, %86, %cst_56 {dimension_numbers = #tpu.dot_dimension_numbers<[1], [0], [0], [1], [0, 0, 1, 1], [], []>} : vector<256x8xbf16>, vector<8x8xbf16>, vector<256x8xf32> -> vector<256x8xf32>
    %88 = arith.addf %81, %87 : vector<256x8xf32>
    %89 = vector.extract_strided_slice %80 {offsets = [0, 1, 0], sizes = [16, 16, 8], strides = [1, 1, 1]} : vector<18x18x8xf32> to vector<16x16x8xf32>
    %90 = vector.shape_cast %89 : vector<16x16x8xf32> to vector<256x8xf32>
    %91 = arith.truncf %90 : vector<256x8xf32> to vector<256x8xbf16>
    %c1_57 = arith.constant 1 : index
    %c0_58 = arith.constant 0 : index
    %c0_59 = arith.constant 0 : index
    %92 = vector.load %arg3[%c1_57, %c0_58, %c0_59] : memref<9x8x8xbf16, #tpu.memory_space<vmem>>, vector<1x8x8xbf16>
    %93 = vector.shape_cast %92 : vector<1x8x8xbf16> to vector<8x8xbf16>
    %cst_60 = arith.constant dense<0.000000e+00> : vector<256x8xf32>
    %94 = tpu.matmul %91, %93, %cst_60 {dimension_numbers = #tpu.dot_dimension_numbers<[1], [0], [0], [1], [0, 0, 1, 1], [], []>} : vector<256x8xbf16>, vector<8x8xbf16>, vector<256x8xf32> -> vector<256x8xf32>
    %95 = arith.addf %88, %94 : vector<256x8xf32>
    %96 = vector.extract_strided_slice %80 {offsets = [0, 2, 0], sizes = [16, 16, 8], strides = [1, 1, 1]} : vector<18x18x8xf32> to vector<16x16x8xf32>
    %97 = vector.shape_cast %96 : vector<16x16x8xf32> to vector<256x8xf32>
    %98 = arith.truncf %97 : vector<256x8xf32> to vector<256x8xbf16>
    %c2_61 = arith.constant 2 : index
    %c0_62 = arith.constant 0 : index
    %c0_63 = arith.constant 0 : index
    %99 = vector.load %arg3[%c2_61, %c0_62, %c0_63] : memref<9x8x8xbf16, #tpu.memory_space<vmem>>, vector<1x8x8xbf16>
    %100 = vector.shape_cast %99 : vector<1x8x8xbf16> to vector<8x8xbf16>
    %cst_64 = arith.constant dense<0.000000e+00> : vector<256x8xf32>
    %101 = tpu.matmul %98, %100, %cst_64 {dimension_numbers = #tpu.dot_dimension_numbers<[1], [0], [0], [1], [0, 0, 1, 1], [], []>} : vector<256x8xbf16>, vector<8x8xbf16>, vector<256x8xf32> -> vector<256x8xf32>
    %102 = arith.addf %95, %101 : vector<256x8xf32>
    %103 = vector.extract_strided_slice %80 {offsets = [1, 0, 0], sizes = [16, 16, 8], strides = [1, 1, 1]} : vector<18x18x8xf32> to vector<16x16x8xf32>
    %104 = vector.shape_cast %103 : vector<16x16x8xf32> to vector<256x8xf32>
    %105 = arith.truncf %104 : vector<256x8xf32> to vector<256x8xbf16>
    %c3_65 = arith.constant 3 : index
    %c0_66 = arith.constant 0 : index
    %c0_67 = arith.constant 0 : index
    %106 = vector.load %arg3[%c3_65, %c0_66, %c0_67] : memref<9x8x8xbf16, #tpu.memory_space<vmem>>, vector<1x8x8xbf16>
    %107 = vector.shape_cast %106 : vector<1x8x8xbf16> to vector<8x8xbf16>
    %cst_68 = arith.constant dense<0.000000e+00> : vector<256x8xf32>
    %108 = tpu.matmul %105, %107, %cst_68 {dimension_numbers = #tpu.dot_dimension_numbers<[1], [0], [0], [1], [0, 0, 1, 1], [], []>} : vector<256x8xbf16>, vector<8x8xbf16>, vector<256x8xf32> -> vector<256x8xf32>
    %109 = arith.addf %102, %108 : vector<256x8xf32>
    %110 = vector.extract_strided_slice %80 {offsets = [1, 1, 0], sizes = [16, 16, 8], strides = [1, 1, 1]} : vector<18x18x8xf32> to vector<16x16x8xf32>
    %111 = vector.shape_cast %110 : vector<16x16x8xf32> to vector<256x8xf32>
    %112 = arith.truncf %111 : vector<256x8xf32> to vector<256x8xbf16>
    %c4_69 = arith.constant 4 : index
    %c0_70 = arith.constant 0 : index
    %c0_71 = arith.constant 0 : index
    %113 = vector.load %arg3[%c4_69, %c0_70, %c0_71] : memref<9x8x8xbf16, #tpu.memory_space<vmem>>, vector<1x8x8xbf16>
    %114 = vector.shape_cast %113 : vector<1x8x8xbf16> to vector<8x8xbf16>
    %cst_72 = arith.constant dense<0.000000e+00> : vector<256x8xf32>
    %115 = tpu.matmul %112, %114, %cst_72 {dimension_numbers = #tpu.dot_dimension_numbers<[1], [0], [0], [1], [0, 0, 1, 1], [], []>} : vector<256x8xbf16>, vector<8x8xbf16>, vector<256x8xf32> -> vector<256x8xf32>
    %116 = arith.addf %109, %115 : vector<256x8xf32>
    %117 = vector.extract_strided_slice %80 {offsets = [1, 2, 0], sizes = [16, 16, 8], strides = [1, 1, 1]} : vector<18x18x8xf32> to vector<16x16x8xf32>
    %118 = vector.shape_cast %117 : vector<16x16x8xf32> to vector<256x8xf32>
    %119 = arith.truncf %118 : vector<256x8xf32> to vector<256x8xbf16>
    %c5_73 = arith.constant 5 : index
    %c0_74 = arith.constant 0 : index
    %c0_75 = arith.constant 0 : index
    %120 = vector.load %arg3[%c5_73, %c0_74, %c0_75] : memref<9x8x8xbf16, #tpu.memory_space<vmem>>, vector<1x8x8xbf16>
    %121 = vector.shape_cast %120 : vector<1x8x8xbf16> to vector<8x8xbf16>
    %cst_76 = arith.constant dense<0.000000e+00> : vector<256x8xf32>
    %122 = tpu.matmul %119, %121, %cst_76 {dimension_numbers = #tpu.dot_dimension_numbers<[1], [0], [0], [1], [0, 0, 1, 1], [], []>} : vector<256x8xbf16>, vector<8x8xbf16>, vector<256x8xf32> -> vector<256x8xf32>
    %123 = arith.addf %116, %122 : vector<256x8xf32>
    %124 = vector.extract_strided_slice %80 {offsets = [2, 0, 0], sizes = [16, 16, 8], strides = [1, 1, 1]} : vector<18x18x8xf32> to vector<16x16x8xf32>
    %125 = vector.shape_cast %124 : vector<16x16x8xf32> to vector<256x8xf32>
    %126 = arith.truncf %125 : vector<256x8xf32> to vector<256x8xbf16>
    %c6_77 = arith.constant 6 : index
    %c0_78 = arith.constant 0 : index
    %c0_79 = arith.constant 0 : index
    %127 = vector.load %arg3[%c6_77, %c0_78, %c0_79] : memref<9x8x8xbf16, #tpu.memory_space<vmem>>, vector<1x8x8xbf16>
    %128 = vector.shape_cast %127 : vector<1x8x8xbf16> to vector<8x8xbf16>
    %cst_80 = arith.constant dense<0.000000e+00> : vector<256x8xf32>
    %129 = tpu.matmul %126, %128, %cst_80 {dimension_numbers = #tpu.dot_dimension_numbers<[1], [0], [0], [1], [0, 0, 1, 1], [], []>} : vector<256x8xbf16>, vector<8x8xbf16>, vector<256x8xf32> -> vector<256x8xf32>
    %130 = arith.addf %123, %129 : vector<256x8xf32>
    %131 = vector.extract_strided_slice %80 {offsets = [2, 1, 0], sizes = [16, 16, 8], strides = [1, 1, 1]} : vector<18x18x8xf32> to vector<16x16x8xf32>
    %132 = vector.shape_cast %131 : vector<16x16x8xf32> to vector<256x8xf32>
    %133 = arith.truncf %132 : vector<256x8xf32> to vector<256x8xbf16>
    %c7_81 = arith.constant 7 : index
    %c0_82 = arith.constant 0 : index
    %c0_83 = arith.constant 0 : index
    %134 = vector.load %arg3[%c7_81, %c0_82, %c0_83] : memref<9x8x8xbf16, #tpu.memory_space<vmem>>, vector<1x8x8xbf16>
    %135 = vector.shape_cast %134 : vector<1x8x8xbf16> to vector<8x8xbf16>
    %cst_84 = arith.constant dense<0.000000e+00> : vector<256x8xf32>
    %136 = tpu.matmul %133, %135, %cst_84 {dimension_numbers = #tpu.dot_dimension_numbers<[1], [0], [0], [1], [0, 0, 1, 1], [], []>} : vector<256x8xbf16>, vector<8x8xbf16>, vector<256x8xf32> -> vector<256x8xf32>
    %137 = arith.addf %130, %136 : vector<256x8xf32>
    %138 = vector.extract_strided_slice %80 {offsets = [2, 2, 0], sizes = [16, 16, 8], strides = [1, 1, 1]} : vector<18x18x8xf32> to vector<16x16x8xf32>
    %139 = vector.shape_cast %138 : vector<16x16x8xf32> to vector<256x8xf32>
    %140 = arith.truncf %139 : vector<256x8xf32> to vector<256x8xbf16>
    %c8_85 = arith.constant 8 : index
    %c0_86 = arith.constant 0 : index
    %c0_87 = arith.constant 0 : index
    %141 = vector.load %arg3[%c8_85, %c0_86, %c0_87] : memref<9x8x8xbf16, #tpu.memory_space<vmem>>, vector<1x8x8xbf16>
    %142 = vector.shape_cast %141 : vector<1x8x8xbf16> to vector<8x8xbf16>
    %cst_88 = arith.constant dense<0.000000e+00> : vector<256x8xf32>
    %143 = tpu.matmul %140, %142, %cst_88 {dimension_numbers = #tpu.dot_dimension_numbers<[1], [0], [0], [1], [0, 0, 1, 1], [], []>} : vector<256x8xbf16>, vector<8x8xbf16>, vector<256x8xf32> -> vector<256x8xf32>
    %144 = arith.addf %137, %143 : vector<256x8xf32>
    %c0_89 = arith.constant 0 : index
    %c0_90 = arith.constant 0 : index
    %145 = vector.load %arg6[%c0_89, %c0_90] : memref<1x8xf32, #tpu.memory_space<vmem>>, vector<1x8xf32>
    %146 = vector.broadcast %145 : vector<1x8xf32> to vector<256x8xf32>
    %147 = arith.mulf %144, %146 : vector<256x8xf32>
    %c0_91 = arith.constant 0 : index
    %c0_92 = arith.constant 0 : index
    %148 = vector.load %arg7[%c0_91, %c0_92] : memref<1x8xf32, #tpu.memory_space<vmem>>, vector<1x8xf32>
    %149 = vector.broadcast %148 : vector<1x8xf32> to vector<256x8xf32>
    %150 = arith.addf %147, %149 : vector<256x8xf32>
    %151 = vector.shape_cast %1 : vector<16x16x8xf32> to vector<256x8xf32>
    %152 = arith.addf %150, %151 : vector<256x8xf32>
    %cst_93 = arith.constant 0.000000e+00 : f32
    %153 = vector.broadcast %cst_93 : f32 to vector<256x8xf32>
    %154 = arith.maximumf %152, %153 : vector<256x8xf32>
    %155 = vector.shape_cast %154 : vector<256x8xf32> to vector<16x16x8xf32>
    %c0_94 = arith.constant 0 : index
    %c0_95 = arith.constant 0 : index
    %c0_96 = arith.constant 0 : index
    %c0_97 = arith.constant 0 : index
    %156 = vector.load %arg8[%c0_94, %c0_95, %c0_96, %c0_97] : memref<1x16x16x8xf32, #tpu.memory_space<vmem>>, vector<1x16x16x8xf32>
    %157 = vector.shape_cast %156 : vector<1x16x16x8xf32> to vector<16x16x8xf32>
    %158 = vector.shape_cast %155 : vector<16x16x8xf32> to vector<1x16x16x8xf32>
    tpu.vector_store %arg8[%c0_94, %c0_95, %c0_96, %c0_97], %158 {strides = array<i32>} : memref<1x16x16x8xf32, #tpu.memory_space<vmem>>, vector<1x16x16x8xf32>,
    return
  }
  func.func @transform_0(%arg0: i32) -> (i32, i32, i32, i32) {
    %c0_i32 = arith.constant 0 : i32
    %c0_i32_0 = arith.constant 0 : i32
    %c0_i32_1 = arith.constant 0 : i32
    %c0_i32_2 = arith.constant 0 : i32
    return %arg0, %c0_i32, %c0_i32_0, %c0_i32_1 : i32, i32, i32, i32
  }
  func.func @transform_1(%arg0: i32) -> (i32, i32, i32) {
    %c0_i32 = arith.constant 0 : i32
    %c0_i32_0 = arith.constant 0 : i32
    %c0_i32_1 = arith.constant 0 : i32
    %c0_i32_2 = arith.constant 0 : i32
    return %c0_i32, %c0_i32_0, %c0_i32_1 : i32, i32, i32
  }
  func.func @transform_2(%arg0: i32) -> (i32, i32, i32) {
    %c0_i32 = arith.constant 0 : i32
    %c0_i32_0 = arith.constant 0 : i32
    %c0_i32_1 = arith.constant 0 : i32
    %c0_i32_2 = arith.constant 0 : i32
    return %c0_i32, %c0_i32_0, %c0_i32_1 : i32, i32, i32
  }
  func.func @transform_3(%arg0: i32) -> (i32, i32) {
    %c0_i32 = arith.constant 0 : i32
    %c0_i32_0 = arith.constant 0 : i32
    %c0_i32_1 = arith.constant 0 : i32
    return %c0_i32, %c0_i32_0 : i32, i32
  }
  func.func @transform_4(%arg0: i32) -> (i32, i32) {
    %c0_i32 = arith.constant 0 : i32
    %c0_i32_0 = arith.constant 0 : i32
    %c0_i32_1 = arith.constant 0 : i32
    return %c0_i32, %c0_i32_0 : i32, i32
  }
  func.func @transform_5(%arg0: i32) -> (i32, i32) {
    %c0_i32 = arith.constant 0 : i32
    %c0_i32_0 = arith.constant 0 : i32
    %c0_i32_1 = arith.constant 0 : i32
    return %c0_i32, %c0_i32_0 : i32, i32
  }
  func.func @transform_6(%arg0: i32) -> (i32, i32) {
    %c0_i32 = arith.constant 0 : i32
    %c0_i32_0 = arith.constant 0 : i32
    %c0_i32_1 = arith.constant 0 : i32
    return %c0_i32, %c0_i32_0 : i32, i32
  }
  func.func @transform_7(%arg0: i32) -> (i32, i32, i32, i32) {
    %c0_i32 = arith.constant 0 : i32
    %c0_i32_0 = arith.constant 0 : i32
    %c0_i32_1 = arith.constant 0 : i32
    %c0_i32_2 = arith.constant 0 : i32
    return %arg0, %c0_i32, %c0_i32_0, %c0_i32_1 : i32, i32, i32, i32
  }
}

</mosaic_0001>

<llo_original>
// kernel: tpu_custom_call.1
$region0: #{tpu_custom_call.1}
  #allocation0 [shape = 'u32[]', space=smem, size = 0x4, offset = 0x4, fixed_abs, tag = 'smem constant byte address 0x4 - core index']
  #allocation1 [shape = 'u32[144,128]{1,0:T(1,128)}', space=vmem, size = 0x12000, scoped, tag = 'internal scratch']
  #allocation2 [shape = 'f32[18,18,8]{2,1,0:T(8,128)}', space=vmem, size = 0x36000, scoped, tag = 'scratch operand']
  %s0 = inlined_call_operand.vmem [shape: f32[2,16,16,8], index: 0, kind: input, shape index: {}]
  %s1 = inlined_call_operand.vmem [shape: bf16[9,8,8], index: 1, kind: input, shape index: {}]
  %s2 = inlined_call_operand.vmem [shape: bf16[9,8,8], index: 2, kind: input, shape index: {}]
  %s3 = inlined_call_operand.vmem [shape: f32[1,8], index: 3, kind: input, shape index: {}]
  %s4 = inlined_call_operand.vmem [shape: f32[1,8], index: 4, kind: input, shape index: {}]
  %s5 = inlined_call_operand.vmem [shape: f32[1,8], index: 5, kind: input, shape index: {}]
  %s6 = inlined_call_operand.vmem [shape: f32[1,8], index: 6, kind: input, shape index: {}]
  %s7 = inlined_call_operand.vmem [shape: f32[2,16,16,8], index: 7, kind: output, shape index: {}]
  %s8 = sld [smem:[#allocation0]]
  $region61: #{tpu_custom_call.1} parent=0
    _
  %s10 = ssub.s32 1, %s8
  %s11 = scalar_select 0, %s10, %s8
  loop: start=0, step=1, limit=4
  $region2: #{tpu_custom_call.1} parent=0 // loop_pre_header
    _
  $region3: #{tpu_custom_call.1} parent=0 // loop_header
    %s13 = sphi 0, %s17
    %p14 = scmp.ge.s32.totalorder %s13, 4
    %s23 = sphi 0, %s25
    %s26 = sphi 0, %s23
    %s27 = sphi 0, %s26
    %s43 = sphi 0, %s27
    %s47 = sphi 0, %s47
    %s49 = sphi 0, %s47
    %s50 = sphi 0, %s49
    %s64 = sphi 0, %s50
    %s68 = sphi 0, %s68
    %s70 = sphi 0, %s68
    %s71 = sphi 0, %s70
    %s85 = sphi 0, %s71
    %s89 = sphi 0, %s89
    %s91 = sphi 0, %s89
    %s92 = sphi 0, %s91
    %s106 = sphi 0, %s92
    %s110 = sphi 0, %s110
    %s112 = sphi 0, %s110
    %s113 = sphi 0, %s112
    %s127 = sphi 0, %s113
    %s131 = sphi 0, %s131
    %s133 = sphi 0, %s131
    %s134 = sphi 0, %s133
    %s148 = sphi 0, %s134
    %s152 = sphi 0, %s152
    %s154 = sphi 0, %s152
    %s155 = sphi 0, %s154
    %s169 = sphi 0, %s155
    %s175 = sphi 0, %s177
    %s178 = sphi 0, %s175
    %s179 = sphi 0, %s178
    %s195 = sphi 0, %s179
  $region4: #{tpu_custom_call.1} parent=0 // loop_header_branch
    %16 = sbr.rel (%p14) target = $region8
  $region5: #{tpu_custom_call.1} parent=0 // loop_body
    %s18 = ssub.s32 %s13, 1
    %s19 = ssub.s32 %s13, 2
    %s20 = sadd.s32 %s13, 1
    %s21 = ssub.s32 %s13, %s20
    %p22 = scmp.eq.s32.totalorder %s21, 0
    %s24 = sadd.s32 %s23, 1
    %s25 = scalar_select %p22, %s23, %s24
    %p28 = pneg %p22
    %p29 = scmp.eq.s32.totalorder %s13, 1
    %p30 = por %p28, %p29
    %p31 = scmp.ne.s32.totalorder %s23, %s26
    %p32 = scmp.eq.s32.totalorder %s13, 0
    %p33 = por %p31, %p32
    %p34 = scmp.ne.s32.totalorder %s23, %s26
    %p35 = scmp.eq.s32.totalorder %s18, 1
    %p36 = por %p34, %p35
    %p37 = scmp.ne.s32.totalorder %s26, %s27
    %p38 = scmp.eq.s32.totalorder %s18, 0
    %p39 = por %p37, %p38
    %p40 = scmp.ne.s32.totalorder %s26, %s27
    %p41 = scmp.eq.s32.totalorder %s19, 1
    %p42 = por %p40, %p41
    %p44 = scmp.ne.s32.totalorder %s27, %s43
    %p45 = scmp.eq.s32.totalorder %s19, 0
    %p46 = por %p44, %p45
    %s48 = sadd.s32 %s47, 1
    %p51 = scmp.eq.s32.totalorder %s13, 1
    %p52 = scmp.ne.s32.totalorder %s47, %s49
    %p53 = scmp.eq.s32.totalorder %s13, 0
    %p54 = por %p52, %p53
    %p55 = scmp.ne.s32.totalorder %s47, %s49
    %p56 = scmp.eq.s32.totalorder %s18, 1
    %p57 = por %p55, %p56
    %p58 = scmp.ne.s32.totalorder %s49, %s50
    %p59 = scmp.eq.s32.totalorder %s18, 0
    %p60 = por %p58, %p59
    %p61 = scmp.ne.s32.totalorder %s49, %s50
    %p62 = scmp.eq.s32.totalorder %s19, 1
    %p63 = por %p61, %p62
    %p65 = scmp.ne.s32.totalorder %s50, %s64
    %p66 = scmp.eq.s32.totalorder %s19, 0
    %p67 = por %p65, %p66
    %s69 = sadd.s32 %s68, 1
    %p72 = scmp.eq.s32.totalorder %s13, 1
    %p73 = scmp.ne.s32.totalorder %s68, %s70
    %p74 = scmp.eq.s32.totalorder %s13, 0
    %p75 = por %p73, %p74
    %p76 = scmp.ne.s32.totalorder %s68, %s70
    %p77 = scmp.eq.s32.totalorder %s18, 1
    %p78 = por %p76, %p77
    %p79 = scmp.ne.s32.totalorder %s70, %s71
    %p80 = scmp.eq.s32.totalorder %s18, 0
    %p81 = por %p79, %p80
    %p82 = scmp.ne.s32.totalorder %s70, %s71
    %p83 = scmp.eq.s32.totalorder %s19, 1
    %p84 = por %p82, %p83
    %p86 = scmp.ne.s32.totalorder %s71, %s85
    %p87 = scmp.eq.s32.totalorder %s19, 0
    %p88 = por %p86, %p87
    %s90 = sadd.s32 %s89, 1
    %p93 = scmp.eq.s32.totalorder %s13, 1
    %p94 = scmp.ne.s32.totalorder %s89, %s91
    %p95 = scmp.eq.s32.totalorder %s13, 0
    %p96 = por %p94, %p95
    %p97 = scmp.ne.s32.totalorder %s89, %s91
    %p98 = scmp.eq.s32.totalorder %s18, 1
    %p99 = por %p97, %p98
    %p100 = scmp.ne.s32.totalorder %s91, %s92
    %p101 = scmp.eq.s32.totalorder %s18, 0
    %p102 = por %p100, %p101
    %p103 = scmp.ne.s32.totalorder %s91, %s92
    %p104 = scmp.eq.s32.totalorder %s19, 1
    %p105 = por %p103, %p104
    %p107 = scmp.ne.s32.totalorder %s92, %s106
    %p108 = scmp.eq.s32.totalorder %s19, 0
    %p109 = por %p107, %p108
    %s111 = sadd.s32 %s110, 1
    %p114 = scmp.eq.s32.totalorder %s13, 1
    %p115 = scmp.ne.s32.totalorder %s110, %s112
    %p116 = scmp.eq.s32.totalorder %s13, 0
    %p117 = por %p115, %p116
    %p118 = scmp.ne.s32.totalorder %s110, %s112
    %p119 = scmp.eq.s32.totalorder %s18, 1
    %p120 = por %p118, %p119
    %p121 = scmp.ne.s32.totalorder %s112, %s113
    %p122 = scmp.eq.s32.totalorder %s18, 0
    %p123 = por %p121, %p122
    %p124 = scmp.ne.s32.totalorder %s112, %s113
    %p125 = scmp.eq.s32.totalorder %s19, 1
    %p126 = por %p124, %p125
    %p128 = scmp.ne.s32.totalorder %s113, %s127
    %p129 = scmp.eq.s32.totalorder %s19, 0
    %p130 = por %p128, %p129
    %s132 = sadd.s32 %s131, 1
    %p135 = scmp.eq.s32.totalorder %s13, 1
    %p136 = scmp.ne.s32.totalorder %s131, %s133
    %p137 = scmp.eq.s32.totalorder %s13, 0
    %p138 = por %p136, %p137
    %p139 = scmp.ne.s32.totalorder %s131, %s133
    %p140 = scmp.eq.s32.totalorder %s18, 1
    %p141 = por %p139, %p140
    %p142 = scmp.ne.s32.totalorder %s133, %s134
    %p143 = scmp.eq.s32.totalorder %s18, 0
    %p144 = por %p142, %p143
    %p145 = scmp.ne.s32.totalorder %s133, %s134
    %p146 = scmp.eq.s32.totalorder %s19, 1
    %p147 = por %p145, %p146
    %p149 = scmp.ne.s32.totalorder %s134, %s148
    %p150 = scmp.eq.s32.totalorder %s19, 0
    %p151 = por %p149, %p150
    %s153 = sadd.s32 %s152, 1
    %p156 = scmp.eq.s32.totalorder %s13, 1
    %p157 = scmp.ne.s32.totalorder %s152, %s154
    %p158 = scmp.eq.s32.totalorder %s13, 0
    %p159 = por %p157, %p158
    %p160 = scmp.ne.s32.totalorder %s152, %s154
    %p161 = scmp.eq.s32.totalorder %s18, 1
    %p162 = por %p160, %p161
    %p163 = scmp.ne.s32.totalorder %s154, %s155
    %p164 = scmp.eq.s32.totalorder %s18, 0
    %p165 = por %p163, %p164
    %p166 = scmp.ne.s32.totalorder %s154, %s155
    %p167 = scmp.eq.s32.totalorder %s19, 1
    %p168 = por %p166, %p167
    %p170 = scmp.ne.s32.totalorder %s155, %s169
    %p171 = scmp.eq.s32.totalorder %s19, 0
    %p172 = por %p170, %p171
    %s173 = ssub.s32 %s13, %s20
    %p174 = scmp.eq.s32.totalorder %s173, 0
    %s176 = sadd.s32 %s175, 1
    %s177 = scalar_select %p174, %s175, %s176
    %p180 = pneg %p174
    %p181 = scmp.eq.s32.totalorder %s13, 1
    %p182 = por %p180, %p181
    %p183 = scmp.ne.s32.totalorder %s175, %s178
    %p184 = scmp.eq.s32.totalorder %s13, 0
    %p185 = por %p183, %p184
    %p186 = scmp.ne.s32.totalorder %s175, %s178
    %p187 = scmp.eq.s32.totalorder %s18, 1
    %p188 = por %p186, %p187
    %p189 = scmp.ne.s32.totalorder %s178, %s179
    %p190 = scmp.eq.s32.totalorder %s18, 0
    %p191 = por %p189, %p190
    %p192 = scmp.ne.s32.totalorder %s178, %s179
    %p193 = scmp.eq.s32.totalorder %s19, 1
    %p194 = por %p192, %p193
    %p196 = scmp.ne.s32.totalorder %s179, %s195
    %p197 = scmp.eq.s32.totalorder %s19, 0
    %p198 = por %p196, %p197
    %p199 = scmp.le.s32.totalorder 1, %s13
    %p200 = scmp.lt.s32.totalorder %s13, 3
    %p201 = pnand %p199, %p200
    %p202 = pneg %p201
    // Predicated region
    $region9: #{tpu_custom_call.1} parent=5 // pred_check
      _
    $region10: #{tpu_custom_call.1} parent=5 // pred_check_branch
      %204 = sbr.rel (%p201) target = $region12
    $region11: #{tpu_custom_call.1} parent=5 // pred_region
      %s205 = ssub.s32 %s13, 1
      // Predicated region
      $region13: #{tpu_custom_call.1} parent=11 // pred_check
        %p206 = pneg %p60
      $region14: #{tpu_custom_call.1} parent=11 // pred_check_branch
        %208 = sbr.rel (%p206) target = $region16
      $region15: #{tpu_custom_call.1} parent=11 // pred_region
        _
      $region16: #{tpu_custom_call.1} parent=11 // pred_fallthru
        _
      // Predicated region
      $region17: #{tpu_custom_call.1} parent=11 // pred_check
        %p209 = pneg %p81
      $region18: #{tpu_custom_call.1} parent=11 // pred_check_branch
        %211 = sbr.rel (%p209) target = $region20
      $region19: #{tpu_custom_call.1} parent=11 // pred_region
        _
      $region20: #{tpu_custom_call.1} parent=11 // pred_fallthru
        _
      // Predicated region
      $region21: #{tpu_custom_call.1} parent=11 // pred_check
        %p212 = pneg %p102
      $region22: #{tpu_custom_call.1} parent=11 // pred_check_branch
        %214 = sbr.rel (%p212) target = $region24
      $region23: #{tpu_custom_call.1} parent=11 // pred_region
        _
      $region24: #{tpu_custom_call.1} parent=11 // pred_fallthru
        _
      // Predicated region
      $region25: #{tpu_custom_call.1} parent=11 // pred_check
        %p215 = pneg %p123
      $region26: #{tpu_custom_call.1} parent=11 // pred_check_branch
        %217 = sbr.rel (%p215) target = $region28
      $region27: #{tpu_custom_call.1} parent=11 // pred_region
        _
      $region28: #{tpu_custom_call.1} parent=11 // pred_fallthru
        _
      // Predicated region
      $region29: #{tpu_custom_call.1} parent=11 // pred_check
        %p218 = pneg %p144
      $region30: #{tpu_custom_call.1} parent=11 // pred_check_branch
        %220 = sbr.rel (%p218) target = $region32
      $region31: #{tpu_custom_call.1} parent=11 // pred_region
        _
      $region32: #{tpu_custom_call.1} parent=11 // pred_fallthru
        _
      // Predicated region
      $region33: #{tpu_custom_call.1} parent=11 // pred_check
        %p221 = pneg %p165
      $region34: #{tpu_custom_call.1} parent=11 // pred_check_branch
        %223 = sbr.rel (%p221) target = $region36
      $region35: #{tpu_custom_call.1} parent=11 // pred_region
        _
      $region36: #{tpu_custom_call.1} parent=11 // pred_fallthru
        _
    $region12: #{tpu_custom_call.1} parent=5 // pred_fallthru
      _
    %p224 = scmp.lt.s32.totalorder %s13, 2
    // Predicated region
    $region37: #{tpu_custom_call.1} parent=5 // pred_check
      %p225 = pneg %p224
    $region38: #{tpu_custom_call.1} parent=5 // pred_check_branch
      %227 = sbr.rel (%p225) target = $region40
    $region39: #{tpu_custom_call.1} parent=5 // pred_region
      // Predicated region
      $region41: #{tpu_custom_call.1} parent=39 // pred_check
        %p228 = pneg %p33
      $region42: #{tpu_custom_call.1} parent=39 // pred_check_branch
        %230 = sbr.rel (%p228) target = $region44
      $region43: #{tpu_custom_call.1} parent=39 // pred_region
        %p231 = scmp.lt.s32.totalorder %s13, 1
        %s232 = scalar_select %p231, %s13, 1
        %s233 = smul.addr %s232, 32
        %s234 = smul.addr %s233, 8
        %s235 = scalar_lea.vmem %s0, %s234
      $region44: #{tpu_custom_call.1} parent=39 // pred_fallthru
        _
    $region40: #{tpu_custom_call.1} parent=5 // pred_fallthru
      _
    %p236 = scmp.le.s32.totalorder 1, %s13
    %p237 = scmp.lt.s32.totalorder %s13, 3
    %p238 = pnand %p236, %p237
    %p239 = pneg %p238
    // Predicated region
    $region45: #{tpu_custom_call.1} parent=5 // pred_check
      _
    $region46: #{tpu_custom_call.1} parent=5 // pred_check_branch
      %241 = sbr.rel (%p238) target = $region48
    $region47: #{tpu_custom_call.1} parent=5 // pred_region
      %s242 = ssub.s32 %s13, 1
      %p243 = scmp.lt.s32.totalorder %s18, 1
      %s244 = scalar_select %p243, %s18, 1
      %s245 = smul.addr %s244, 32
      %s246 = smul.addr %s245, 8
      %s247 = scalar_lea.vmem %s0, %s246
      %p248 = pneg %p39
      %p249 = pneg %p36
      %p250 = pneg %p60
      %p251 = pneg %p57
      %p252 = pneg %p81
      %p253 = pneg %p78
      %p254 = pneg %p102
      %p255 = pneg %p99
      %p256 = pneg %p123
      %p257 = pneg %p120
      %p258 = pneg %p144
      %p259 = pneg %p141
      %p260 = pneg %p165
      %p261 = pneg %p162
      %p262 = pneg %p191
      %p263 = pneg %p188
      %p264 = scmp.lt.s32.totalorder %s18, 1
      %s265 = scalar_select %p264, %s18, 1
      %s266 = smul.addr %s265, 32
      %s267 = smul.addr %s266, 8
      %s268 = scalar_lea.vmem %s7, %s267
      %p269 = scmp.lt.s32.totalorder %s18, 1
      %s270 = scalar_select %p269, %s18, 1
      %s271 = smul.addr %s270, 32
      %s272 = smul.addr %s271, 8
      %s273 = scalar_lea.vmem %s0, %s272
      %p274 = scmp.lt.s32.totalorder %s18, 1
      %s275 = scalar_select %p274, %s18, 1
      %s276 = smul.addr %s275, 32
      %s277 = smul.addr %s276, 8
      %s278 = scalar_lea.vmem %s7, %s277
      %v280 = vld [vmem:[%s273] sm:$0xff]
      %v281 = vld [vmem:[%s273 + $0x8] sm:$0xff]
      %v282 = vld [vmem:[%s273 + $0x10] sm:$0xff]
      %v283 = vld [vmem:[%s273 + $0x18] sm:$0xff]
      %v284 = vld [vmem:[%s273 + $0x20] sm:$0xff]
      %v285 = vld [vmem:[%s273 + $0x28] sm:$0xff]
      %v286 = vld [vmem:[%s273 + $0x30] sm:$0xff]
      %v287 = vld [vmem:[%s273 + $0x38] sm:$0xff]
      %v288 = vld [vmem:[%s273 + $0x40] sm:$0xff]
      %v289 = vld [vmem:[%s273 + $0x48] sm:$0xff]
      %v290 = vld [vmem:[%s273 + $0x50] sm:$0xff]
      %v291 = vld [vmem:[%s273 + $0x58] sm:$0xff]
      %v292 = vld [vmem:[%s273 + $0x60] sm:$0xff]
      %v293 = vld [vmem:[%s273 + $0x68] sm:$0xff]
      %v294 = vld [vmem:[%s273 + $0x70] sm:$0xff]
      %v295 = vld [vmem:[%s273 + $0x78] sm:$0xff]
      %v296 = vld [vmem:[%s273 + $0x80] sm:$0xff]
      %v297 = vld [vmem:[%s273 + $0x88] sm:$0xff]
      %v298 = vld [vmem:[%s273 + $0x90] sm:$0xff]
      %v299 = vld [vmem:[%s273 + $0x98] sm:$0xff]
      %v300 = vld [vmem:[%s273 + $0xa0] sm:$0xff]
      %v301 = vld [vmem:[%s273 + $0xa8] sm:$0xff]
      %v302 = vld [vmem:[%s273 + $0xb0] sm:$0xff]
      %v303 = vld [vmem:[%s273 + $0xb8] sm:$0xff]
      %v304 = vld [vmem:[%s273 + $0xc0] sm:$0xff]
      %v305 = vld [vmem:[%s273 + $0xc8] sm:$0xff]
      %v306 = vld [vmem:[%s273 + $0xd0] sm:$0xff]
      %v307 = vld [vmem:[%s273 + $0xd8] sm:$0xff]
      %v308 = vld [vmem:[%s273 + $0xe0] sm:$0xff]
      %v309 = vld [vmem:[%s273 + $0xe8] sm:$0xff]
      %v310 = vld [vmem:[%s273 + $0xf0] sm:$0xff]
      %v311 = vld [vmem:[%s273 + $0xf8] sm:$0xff]
      %vm312 = vcmask 64512
      %313 = vst.msk [vmem:[#allocation2] sm:$0xff] %vm312, 0.0
      %314 = vst.msk [vmem:[#allocation2 + $0x8] sm:$0xff] %vm312, 0.0
      %vm315 = vcmask 58368
      %316 = vst.msk [vmem:[#allocation2 + $0x10] sm:$0x3] %vm315, 0.0
      %317 = vst.msk [vmem:[#allocation2 + $0x18] sm:$0xff] %vm312, 0.0
      %318 = vst.msk [vmem:[#allocation2 + $0x20] sm:$0xff] %vm312, 0.0
      %319 = vst.msk [vmem:[#allocation2 + $0x28] sm:$0x3] %vm315, 0.0
      %320 = vst.msk [vmem:[#allocation2 + $0x30] sm:$0xff] %vm312, 0.0
      %321 = vst.msk [vmem:[#allocation2 + $0x38] sm:$0xff] %vm312, 0.0
      %322 = vst.msk [vmem:[#allocation2 + $0x40] sm:$0x3] %vm315, 0.0
      %323 = vst.msk [vmem:[#allocation2 + $0x48] sm:$0xff] %vm312, 0.0
      %324 = vst.msk [vmem:[#allocation2 + $0x50] sm:$0xff] %vm312, 0.0
      %325 = vst.msk [vmem:[#allocation2 + $0x58] sm:$0x3] %vm315, 0.0
      %326 = vst.msk [vmem:[#allocation2 + $0x60] sm:$0xff] %vm312, 0.0
      %327 = vst.msk [vmem:[#allocation2 + $0x68] sm:$0xff] %vm312, 0.0
      %328 = vst.msk [vmem:[#allocation2 + $0x70] sm:$0x3] %vm315, 0.0
      %329 = vst.msk [vmem:[#allocation2 + $0x78] sm:$0xff] %vm312, 0.0
      %330 = vst.msk [vmem:[#allocation2 + $0x80] sm:$0xff] %vm312, 0.0
      %331 = vst.msk [vmem:[#allocation2 + $0x88] sm:$0x3] %vm315, 0.0
      %332 = vst.msk [vmem:[#allocation2 + $0x90] sm:$0xff] %vm312, 0.0
      %333 = vst.msk [vmem:[#allocation2 + $0x98] sm:$0xff] %vm312, 0.0
      %334 = vst.msk [vmem:[#allocation2 + $0xa0] sm:$0x3] %vm315, 0.0
      %335 = vst.msk [vmem:[#allocation2 + $0xa8] sm:$0xff] %vm312, 0.0
      %336 = vst.msk [vmem:[#allocation2 + $0xb0] sm:$0xff] %vm312, 0.0
      %337 = vst.msk [vmem:[#allocation2 + $0xb8] sm:$0x3] %vm315, 0.0
      %338 = vst.msk [vmem:[#allocation2 + $0xc0] sm:$0xff] %vm312, 0.0
      %339 = vst.msk [vmem:[#allocation2 + $0xc8] sm:$0xff] %vm312, 0.0
      %340 = vst.msk [vmem:[#allocation2 + $0xd0] sm:$0x3] %vm315, 0.0
      %341 = vst.msk [vmem:[#allocation2 + $0xd8] sm:$0xff] %vm312, 0.0
      %342 = vst.msk [vmem:[#allocation2 + $0xe0] sm:$0xff] %vm312, 0.0
      %343 = vst.msk [vmem:[#allocation2 + $0xe8] sm:$0x3] %vm315, 0.0
      %344 = vst.msk [vmem:[#allocation2 + $0xf0] sm:$0xff] %vm312, 0.0
      %345 = vst.msk [vmem:[#allocation2 + $0xf8] sm:$0xff] %vm312, 0.0
      %346 = vst.msk [vmem:[#allocation2 + $0x100] sm:$0x3] %vm315, 0.0
      %347 = vst.msk [vmem:[#allocation2 + $0x108] sm:$0xff] %vm312, 0.0
      %348 = vst.msk [vmem:[#allocation2 + $0x110] sm:$0xff] %vm312, 0.0
      %349 = vst.msk [vmem:[#allocation2 + $0x118] sm:$0x3] %vm315, 0.0
      %350 = vst.msk [vmem:[#allocation2 + $0x120] sm:$0xff] %vm312, 0.0
      %351 = vst.msk [vmem:[#allocation2 + $0x128] sm:$0xff] %vm312, 0.0
      %352 = vst.msk [vmem:[#allocation2 + $0x130] sm:$0x3] %vm315, 0.0
      %353 = vst.msk [vmem:[#allocation2 + $0x138] sm:$0xff] %vm312, 0.0
      %354 = vst.msk [vmem:[#allocation2 + $0x140] sm:$0xff] %vm312, 0.0
      %355 = vst.msk [vmem:[#allocation2 + $0x148] sm:$0x3] %vm315, 0.0
      %356 = vst.msk [vmem:[#allocation2 + $0x150] sm:$0xff] %vm312, 0.0
      %357 = vst.msk [vmem:[#allocation2 + $0x158] sm:$0xff] %vm312, 0.0
      %358 = vst.msk [vmem:[#allocation2 + $0x160] sm:$0x3] %vm315, 0.0
      %359 = vst.msk [vmem:[#allocation2 + $0x168] sm:$0xff] %vm312, 0.0
      %360 = vst.msk [vmem:[#allocation2 + $0x170] sm:$0xff] %vm312, 0.0
      %361 = vst.msk [vmem:[#allocation2 + $0x178] sm:$0x3] %vm315, 0.0
      %362 = vst.msk [vmem:[#allocation2 + $0x180] sm:$0xff] %vm312, 0.0
      %363 = vst.msk [vmem:[#allocation2 + $0x188] sm:$0xff] %vm312, 0.0
      %364 = vst.msk [vmem:[#allocation2 + $0x190] sm:$0x3] %vm315, 0.0
      %365 = vst.msk [vmem:[#allocation2 + $0x198] sm:$0xff] %vm312, 0.0
      %366 = vst.msk [vmem:[#allocation2 + $0x1a0] sm:$0xff] %vm312, 0.0
      %367 = vst.msk [vmem:[#allocation2 + $0x1a8] sm:$0x3] %vm315, 0.0
      %s368 = scalar_lea.vmem [#allocation2], 24
      %369 = vst.msk [vmem:[%s368 + $0x1] sm:$0xff] %vm312, %v280
      %370 = vst.msk [vmem:[%s368 + $0x9] sm:$0xff] %vm312, %v281
      %371 = vst.msk [vmem:[%s368 + $0x19] sm:$0xff] %vm312, %v282
      %372 = vst.msk [vmem:[%s368 + $0x21] sm:$0xff] %vm312, %v283
      %373 = vst.msk [vmem:[%s368 + $0x31] sm:$0xff] %vm312, %v284
      %374 = vst.msk [vmem:[%s368 + $0x39] sm:$0xff] %vm312, %v285
      %375 = vst.msk [vmem:[%s368 + $0x49] sm:$0xff] %vm312, %v286
      %376 = vst.msk [vmem:[%s368 + $0x51] sm:$0xff] %vm312, %v287
      %377 = vst.msk [vmem:[%s368 + $0x61] sm:$0xff] %vm312, %v288
      %378 = vst.msk [vmem:[%s368 + $0x69] sm:$0xff] %vm312, %v289
      %379 = vst.msk [vmem:[%s368 + $0x79] sm:$0xff] %vm312, %v290
      %380 = vst.msk [vmem:[%s368 + $0x81] sm:$0xff] %vm312, %v291
      %381 = vst.msk [vmem:[%s368 + $0x91] sm:$0xff] %vm312, %v292
      %382 = vst.msk [vmem:[%s368 + $0x99] sm:$0xff] %vm312, %v293
      %383 = vst.msk [vmem:[%s368 + $0xa9] sm:$0xff] %vm312, %v294
      %384 = vst.msk [vmem:[%s368 + $0xb1] sm:$0xff] %vm312, %v295
      %385 = vst.msk [vmem:[%s368 + $0xc1] sm:$0xff] %vm312, %v296
      %386 = vst.msk [vmem:[%s368 + $0xc9] sm:$0xff] %vm312, %v297
      %387 = vst.msk [vmem:[%s368 + $0xd9] sm:$0xff] %vm312, %v298
      %388 = vst.msk [vmem:[%s368 + $0xe1] sm:$0xff] %vm312, %v299
      %389 = vst.msk [vmem:[%s368 + $0xf1] sm:$0xff] %vm312, %v300
      %390 = vst.msk [vmem:[%s368 + $0xf9] sm:$0xff] %vm312, %v301
      %391 = vst.msk [vmem:[%s368 + $0x109] sm:$0xff] %vm312, %v302
      %392 = vst.msk [vmem:[%s368 + $0x111] sm:$0xff] %vm312, %v303
      %393 = vst.msk [vmem:[%s368 + $0x121] sm:$0xff] %vm312, %v304
      %394 = vst.msk [vmem:[%s368 + $0x129] sm:$0xff] %vm312, %v305
      %395 = vst.msk [vmem:[%s368 + $0x139] sm:$0xff] %vm312, %v306
      %396 = vst.msk [vmem:[%s368 + $0x141] sm:$0xff] %vm312, %v307
      %397 = vst.msk [vmem:[%s368 + $0x151] sm:$0xff] %vm312, %v308
      %398 = vst.msk [vmem:[%s368 + $0x159] sm:$0xff] %vm312, %v309
      %399 = vst.msk [vmem:[%s368 + $0x169] sm:$0xff] %vm312, %v310
      %400 = vst.msk [vmem:[%s368 + $0x171] sm:$0xff] %vm312, %v311
      %v401 = vld [vmem:[#allocation2] sm:$0xff]
      %v402 = vld [vmem:[#allocation2 + $0x8] sm:$0xff]
      %v403 = vld [vmem:[#allocation2 + $0x10] sm:$0x3]
      %v404 = vld [vmem:[#allocation2 + $0x18] sm:$0xff]
      %v405 = vld [vmem:[#allocation2 + $0x20] sm:$0xff]
      %v406 = vld [vmem:[#allocation2 + $0x28] sm:$0x3]
      %v407 = vld [vmem:[#allocation2 + $0x30] sm:$0xff]
      %v408 = vld [vmem:[#allocation2 + $0x38] sm:$0xff]
      %v409 = vld [vmem:[#allocation2 + $0x40] sm:$0x3]
      %v410 = vld [vmem:[#allocation2 + $0x48] sm:$0xff]
      %v411 = vld [vmem:[#allocation2 + $0x50] sm:$0xff]
      %v412 = vld [vmem:[#allocation2 + $0x58] sm:$0x3]
      %v413 = vld [vmem:[#allocation2 + $0x60] sm:$0xff]
      %v414 = vld [vmem:[#allocation2 + $0x68] sm:$0xff]
      %v415 = vld [vmem:[#allocation2 + $0x70] sm:$0x3]
      %v416 = vld [vmem:[#allocation2 + $0x78] sm:$0xff]
      %v417 = vld [vmem:[#allocation2 + $0x80] sm:$0xff]
      %v418 = vld [vmem:[#allocation2 + $0x88] sm:$0x3]
      %v419 = vld [vmem:[#allocation2 + $0x90] sm:$0xff]
      %v420 = vld [vmem:[#allocation2 + $0x98] sm:$0xff]
      %v421 = vld [vmem:[#allocation2 + $0xa0] sm:$0x3]
      %v422 = vld [vmem:[#allocation2 + $0xa8] sm:$0xff]
      %v423 = vld [vmem:[#allocation2 + $0xb0] sm:$0xff]
      %v424 = vld [vmem:[#allocation2 + $0xb8] sm:$0x3]
      %v425 = vld [vmem:[#allocation2 + $0xc0] sm:$0xff]
      %v426 = vld [vmem:[#allocation2 + $0xc8] sm:$0xff]
      %v427 = vld [vmem:[#allocation2 + $0xd0] sm:$0x3]
      %v428 = vld [vmem:[#allocation2 + $0xd8] sm:$0xff]
      %v429 = vld [vmem:[#allocation2 + $0xe0] sm:$0xff]
      %v430 = vld [vmem:[#allocation2 + $0xe8] sm:$0x3]
      %v431 = vld [vmem:[#allocation2 + $0xf0] sm:$0xff]
      %v432 = vld [vmem:[#allocation2 + $0xf8] sm:$0xff]
      %v433 = vld [vmem:[#allocation2 + $0x100] sm:$0x3]
      %v434 = vld [vmem:[#allocation2 + $0x108] sm:$0xff]
      %v435 = vld [vmem:[#allocation2 + $0x110] sm:$0xff]
      %v436 = vld [vmem:[#allocation2 + $0x118] sm:$0x3]
      %v437 = vld [vmem:[#allocation2 + $0x120] sm:$0xff]
      %v438 = vld [vmem:[#allocation2 + $0x128] sm:$0xff]
      %v439 = vld [vmem:[#allocation2 + $0x130] sm:$0x3]
      %v440 = vld [vmem:[#allocation2 + $0x138] sm:$0xff]
      %v441 = vld [vmem:[#allocation2 + $0x140] sm:$0xff]
      %v442 = vld [vmem:[#allocation2 + $0x148] sm:$0x3]
      %v443 = vld [vmem:[#allocation2 + $0x150] sm:$0xff]
      %v444 = vld [vmem:[#allocation2 + $0x158] sm:$0xff]
      %v445 = vld [vmem:[#allocation2 + $0x160] sm:$0x3]
      %v446 = vld [vmem:[#allocation2 + $0x168] sm:$0xff]
      %v447 = vld [vmem:[#allocation2 + $0x170] sm:$0xff]
      %v448 = vld [vmem:[#allocation2 + $0x178] sm:$0x3]
      %v449 = vld [vmem:[#allocation2 + $0x180] sm:$0xff]
      %v450 = vld [vmem:[#allocation2 + $0x188] sm:$0xff]
      %v451 = vld [vmem:[#allocation2 + $0x190] sm:$0x3]
      %v452 = vld [vmem:[#allocation2 + $0x198] sm:$0xff]
      %v453 = vld [vmem:[#allocation2 + $0x1a0] sm:$0xff]
      %v454 = vld [vmem:[#allocation2 + $0x1a8] sm:$0x3]
      %v455 = vpack.c.bf16 %v402, %v401
      %v456 = vpack.c.bf16 %v405, %v404
      %v457 = vpack.c.bf16 %v408, %v407
      %v458 = vpack.c.bf16 %v411, %v410
      %v459 = vpack.c.bf16 %v414, %v413
      %v460 = vpack.c.bf16 %v417, %v416
      %v461 = vpack.c.bf16 %v420, %v419
      %v462 = vpack.c.bf16 %v423, %v422
      %v463 = vpack.c.bf16 %v426, %v425
      %v464 = vpack.c.bf16 %v429, %v428
      %v465 = vpack.c.bf16 %v432, %v431
      %v466 = vpack.c.bf16 %v435, %v434
      %v467 = vpack.c.bf16 %v438, %v437
      %v468 = vpack.c.bf16 %v441, %v440
      %v469 = vpack.c.bf16 %v444, %v443
      %v470 = vpack.c.bf16 %v447, %v446
      %v471 = vld [vmem:[%s1] sm:$0xf]
      %vm520 = vcmask 1046528
      %v521 = vrot.slane %v401, 1
      %v522 = vrot.slane %v402, 1
      %v523 = vsel %vm520, %v521, %v522
      %v524 = vrot.slane %v403, 1
      %v525 = vsel %vm520, %v522, %v524
      %v526 = vrot.slane %v404, 1
      %v527 = vrot.slane %v405, 1
      %v528 = vsel %vm520, %v526, %v527
      %v529 = vrot.slane %v406, 1
      %v530 = vsel %vm520, %v527, %v529
      %v531 = vrot.slane %v407, 1
      %v532 = vrot.slane %v408, 1
      %v533 = vsel %vm520, %v531, %v532
      %v534 = vrot.slane %v409, 1
      %v535 = vsel %vm520, %v532, %v534
      %v536 = vrot.slane %v410, 1
      %v537 = vrot.slane %v411, 1
      %v538 = vsel %vm520, %v536, %v537
      %v539 = vrot.slane %v412, 1
      %v540 = vsel %vm520, %v537, %v539
      %v541 = vrot.slane %v413, 1
      %v542 = vrot.slane %v414, 1
      %v543 = vsel %vm520, %v541, %v542
      %v544 = vrot.slane %v415, 1
      %v545 = vsel %vm520, %v542, %v544
      %v546 = vrot.slane %v416, 1
      %v547 = vrot.slane %v417, 1
      %v548 = vsel %vm520, %v546, %v547
      %v549 = vrot.slane %v418, 1
      %v550 = vsel %vm520, %v547, %v549
      %v551 = vrot.slane %v419, 1
      %v552 = vrot.slane %v420, 1
      %v553 = vsel %vm520, %v551, %v552
      %v554 = vrot.slane %v421, 1
      %v555 = vsel %vm520, %v552, %v554
      %v556 = vrot.slane %v422, 1
      %v557 = vrot.slane %v423, 1
      %v558 = vsel %vm520, %v556, %v557
      %v559 = vrot.slane %v424, 1
      %v560 = vsel %vm520, %v557, %v559
      %v561 = vrot.slane %v425, 1
      %v562 = vrot.slane %v426, 1
      %v563 = vsel %vm520, %v561, %v562
      %v564 = vrot.slane %v427, 1
      %v565 = vsel %vm520, %v562, %v564
      %v566 = vrot.slane %v428, 1
      %v567 = vrot.slane %v429, 1
      %v568 = vsel %vm520, %v566, %v567
      %v569 = vrot.slane %v430, 1
      %v570 = vsel %vm520, %v567, %v569
      %v571 = vrot.slane %v431, 1
      %v572 = vrot.slane %v432, 1
      %v573 = vsel %vm520, %v571, %v572
      %v574 = vrot.slane %v433, 1
      %v575 = vsel %vm520, %v572, %v574
      %v576 = vrot.slane %v434, 1
      %v577 = vrot.slane %v435, 1
      %v578 = vsel %vm520, %v576, %v577
      %v579 = vrot.slane %v436, 1
      %v580 = vsel %vm520, %v577, %v579
      %v581 = vrot.slane %v437, 1
      %v582 = vrot.slane %v438, 1
      %v583 = vsel %vm520, %v581, %v582
      %v584 = vrot.slane %v439, 1
      %v585 = vsel %vm520, %v582, %v584
      %v586 = vrot.slane %v440, 1
      %v587 = vrot.slane %v441, 1
      %v588 = vsel %vm520, %v586, %v587
      %v589 = vrot.slane %v442, 1
      %v590 = vsel %vm520, %v587, %v589
      %v591 = vrot.slane %v443, 1
      %v592 = vrot.slane %v444, 1
      %v593 = vsel %vm520, %v591, %v592
      %v594 = vrot.slane %v445, 1
      %v595 = vsel %vm520, %v592, %v594
      %v596 = vrot.slane %v446, 1
      %v597 = vrot.slane %v447, 1
      %v598 = vsel %vm520, %v596, %v597
      %v599 = vrot.slane %v448, 1
      %v600 = vsel %vm520, %v597, %v599
      %v633 = vpack.c.bf16 %v525, %v523
      %v634 = vpack.c.bf16 %v530, %v528
      %v635 = vpack.c.bf16 %v535, %v533
      %v636 = vpack.c.bf16 %v540, %v538
      %v637 = vpack.c.bf16 %v545, %v543
      %v638 = vpack.c.bf16 %v550, %v548
      %v639 = vpack.c.bf16 %v555, %v553
      %v640 = vpack.c.bf16 %v560, %v558
      %v641 = vpack.c.bf16 %v565, %v563
      %v642 = vpack.c.bf16 %v570, %v568
      %v643 = vpack.c.bf16 %v575, %v573
      %v644 = vpack.c.bf16 %v580, %v578
      %v645 = vpack.c.bf16 %v585, %v583
      %v646 = vpack.c.bf16 %v590, %v588
      %v647 = vpack.c.bf16 %v595, %v593
      %v648 = vpack.c.bf16 %v600, %v598
      %s649 = scalar_lea.vmem %s1, 4
      %v650 = vld [vmem:[%s649] sm:$0xf]
      %v652 = vsel %vm312, %v633, 0
      %v655 = vsel %vm312, %v634, 0
      %v658 = vsel %vm312, %v635, 0
      %v661 = vsel %vm312, %v636, 0
      %v664 = vsel %vm312, %v637, 0
      %v667 = vsel %vm312, %v638, 0
      %v670 = vsel %vm312, %v639, 0
      %v673 = vsel %vm312, %v640, 0
      %v676 = vsel %vm312, %v641, 0
      %v679 = vsel %vm312, %v642, 0
      %v682 = vsel %vm312, %v643, 0
      %v685 = vsel %vm312, %v644, 0
      %v688 = vsel %vm312, %v645, 0
      %v691 = vsel %vm312, %v646, 0
      %v694 = vsel %vm312, %v647, 0
      %v697 = vsel %vm312, %v648, 0
      %vm699 = vcmask 1043456
      %v701 = vsel %vm699, %v650, 0
      %703 = vmatprep.subr.bf16.mxu0 0
      %704 = vmatpush1.bf16.msra.mxu0 0
      %705 = vmatprep.subr.bf16.mxu0 0
      %706 = vmatpush1.bf16.msra.mxu0 0
      %707 = vmatprep.subr.bf16.mxu0 0
      %708 = vmatpush1.bf16.msra.mxu0 0
      %709 = vmatprep.subr.bf16.mxu0 0
      %710 = vmatpush1.bf16.msra.mxu0 0
      %711 = vmatprep.subr.bf16.mxu0 0
      %712 = vmatpush1.bf16.msra.mxu0 0
      %713 = vmatprep.subr.bf16.mxu0 0
      %714 = vmatpush1.bf16.msra.mxu0 0
      %715 = vmatprep.subr.bf16.mxu0 0
      %716 = vmatpush1.bf16.msra.mxu0 0
      %717 = vmatprep.subr.bf16.mxu0 0
      %718 = vmatpush1.bf16.msra.mxu0 %v701
      %719 = vmatprep.subr.bf16.mxu0 0
      %720 = vmatpush2.bf16.msra.mxu0 0
      %721 = vmatprep.subr.bf16.mxu0 0
      %722 = vmatpush2.bf16.msra.mxu0 0
      %723 = vmatprep.subr.bf16.mxu0 0
      %724 = vmatpush2.bf16.msra.mxu0 0
      %725 = vmatprep.subr.bf16.mxu0 0
      %726 = vmatpush2.bf16.msra.mxu0 0
      %727 = vmatprep.subr.bf16.mxu0 0
      %728 = vmatpush2.bf16.msra.mxu0 0
      %729 = vmatprep.subr.bf16.mxu0 0
      %730 = vmatpush2.bf16.msra.mxu0 0
      %731 = vmatprep.subr.bf16.mxu0 0
      %732 = vmatpush2.bf16.msra.mxu0 0
      %733 = vmatprep.subr.bf16.mxu0 0
      %734 = vmatpush2.bf16.msra.mxu0 0
      %735 = vmatprep.mubr.bf16.mxu0 0
      %736 = vmatmul.mubr.bf16.gmra.mxu0 %v652
      %v737 = vpop.f32.mrf.mxu0
      %v738 = vadd.f32 0.0, %v737
      %v739 = vpop.f32.mrf.mxu0
      %v740 = vpop.f32.mrf.mxu0
      %v741 = vadd.f32 0.0, %v740
      %v742 = vpop.f32.mrf.mxu0
      %743 = vmatprep.mubr.bf16.mxu0 0
      %744 = vmatmul.mubr.bf16.gmra.mxu0 %v655
      %v745 = vpop.f32.mrf.mxu0
      %v746 = vadd.f32 0.0, %v745
      %v747 = vpop.f32.mrf.mxu0
      %v748 = vpop.f32.mrf.mxu0
      %v749 = vadd.f32 0.0, %v748
      %v750 = vpop.f32.mrf.mxu0
      %751 = vmatprep.mubr.bf16.mxu0 0
      %752 = vmatmul.mubr.bf16.gmra.mxu0 %v658
      %v753 = vpop.f32.mrf.mxu0
      %v754 = vadd.f32 0.0, %v753
      %v755 = vpop.f32.mrf.mxu0
      %v756 = vpop.f32.mrf.mxu0
      %v757 = vadd.f32 0.0, %v756
      %v758 = vpop.f32.mrf.mxu0
      %759 = vmatprep.mubr.bf16.mxu0 0
      %760 = vmatmul.mubr.bf16.gmra.mxu0 %v661
      %v761 = vpop.f32.mrf.mxu0
      %v762 = vadd.f32 0.0, %v761
      %v763 = vpop.f32.mrf.mxu0
      %v764 = vpop.f32.mrf.mxu0
      %v765 = vadd.f32 0.0, %v764
      %v766 = vpop.f32.mrf.mxu0
      %767 = vmatprep.mubr.bf16.mxu0 0
      %768 = vmatmul.mubr.bf16.gmra.mxu0 %v664
      %v769 = vpop.f32.mrf.mxu0
      %v770 = vadd.f32 0.0, %v769
      %v771 = vpop.f32.mrf.mxu0
      %v772 = vpop.f32.mrf.mxu0
      %v773 = vadd.f32 0.0, %v772
      %v774 = vpop.f32.mrf.mxu0
      %775 = vmatprep.mubr.bf16.mxu0 0
      %776 = vmatmul.mubr.bf16.gmra.mxu0 %v667
      %v777 = vpop.f32.mrf.mxu0
      %v778 = vadd.f32 0.0, %v777
      %v779 = vpop.f32.mrf.mxu0
      %v780 = vpop.f32.mrf.mxu0
      %v781 = vadd.f32 0.0, %v780
      %v782 = vpop.f32.mrf.mxu0
      %783 = vmatprep.mubr.bf16.mxu0 0
      %784 = vmatmul.mubr.bf16.gmra.mxu0 %v670
      %v785 = vpop.f32.mrf.mxu0
      %v786 = vadd.f32 0.0, %v785
      %v787 = vpop.f32.mrf.mxu0
      %v788 = vpop.f32.mrf.mxu0
      %v789 = vadd.f32 0.0, %v788
      %v790 = vpop.f32.mrf.mxu0
      %791 = vmatprep.mubr.bf16.mxu0 0
      %792 = vmatmul.mubr.bf16.gmra.mxu0 %v673
      %v793 = vpop.f32.mrf.mxu0
      %v794 = vadd.f32 0.0, %v793
      %v795 = vpop.f32.mrf.mxu0
      %v796 = vpop.f32.mrf.mxu0
      %v797 = vadd.f32 0.0, %v796
      %v798 = vpop.f32.mrf.mxu0
      %799 = vmatprep.mubr.bf16.mxu0 0
      %800 = vmatmul.mubr.bf16.gmra.mxu0 %v676
      %v801 = vpop.f32.mrf.mxu0
      %v802 = vadd.f32 0.0, %v801
      %v803 = vpop.f32.mrf.mxu0
      %v804 = vpop.f32.mrf.mxu0
      %v805 = vadd.f32 0.0, %v804
      %v806 = vpop.f32.mrf.mxu0
      %807 = vmatprep.mubr.bf16.mxu0 0
      %808 = vmatmul.mubr.bf16.gmra.mxu0 %v679
      %v809 = vpop.f32.mrf.mxu0
      %v810 = vadd.f32 0.0, %v809
      %v811 = vpop.f32.mrf.mxu0
      %v812 = vpop.f32.mrf.mxu0
      %v813 = vadd.f32 0.0, %v812
      %v814 = vpop.f32.mrf.mxu0
      %815 = vmatprep.mubr.bf16.mxu0 0
      %816 = vmatmul.mubr.bf16.gmra.mxu0 %v682
      %v817 = vpop.f32.mrf.mxu0
      %v818 = vadd.f32 0.0, %v817
      %v819 = vpop.f32.mrf.mxu0
      %v820 = vpop.f32.mrf.mxu0
      %v821 = vadd.f32 0.0, %v820
      %v822 = vpop.f32.mrf.mxu0
      %823 = vmatprep.mubr.bf16.mxu0 0
      %824 = vmatmul.mubr.bf16.gmra.mxu0 %v685
      %v825 = vpop.f32.mrf.mxu0
      %v826 = vadd.f32 0.0, %v825
      %v827 = vpop.f32.mrf.mxu0
      %v828 = vpop.f32.mrf.mxu0
      %v829 = vadd.f32 0.0, %v828
      %v830 = vpop.f32.mrf.mxu0
      %831 = vmatprep.mubr.bf16.mxu0 0
      %832 = vmatmul.mubr.bf16.gmra.mxu0 %v688
      %v833 = vpop.f32.mrf.mxu0
      %v834 = vadd.f32 0.0, %v833
      %v835 = vpop.f32.mrf.mxu0
      %v836 = vpop.f32.mrf.mxu0
      %v837 = vadd.f32 0.0, %v836
      %v838 = vpop.f32.mrf.mxu0
      %839 = vmatprep.mubr.bf16.mxu0 0
      %840 = vmatmul.mubr.bf16.gmra.mxu0 %v691
      %v841 = vpop.f32.mrf.mxu0
      %v842 = vadd.f32 0.0, %v841
      %v843 = vpop.f32.mrf.mxu0
      %v844 = vpop.f32.mrf.mxu0
      %v845 = vadd.f32 0.0, %v844
      %v846 = vpop.f32.mrf.mxu0
      %847 = vmatprep.mubr.bf16.mxu0 0
      %848 = vmatmul.mubr.bf16.gmra.mxu0 %v694
      %v849 = vpop.f32.mrf.mxu0
      %v850 = vadd.f32 0.0, %v849
      %v851 = vpop.f32.mrf.mxu0
      %v852 = vpop.f32.mrf.mxu0
      %v853 = vadd.f32 0.0, %v852
      %v854 = vpop.f32.mrf.mxu0
      %855 = vmatprep.mubr.bf16.mxu0 0
      %856 = vmatmul.mubr.bf16.gmra.mxu0 %v697
      %v857 = vpop.f32.mrf.mxu0
      %v858 = vadd.f32 0.0, %v857
      %v859 = vpop.f32.mrf.mxu0
      %v860 = vpop.f32.mrf.mxu0
      %v861 = vadd.f32 0.0, %v860
      %v862 = vpop.f32.mrf.mxu0
      %863 = vdwg.mxu0
      %v865 = vsel %vm312, %v455, 0
      %v868 = vsel %vm312, %v456, 0
      %v871 = vsel %vm312, %v457, 0
      %v874 = vsel %vm312, %v458, 0
      %v877 = vsel %vm312, %v459, 0
      %v880 = vsel %vm312, %v460, 0
      %v883 = vsel %vm312, %v461, 0
      %v886 = vsel %vm312, %v462, 0
      %v889 = vsel %vm312, %v463, 0
      %v892 = vsel %vm312, %v464, 0
      %v895 = vsel %vm312, %v465, 0
      %v898 = vsel %vm312, %v466, 0
      %v901 = vsel %vm312, %v467, 0
      %v904 = vsel %vm312, %v468, 0
      %v907 = vsel %vm312, %v469, 0
      %v910 = vsel %vm312, %v470, 0
      %v913 = vsel %vm699, %v471, 0
      %915 = vmatprep.subr.bf16.mxu0 0
      %916 = vmatpush1.bf16.msra.mxu0 0
      %917 = vmatprep.subr.bf16.mxu0 0
      %918 = vmatpush1.bf16.msra.mxu0 0
      %919 = vmatprep.subr.bf16.mxu0 0
      %920 = vmatpush1.bf16.msra.mxu0 0
      %921 = vmatprep.subr.bf16.mxu0 0
      %922 = vmatpush1.bf16.msra.mxu0 0
      %923 = vmatprep.subr.bf16.mxu0 0
      %924 = vmatpush1.bf16.msra.mxu0 0
      %925 = vmatprep.subr.bf16.mxu0 0
      %926 = vmatpush1.bf16.msra.mxu0 0
      %927 = vmatprep.subr.bf16.mxu0 0
      %928 = vmatpush1.bf16.msra.mxu0 0
      %929 = vmatprep.subr.bf16.mxu0 0
      %930 = vmatpush1.bf16.msra.mxu0 %v913
      %931 = vmatprep.subr.bf16.mxu0 0
      %932 = vmatpush2.bf16.msra.mxu0 0
      %933 = vmatprep.subr.bf16.mxu0 0
      %934 = vmatpush2.bf16.msra.mxu0 0
      %935 = vmatprep.subr.bf16.mxu0 0
      %936 = vmatpush2.bf16.msra.mxu0 0
      %937 = vmatprep.subr.bf16.mxu0 0
      %938 = vmatpush2.bf16.msra.mxu0 0
      %939 = vmatprep.subr.bf16.mxu0 0
      %940 = vmatpush2.bf16.msra.mxu0 0
      %941 = vmatprep.subr.bf16.mxu0 0
      %942 = vmatpush2.bf16.msra.mxu0 0
      %943 = vmatprep.subr.bf16.mxu0 0
      %944 = vmatpush2.bf16.msra.mxu0 0
      %945 = vmatprep.subr.bf16.mxu0 0
      %946 = vmatpush2.bf16.msra.mxu0 0
      %947 = vmatprep.mubr.bf16.mxu0 0
      %948 = vmatmul.mubr.bf16.gmra.mxu0 %v865
      %v949 = vpop.f32.mrf.mxu0
      %v950 = vadd.f32 %v738, %v949
      %v951 = vpop.f32.mrf.mxu0
      %v952 = vpop.f32.mrf.mxu0
      %v953 = vadd.f32 %v741, %v952
      %v954 = vpop.f32.mrf.mxu0
      %955 = vmatprep.mubr.bf16.mxu0 0
      %956 = vmatmul.mubr.bf16.gmra.mxu0 %v868
      %v957 = vpop.f32.mrf.mxu0
      %v958 = vadd.f32 %v746, %v957
      %v959 = vpop.f32.mrf.mxu0
      %v960 = vpop.f32.mrf.mxu0
      %v961 = vadd.f32 %v749, %v960
      %v962 = vpop.f32.mrf.mxu0
      %963 = vmatprep.mubr.bf16.mxu0 0
      %964 = vmatmul.mubr.bf16.gmra.mxu0 %v871
      %v965 = vpop.f32.mrf.mxu0
      %v966 = vadd.f32 %v754, %v965
      %v967 = vpop.f32.mrf.mxu0
      %v968 = vpop.f32.mrf.mxu0
      %v969 = vadd.f32 %v757, %v968
      %v970 = vpop.f32.mrf.mxu0
      %971 = vmatprep.mubr.bf16.mxu0 0
      %972 = vmatmul.mubr.bf16.gmra.mxu0 %v874
      %v973 = vpop.f32.mrf.mxu0
      %v974 = vadd.f32 %v762, %v973
      %v975 = vpop.f32.mrf.mxu0
      %v976 = vpop.f32.mrf.mxu0
      %v977 = vadd.f32 %v765, %v976
      %v978 = vpop.f32.mrf.mxu0
      %979 = vmatprep.mubr.bf16.mxu0 0
      %980 = vmatmul.mubr.bf16.gmra.mxu0 %v877
      %v981 = vpop.f32.mrf.mxu0
      %v982 = vadd.f32 %v770, %v981
      %v983 = vpop.f32.mrf.mxu0
      %v984 = vpop.f32.mrf.mxu0
      %v985 = vadd.f32 %v773, %v984
      %v986 = vpop.f32.mrf.mxu0
      %987 = vmatprep.mubr.bf16.mxu0 0
      %988 = vmatmul.mubr.bf16.gmra.mxu0 %v880
      %v989 = vpop.f32.mrf.mxu0
      %v990 = vadd.f32 %v778, %v989
      %v991 = vpop.f32.mrf.mxu0
      %v992 = vpop.f32.mrf.mxu0
      %v993 = vadd.f32 %v781, %v992
      %v994 = vpop.f32.mrf.mxu0
      %995 = vmatprep.mubr.bf16.mxu0 0
      %996 = vmatmul.mubr.bf16.gmra.mxu0 %v883
      %v997 = vpop.f32.mrf.mxu0
      %v998 = vadd.f32 %v786, %v997
      %v999 = vpop.f32.mrf.mxu0
      %v1000 = vpop.f32.mrf.mxu0
      %v1001 = vadd.f32 %v789, %v1000
      %v1002 = vpop.f32.mrf.mxu0
      %1003 = vmatprep.mubr.bf16.mxu0 0
      %1004 = vmatmul.mubr.bf16.gmra.mxu0 %v886
      %v1005 = vpop.f32.mrf.mxu0
      %v1006 = vadd.f32 %v794, %v1005
      %v1007 = vpop.f32.mrf.mxu0
      %v1008 = vpop.f32.mrf.mxu0
      %v1009 = vadd.f32 %v797, %v1008
      %v1010 = vpop.f32.mrf.mxu0
      %1011 = vmatprep.mubr.bf16.mxu0 0
      %1012 = vmatmul.mubr.bf16.gmra.mxu0 %v889
      %v1013 = vpop.f32.mrf.mxu0
      %v1014 = vadd.f32 %v802, %v1013
      %v1015 = vpop.f32.mrf.mxu0
      %v1016 = vpop.f32.mrf.mxu0
      %v1017 = vadd.f32 %v805, %v1016
      %v1018 = vpop.f32.mrf.mxu0
      %1019 = vmatprep.mubr.bf16.mxu0 0
      %1020 = vmatmul.mubr.bf16.gmra.mxu0 %v892
      %v1021 = vpop.f32.mrf.mxu0
      %v1022 = vadd.f32 %v810, %v1021
      %v1023 = vpop.f32.mrf.mxu0
      %v1024 = vpop.f32.mrf.mxu0
      %v1025 = vadd.f32 %v813, %v1024
      %v1026 = vpop.f32.mrf.mxu0
      %1027 = vmatprep.mubr.bf16.mxu0 0
      %1028 = vmatmul.mubr.bf16.gmra.mxu0 %v895
      %v1029 = vpop.f32.mrf.mxu0
      %v1030 = vadd.f32 %v818, %v1029
      %v1031 = vpop.f32.mrf.mxu0
      %v1032 = vpop.f32.mrf.mxu0
      %v1033 = vadd.f32 %v821, %v1032
      %v1034 = vpop.f32.mrf.mxu0
      %1035 = vmatprep.mubr.bf16.mxu0 0
      %1036 = vmatmul.mubr.bf16.gmra.mxu0 %v898
      %v1037 = vpop.f32.mrf.mxu0
      %v1038 = vadd.f32 %v826, %v1037
      %v1039 = vpop.f32.mrf.mxu0
      %v1040 = vpop.f32.mrf.mxu0
      %v1041 = vadd.f32 %v829, %v1040
      %v1042 = vpop.f32.mrf.mxu0
      %1043 = vmatprep.mubr.bf16.mxu0 0
      %1044 = vmatmul.mubr.bf16.gmra.mxu0 %v901
      %v1045 = vpop.f32.mrf.mxu0
      %v1046 = vadd.f32 %v834, %v1045
      %v1047 = vpop.f32.mrf.mxu0
      %v1048 = vpop.f32.mrf.mxu0
      %v1049 = vadd.f32 %v837, %v1048
      %v1050 = vpop.f32.mrf.mxu0
      %1051 = vmatprep.mubr.bf16.mxu0 0
      %1052 = vmatmul.mubr.bf16.gmra.mxu0 %v904
      %v1053 = vpop.f32.mrf.mxu0
      %v1054 = vadd.f32 %v842, %v1053
      %v1055 = vpop.f32.mrf.mxu0
      %v1056 = vpop.f32.mrf.mxu0
      %v1057 = vadd.f32 %v845, %v1056
      %v1058 = vpop.f32.mrf.mxu0
      %1059 = vmatprep.mubr.bf16.mxu0 0
      %1060 = vmatmul.mubr.bf16.gmra.mxu0 %v907
      %v1061 = vpop.f32.mrf.mxu0
      %v1062 = vadd.f32 %v850, %v1061
      %v1063 = vpop.f32.mrf.mxu0
      %v1064 = vpop.f32.mrf.mxu0
      %v1065 = vadd.f32 %v853, %v1064
      %v1066 = vpop.f32.mrf.mxu0
      %1067 = vmatprep.mubr.bf16.mxu0 0
      %1068 = vmatmul.mubr.bf16.gmra.mxu0 %v910
      %v1069 = vpop.f32.mrf.mxu0
      %v1070 = vadd.f32 %v858, %v1069
      %v1071 = vpop.f32.mrf.mxu0
      %v1072 = vpop.f32.mrf.mxu0
      %v1073 = vadd.f32 %v861, %v1072
      %v1074 = vpop.f32.mrf.mxu0
      %1075 = vdwg.mxu0
      %vm1076 = vcmask 1045504
      %v1077 = vrot.slane %v401, 2
      %v1078 = vrot.slane %v402, 2
      %v1079 = vsel %vm1076, %v1077, %v1078
      %v1080 = vrot.slane %v403, 2
      %v1081 = vsel %vm1076, %v1078, %v1080
      %v1082 = vrot.slane %v404, 2
      %v1083 = vrot.slane %v405, 2
      %v1084 = vsel %vm1076, %v1082, %v1083
      %v1085 = vrot.slane %v406, 2
      %v1086 = vsel %vm1076, %v1083, %v1085
      %v1087 = vrot.slane %v407, 2
      %v1088 = vrot.slane %v408, 2
      %v1089 = vsel %vm1076, %v1087, %v1088
      %v1090 = vrot.slane %v409, 2
      %v1091 = vsel %vm1076, %v1088, %v1090
      %v1092 = vrot.slane %v410, 2
      %v1093 = vrot.slane %v411, 2
      %v1094 = vsel %vm1076, %v1092, %v1093
      %v1095 = vrot.slane %v412, 2
      %v1096 = vsel %vm1076, %v1093, %v1095
      %v1097 = vrot.slane %v413, 2
      %v1098 = vrot.slane %v414, 2
      %v1099 = vsel %vm1076, %v1097, %v1098
      %v1100 = vrot.slane %v415, 2
      %v1101 = vsel %vm1076, %v1098, %v1100
      %v1102 = vrot.slane %v416, 2
      %v1103 = vrot.slane %v417, 2
      %v1104 = vsel %vm1076, %v1102, %v1103
      %v1105 = vrot.slane %v418, 2
      %v1106 = vsel %vm1076, %v1103, %v1105
      %v1107 = vrot.slane %v419, 2
      %v1108 = vrot.slane %v420, 2
      %v1109 = vsel %vm1076, %v1107, %v1108
      %v1110 = vrot.slane %v421, 2
      %v1111 = vsel %vm1076, %v1108, %v1110
      %v1112 = vrot.slane %v422, 2
      %v1113 = vrot.slane %v423, 2
      %v1114 = vsel %vm1076, %v1112, %v1113
      %v1115 = vrot.slane %v424, 2
      %v1116 = vsel %vm1076, %v1113, %v1115
      %v1117 = vrot.slane %v425, 2
      %v1118 = vrot.slane %v426, 2
      %v1119 = vsel %vm1076, %v1117, %v1118
      %v1120 = vrot.slane %v427, 2
      %v1121 = vsel %vm1076, %v1118, %v1120
      %v1122 = vrot.slane %v428, 2
      %v1123 = vrot.slane %v429, 2
      %v1124 = vsel %vm1076, %v1122, %v1123
      %v1125 = vrot.slane %v430, 2
      %v1126 = vsel %vm1076, %v1123, %v1125
      %v1127 = vrot.slane %v431, 2
      %v1128 = vrot.slane %v432, 2
      %v1129 = vsel %vm1076, %v1127, %v1128
      %v1130 = vrot.slane %v433, 2
      %v1131 = vsel %vm1076, %v1128, %v1130
      %v1132 = vrot.slane %v434, 2
      %v1133 = vrot.slane %v435, 2
      %v1134 = vsel %vm1076, %v1132, %v1133
      %v1135 = vrot.slane %v436, 2
      %v1136 = vsel %vm1076, %v1133, %v1135
      %v1137 = vrot.slane %v437, 2
      %v1138 = vrot.slane %v438, 2
      %v1139 = vsel %vm1076, %v1137, %v1138
      %v1140 = vrot.slane %v439, 2
      %v1141 = vsel %vm1076, %v1138, %v1140
      %v1142 = vrot.slane %v440, 2
      %v1143 = vrot.slane %v441, 2
      %v1144 = vsel %vm1076, %v1142, %v1143
      %v1145 = vrot.slane %v442, 2
      %v1146 = vsel %vm1076, %v1143, %v1145
      %v1147 = vrot.slane %v443, 2
      %v1148 = vrot.slane %v444, 2
      %v1149 = vsel %vm1076, %v1147, %v1148
      %v1150 = vrot.slane %v445, 2
      %v1151 = vsel %vm1076, %v1148, %v1150
      %v1152 = vrot.slane %v446, 2
      %v1153 = vrot.slane %v447, 2
      %v1154 = vsel %vm1076, %v1152, %v1153
      %v1155 = vrot.slane %v448, 2
      %v1156 = vsel %vm1076, %v1153, %v1155
      %v1189 = vpack.c.bf16 %v1081, %v1079
      %v1190 = vpack.c.bf16 %v1086, %v1084
      %v1191 = vpack.c.bf16 %v1091, %v1089
      %v1192 = vpack.c.bf16 %v1096, %v1094
      %v1193 = vpack.c.bf16 %v1101, %v1099
      %v1194 = vpack.c.bf16 %v1106, %v1104
      %v1195 = vpack.c.bf16 %v1111, %v1109
      %v1196 = vpack.c.bf16 %v1116, %v1114
      %v1197 = vpack.c.bf16 %v1121, %v1119
      %v1198 = vpack.c.bf16 %v1126, %v1124
      %v1199 = vpack.c.bf16 %v1131, %v1129
      %v1200 = vpack.c.bf16 %v1136, %v1134
      %v1201 = vpack.c.bf16 %v1141, %v1139
      %v1202 = vpack.c.bf16 %v1146, %v1144
      %v1203 = vpack.c.bf16 %v1151, %v1149
      %v1204 = vpack.c.bf16 %v1156, %v1154
      %s1205 = scalar_lea.vmem %s1, 8
      %v1206 = vld [vmem:[%s1205] sm:$0xf]
      %v1208 = vsel %vm312, %v1189, 0
      %v1211 = vsel %vm312, %v1190, 0
      %v1214 = vsel %vm312, %v1191, 0
      %v1217 = vsel %vm312, %v1192, 0
      %v1220 = vsel %vm312, %v1193, 0
      %v1223 = vsel %vm312, %v1194, 0
      %v1226 = vsel %vm312, %v1195, 0
      %v1229 = vsel %vm312, %v1196, 0
      %v1232 = vsel %vm312, %v1197, 0
      %v1235 = vsel %vm312, %v1198, 0
      %v1238 = vsel %vm312, %v1199, 0
      %v1241 = vsel %vm312, %v1200, 0
      %v1244 = vsel %vm312, %v1201, 0
      %v1247 = vsel %vm312, %v1202, 0
      %v1250 = vsel %vm312, %v1203, 0
      %v1253 = vsel %vm312, %v1204, 0
      %v1256 = vsel %vm699, %v1206, 0
      %1258 = vmatprep.subr.bf16.mxu0 0
      %1259 = vmatpush1.bf16.msra.mxu0 0
      %1260 = vmatprep.subr.bf16.mxu0 0
      %1261 = vmatpush1.bf16.msra.mxu0 0
      %1262 = vmatprep.subr.bf16.mxu0 0
      %1263 = vmatpush1.bf16.msra.mxu0 0
      %1264 = vmatprep.subr.bf16.mxu0 0
      %1265 = vmatpush1.bf16.msra.mxu0 0
      %1266 = vmatprep.subr.bf16.mxu0 0
      %1267 = vmatpush1.bf16.msra.mxu0 0
      %1268 = vmatprep.subr.bf16.mxu0 0
      %1269 = vmatpush1.bf16.msra.mxu0 0
      %1270 = vmatprep.subr.bf16.mxu0 0
      %1271 = vmatpush1.bf16.msra.mxu0 0
      %1272 = vmatprep.subr.bf16.mxu0 0
      %1273 = vmatpush1.bf16.msra.mxu0 %v1256
      %1274 = vmatprep.subr.bf16.mxu0 0
      %1275 = vmatpush2.bf16.msra.mxu0 0
      %1276 = vmatprep.subr.bf16.mxu0 0
      %1277 = vmatpush2.bf16.msra.mxu0 0
      %1278 = vmatprep.subr.bf16.mxu0 0
      %1279 = vmatpush2.bf16.msra.mxu0 0
      %1280 = vmatprep.subr.bf16.mxu0 0
      %1281 = vmatpush2.bf16.msra.mxu0 0
      %1282 = vmatprep.subr.bf16.mxu0 0
      %1283 = vmatpush2.bf16.msra.mxu0 0
      %1284 = vmatprep.subr.bf16.mxu0 0
      %1285 = vmatpush2.bf16.msra.mxu0 0
      %1286 = vmatprep.subr.bf16.mxu0 0
      %1287 = vmatpush2.bf16.msra.mxu0 0
      %1288 = vmatprep.subr.bf16.mxu0 0
      %1289 = vmatpush2.bf16.msra.mxu0 0
      %1290 = vmatprep.mubr.bf16.mxu0 0
      %1291 = vmatmul.mubr.bf16.gmra.mxu0 %v1208
      %v1292 = vpop.f32.mrf.mxu0
      %v1293 = vadd.f32 0.0, %v1292
      %v1294 = vpop.f32.mrf.mxu0
      %v1295 = vpop.f32.mrf.mxu0
      %v1296 = vadd.f32 0.0, %v1295
      %v1297 = vpop.f32.mrf.mxu0
      %1298 = vmatprep.mubr.bf16.mxu0 0
      %1299 = vmatmul.mubr.bf16.gmra.mxu0 %v1211
      %v1300 = vpop.f32.mrf.mxu0
      %v1301 = vadd.f32 0.0, %v1300
      %v1302 = vpop.f32.mrf.mxu0
      %v1303 = vpop.f32.mrf.mxu0
      %v1304 = vadd.f32 0.0, %v1303
      %v1305 = vpop.f32.mrf.mxu0
      %1306 = vmatprep.mubr.bf16.mxu0 0
      %1307 = vmatmul.mubr.bf16.gmra.mxu0 %v1214
      %v1308 = vpop.f32.mrf.mxu0
      %v1309 = vadd.f32 0.0, %v1308
      %v1310 = vpop.f32.mrf.mxu0
      %v1311 = vpop.f32.mrf.mxu0
      %v1312 = vadd.f32 0.0, %v1311
      %v1313 = vpop.f32.mrf.mxu0
      %1314 = vmatprep.mubr.bf16.mxu0 0
      %1315 = vmatmul.mubr.bf16.gmra.mxu0 %v1217
      %v1316 = vpop.f32.mrf.mxu0
      %v1317 = vadd.f32 0.0, %v1316
      %v1318 = vpop.f32.mrf.mxu0
      %v1319 = vpop.f32.mrf.mxu0
      %v1320 = vadd.f32 0.0, %v1319
      %v1321 = vpop.f32.mrf.mxu0
      %1322 = vmatprep.mubr.bf16.mxu0 0
      %1323 = vmatmul.mubr.bf16.gmra.mxu0 %v1220
      %v1324 = vpop.f32.mrf.mxu0
      %v1325 = vadd.f32 0.0, %v1324
      %v1326 = vpop.f32.mrf.mxu0
      %v1327 = vpop.f32.mrf.mxu0
      %v1328 = vadd.f32 0.0, %v1327
      %v1329 = vpop.f32.mrf.mxu0
      %1330 = vmatprep.mubr.bf16.mxu0 0
      %1331 = vmatmul.mubr.bf16.gmra.mxu0 %v1223
      %v1332 = vpop.f32.mrf.mxu0
      %v1333 = vadd.f32 0.0, %v1332
      %v1334 = vpop.f32.mrf.mxu0
      %v1335 = vpop.f32.mrf.mxu0
      %v1336 = vadd.f32 0.0, %v1335
      %v1337 = vpop.f32.mrf.mxu0
      %1338 = vmatprep.mubr.bf16.mxu0 0
      %1339 = vmatmul.mubr.bf16.gmra.mxu0 %v1226
      %v1340 = vpop.f32.mrf.mxu0
      %v1341 = vadd.f32 0.0, %v1340
      %v1342 = vpop.f32.mrf.mxu0
      %v1343 = vpop.f32.mrf.mxu0
      %v1344 = vadd.f32 0.0, %v1343
      %v1345 = vpop.f32.mrf.mxu0
      %1346 = vmatprep.mubr.bf16.mxu0 0
      %1347 = vmatmul.mubr.bf16.gmra.mxu0 %v1229
      %v1348 = vpop.f32.mrf.mxu0
      %v1349 = vadd.f32 0.0, %v1348
      %v1350 = vpop.f32.mrf.mxu0
      %v1351 = vpop.f32.mrf.mxu0
      %v1352 = vadd.f32 0.0, %v1351
      %v1353 = vpop.f32.mrf.mxu0
      %1354 = vmatprep.mubr.bf16.mxu0 0
      %1355 = vmatmul.mubr.bf16.gmra.mxu0 %v1232
      %v1356 = vpop.f32.mrf.mxu0
      %v1357 = vadd.f32 0.0, %v1356
      %v1358 = vpop.f32.mrf.mxu0
      %v1359 = vpop.f32.mrf.mxu0
      %v1360 = vadd.f32 0.0, %v1359
      %v1361 = vpop.f32.mrf.mxu0
      %1362 = vmatprep.mubr.bf16.mxu0 0
      %1363 = vmatmul.mubr.bf16.gmra.mxu0 %v1235
      %v1364 = vpop.f32.mrf.mxu0
      %v1365 = vadd.f32 0.0, %v1364
      %v1366 = vpop.f32.mrf.mxu0
      %v1367 = vpop.f32.mrf.mxu0
      %v1368 = vadd.f32 0.0, %v1367
      %v1369 = vpop.f32.mrf.mxu0
      %1370 = vmatprep.mubr.bf16.mxu0 0
      %1371 = vmatmul.mubr.bf16.gmra.mxu0 %v1238
      %v1372 = vpop.f32.mrf.mxu0
      %v1373 = vadd.f32 0.0, %v1372
      %v1374 = vpop.f32.mrf.mxu0
      %v1375 = vpop.f32.mrf.mxu0
      %v1376 = vadd.f32 0.0, %v1375
      %v1377 = vpop.f32.mrf.mxu0
      %1378 = vmatprep.mubr.bf16.mxu0 0
      %1379 = vmatmul.mubr.bf16.gmra.mxu0 %v1241
      %v1380 = vpop.f32.mrf.mxu0
      %v1381 = vadd.f32 0.0, %v1380
      %v1382 = vpop.f32.mrf.mxu0
      %v1383 = vpop.f32.mrf.mxu0
      %v1384 = vadd.f32 0.0, %v1383
      %v1385 = vpop.f32.mrf.mxu0
      %1386 = vmatprep.mubr.bf16.mxu0 0
      %1387 = vmatmul.mubr.bf16.gmra.mxu0 %v1244
      %v1388 = vpop.f32.mrf.mxu0
      %v1389 = vadd.f32 0.0, %v1388
      %v1390 = vpop.f32.mrf.mxu0
      %v1391 = vpop.f32.mrf.mxu0
      %v1392 = vadd.f32 0.0, %v1391
      %v1393 = vpop.f32.mrf.mxu0
      %1394 = vmatprep.mubr.bf16.mxu0 0
      %1395 = vmatmul.mubr.bf16.gmra.mxu0 %v1247
      %v1396 = vpop.f32.mrf.mxu0
      %v1397 = vadd.f32 0.0, %v1396
      %v1398 = vpop.f32.mrf.mxu0
      %v1399 = vpop.f32.mrf.mxu0
      %v1400 = vadd.f32 0.0, %v1399
      %v1401 = vpop.f32.mrf.mxu0
      %1402 = vmatprep.mubr.bf16.mxu0 0
      %1403 = vmatmul.mubr.bf16.gmra.mxu0 %v1250
      %v1404 = vpop.f32.mrf.mxu0
      %v1405 = vadd.f32 0.0, %v1404
      %v1406 = vpop.f32.mrf.mxu0
      %v1407 = vpop.f32.mrf.mxu0
      %v1408 = vadd.f32 0.0, %v1407
      %v1409 = vpop.f32.mrf.mxu0
      %1410 = vmatprep.mubr.bf16.mxu0 0
      %1411 = vmatmul.mubr.bf16.gmra.mxu0 %v1253
      %v1412 = vpop.f32.mrf.mxu0
      %v1413 = vadd.f32 0.0, %v1412
      %v1414 = vpop.f32.mrf.mxu0
      %v1415 = vpop.f32.mrf.mxu0
      %v1416 = vadd.f32 0.0, %v1415
      %v1417 = vpop.f32.mrf.mxu0
      %1418 = vdwg.mxu0
      %v1419 = vadd.f32 %v950, %v1293
      %v1420 = vadd.f32 %v953, %v1296
      %v1421 = vadd.f32 %v958, %v1301
      %v1422 = vadd.f32 %v961, %v1304
      %v1423 = vadd.f32 %v966, %v1309
      %v1424 = vadd.f32 %v969, %v1312
      %v1425 = vadd.f32 %v974, %v1317
      %v1426 = vadd.f32 %v977, %v1320
      %v1427 = vadd.f32 %v982, %v1325
      %v1428 = vadd.f32 %v985, %v1328
      %v1429 = vadd.f32 %v990, %v1333
      %v1430 = vadd.f32 %v993, %v1336
      %v1431 = vadd.f32 %v998, %v1341
      %v1432 = vadd.f32 %v1001, %v1344
      %v1433 = vadd.f32 %v1006, %v1349
      %v1434 = vadd.f32 %v1009, %v1352
      %v1435 = vadd.f32 %v1014, %v1357
      %v1436 = vadd.f32 %v1017, %v1360
      %v1437 = vadd.f32 %v1022, %v1365
      %v1438 = vadd.f32 %v1025, %v1368
      %v1439 = vadd.f32 %v1030, %v1373
      %v1440 = vadd.f32 %v1033, %v1376
      %v1441 = vadd.f32 %v1038, %v1381
      %v1442 = vadd.f32 %v1041, %v1384
      %v1443 = vadd.f32 %v1046, %v1389
      %v1444 = vadd.f32 %v1049, %v1392
      %v1445 = vadd.f32 %v1054, %v1397
      %v1446 = vadd.f32 %v1057, %v1400
      %v1447 = vadd.f32 %v1062, %v1405
      %v1448 = vadd.f32 %v1065, %v1408
      %v1449 = vadd.f32 %v1070, %v1413
      %v1450 = vadd.f32 %v1073, %v1416
      %v1451 = vpack.c.bf16 %v450, %v449
      %s1452 = scalar_lea.vmem %s1, 12
      %v1453 = vld [vmem:[%s1452] sm:$0xf]
      %v1455 = vsel %vm312, %v1451, 0
      %v1458 = vsel %vm699, %v1453, 0
      %1460 = vmatprep.subr.bf16.mxu0 0
      %1461 = vmatpush1.bf16.msra.mxu0 0
      %1462 = vmatprep.subr.bf16.mxu0 0
      %1463 = vmatpush1.bf16.msra.mxu0 0
      %1464 = vmatprep.subr.bf16.mxu0 0
      %1465 = vmatpush1.bf16.msra.mxu0 0
      %1466 = vmatprep.subr.bf16.mxu0 0
      %1467 = vmatpush1.bf16.msra.mxu0 0
      %1468 = vmatprep.subr.bf16.mxu0 0
      %1469 = vmatpush1.bf16.msra.mxu0 0
      %1470 = vmatprep.subr.bf16.mxu0 0
      %1471 = vmatpush1.bf16.msra.mxu0 0
      %1472 = vmatprep.subr.bf16.mxu0 0
      %1473 = vmatpush1.bf16.msra.mxu0 0
      %1474 = vmatprep.subr.bf16.mxu0 0
      %1475 = vmatpush1.bf16.msra.mxu0 %v1458
      %1476 = vmatprep.subr.bf16.mxu0 0
      %1477 = vmatpush2.bf16.msra.mxu0 0
      %1478 = vmatprep.subr.bf16.mxu0 0
      %1479 = vmatpush2.bf16.msra.mxu0 0
      %1480 = vmatprep.subr.bf16.mxu0 0
      %1481 = vmatpush2.bf16.msra.mxu0 0
      %1482 = vmatprep.subr.bf16.mxu0 0
      %1483 = vmatpush2.bf16.msra.mxu0 0
      %1484 = vmatprep.subr.bf16.mxu0 0
      %1485 = vmatpush2.bf16.msra.mxu0 0
      %1486 = vmatprep.subr.bf16.mxu0 0
      %1487 = vmatpush2.bf16.msra.mxu0 0
      %1488 = vmatprep.subr.bf16.mxu0 0
      %1489 = vmatpush2.bf16.msra.mxu0 0
      %1490 = vmatprep.subr.bf16.mxu0 0
      %1491 = vmatpush2.bf16.msra.mxu0 0
      %1492 = vmatprep.mubr.bf16.mxu0 0
      %1493 = vmatmul.mubr.bf16.gmra.mxu0 %v868
      %v1494 = vpop.f32.mrf.mxu0
      %v1495 = vadd.f32 0.0, %v1494
      %v1496 = vpop.f32.mrf.mxu0
      %v1497 = vpop.f32.mrf.mxu0
      %v1498 = vadd.f32 0.0, %v1497
      %v1499 = vpop.f32.mrf.mxu0
      %1500 = vmatprep.mubr.bf16.mxu0 0
      %1501 = vmatmul.mubr.bf16.gmra.mxu0 %v871
      %v1502 = vpop.f32.mrf.mxu0
      %v1503 = vadd.f32 0.0, %v1502
      %v1504 = vpop.f32.mrf.mxu0
      %v1505 = vpop.f32.mrf.mxu0
      %v1506 = vadd.f32 0.0, %v1505
      %v1507 = vpop.f32.mrf.mxu0
      %1508 = vmatprep.mubr.bf16.mxu0 0
      %1509 = vmatmul.mubr.bf16.gmra.mxu0 %v874
      %v1510 = vpop.f32.mrf.mxu0
      %v1511 = vadd.f32 0.0, %v1510
      %v1512 = vpop.f32.mrf.mxu0
      %v1513 = vpop.f32.mrf.mxu0
      %v1514 = vadd.f32 0.0, %v1513
      %v1515 = vpop.f32.mrf.mxu0
      %1516 = vmatprep.mubr.bf16.mxu0 0
      %1517 = vmatmul.mubr.bf16.gmra.mxu0 %v877
      %v1518 = vpop.f32.mrf.mxu0
      %v1519 = vadd.f32 0.0, %v1518
      %v1520 = vpop.f32.mrf.mxu0
      %v1521 = vpop.f32.mrf.mxu0
      %v1522 = vadd.f32 0.0, %v1521
      %v1523 = vpop.f32.mrf.mxu0
      %1524 = vmatprep.mubr.bf16.mxu0 0
      %1525 = vmatmul.mubr.bf16.gmra.mxu0 %v880
      %v1526 = vpop.f32.mrf.mxu0
      %v1527 = vadd.f32 0.0, %v1526
      %v1528 = vpop.f32.mrf.mxu0
      %v1529 = vpop.f32.mrf.mxu0
      %v1530 = vadd.f32 0.0, %v1529
      %v1531 = vpop.f32.mrf.mxu0
      %1532 = vmatprep.mubr.bf16.mxu0 0
      %1533 = vmatmul.mubr.bf16.gmra.mxu0 %v883
      %v1534 = vpop.f32.mrf.mxu0
      %v1535 = vadd.f32 0.0, %v1534
      %v1536 = vpop.f32.mrf.mxu0
      %v1537 = vpop.f32.mrf.mxu0
      %v1538 = vadd.f32 0.0, %v1537
      %v1539 = vpop.f32.mrf.mxu0
      %1540 = vmatprep.mubr.bf16.mxu0 0
      %1541 = vmatmul.mubr.bf16.gmra.mxu0 %v886
      %v1542 = vpop.f32.mrf.mxu0
      %v1543 = vadd.f32 0.0, %v1542
      %v1544 = vpop.f32.mrf.mxu0
      %v1545 = vpop.f32.mrf.mxu0
      %v1546 = vadd.f32 0.0, %v1545
      %v1547 = vpop.f32.mrf.mxu0
      %1548 = vmatprep.mubr.bf16.mxu0 0
      %1549 = vmatmul.mubr.bf16.gmra.mxu0 %v889
      %v1550 = vpop.f32.mrf.mxu0
      %v1551 = vadd.f32 0.0, %v1550
      %v1552 = vpop.f32.mrf.mxu0
      %v1553 = vpop.f32.mrf.mxu0
      %v1554 = vadd.f32 0.0, %v1553
      %v1555 = vpop.f32.mrf.mxu0
      %1556 = vmatprep.mubr.bf16.mxu0 0
      %1557 = vmatmul.mubr.bf16.gmra.mxu0 %v892
      %v1558 = vpop.f32.mrf.mxu0
      %v1559 = vadd.f32 0.0, %v1558
      %v1560 = vpop.f32.mrf.mxu0
      %v1561 = vpop.f32.mrf.mxu0
      %v1562 = vadd.f32 0.0, %v1561
      %v1563 = vpop.f32.mrf.mxu0
      %1564 = vmatprep.mubr.bf16.mxu0 0
      %1565 = vmatmul.mubr.bf16.gmra.mxu0 %v895
      %v1566 = vpop.f32.mrf.mxu0
      %v1567 = vadd.f32 0.0, %v1566
      %v1568 = vpop.f32.mrf.mxu0
      %v1569 = vpop.f32.mrf.mxu0
      %v1570 = vadd.f32 0.0, %v1569
      %v1571 = vpop.f32.mrf.mxu0
      %1572 = vmatprep.mubr.bf16.mxu0 0
      %1573 = vmatmul.mubr.bf16.gmra.mxu0 %v898
      %v1574 = vpop.f32.mrf.mxu0
      %v1575 = vadd.f32 0.0, %v1574
      %v1576 = vpop.f32.mrf.mxu0
      %v1577 = vpop.f32.mrf.mxu0
      %v1578 = vadd.f32 0.0, %v1577
      %v1579 = vpop.f32.mrf.mxu0
      %1580 = vmatprep.mubr.bf16.mxu0 0
      %1581 = vmatmul.mubr.bf16.gmra.mxu0 %v901
      %v1582 = vpop.f32.mrf.mxu0
      %v1583 = vadd.f32 0.0, %v1582
      %v1584 = vpop.f32.mrf.mxu0
      %v1585 = vpop.f32.mrf.mxu0
      %v1586 = vadd.f32 0.0, %v1585
      %v1587 = vpop.f32.mrf.mxu0
      %1588 = vmatprep.mubr.bf16.mxu0 0
      %1589 = vmatmul.mubr.bf16.gmra.mxu0 %v904
      %v1590 = vpop.f32.mrf.mxu0
      %v1591 = vadd.f32 0.0, %v1590
      %v1592 = vpop.f32.mrf.mxu0
      %v1593 = vpop.f32.mrf.mxu0
      %v1594 = vadd.f32 0.0, %v1593
      %v1595 = vpop.f32.mrf.mxu0
      %1596 = vmatprep.mubr.bf16.mxu0 0
      %1597 = vmatmul.mubr.bf16.gmra.mxu0 %v907
      %v1598 = vpop.f32.mrf.mxu0
      %v1599 = vadd.f32 0.0, %v1598
      %v1600 = vpop.f32.mrf.mxu0
      %v1601 = vpop.f32.mrf.mxu0
      %v1602 = vadd.f32 0.0, %v1601
      %v1603 = vpop.f32.mrf.mxu0
      %1604 = vmatprep.mubr.bf16.mxu0 0
      %1605 = vmatmul.mubr.bf16.gmra.mxu0 %v910
      %v1606 = vpop.f32.mrf.mxu0
      %v1607 = vadd.f32 0.0, %v1606
      %v1608 = vpop.f32.mrf.mxu0
      %v1609 = vpop.f32.mrf.mxu0
      %v1610 = vadd.f32 0.0, %v1609
      %v1611 = vpop.f32.mrf.mxu0
      %1612 = vmatprep.mubr.bf16.mxu0 0
      %1613 = vmatmul.mubr.bf16.gmra.mxu0 %v1455
      %v1614 = vpop.f32.mrf.mxu0
      %v1615 = vadd.f32 0.0, %v1614
      %v1616 = vpop.f32.mrf.mxu0
      %v1617 = vpop.f32.mrf.mxu0
      %v1618 = vadd.f32 0.0, %v1617
      %v1619 = vpop.f32.mrf.mxu0
      %1620 = vdwg.mxu0
      %v1621 = vadd.f32 %v1419, %v1495
      %v1622 = vadd.f32 %v1420, %v1498
      %v1623 = vadd.f32 %v1421, %v1503
      %v1624 = vadd.f32 %v1422, %v1506
      %v1625 = vadd.f32 %v1423, %v1511
      %v1626 = vadd.f32 %v1424, %v1514
      %v1627 = vadd.f32 %v1425, %v1519
      %v1628 = vadd.f32 %v1426, %v1522
      %v1629 = vadd.f32 %v1427, %v1527
      %v1630 = vadd.f32 %v1428, %v1530
      %v1631 = vadd.f32 %v1429, %v1535
      %v1632 = vadd.f32 %v1430, %v1538
      %v1633 = vadd.f32 %v1431, %v1543
      %v1634 = vadd.f32 %v1432, %v1546
      %v1635 = vadd.f32 %v1433, %v1551
      %v1636 = vadd.f32 %v1434, %v1554
      %v1637 = vadd.f32 %v1435, %v1559
      %v1638 = vadd.f32 %v1436, %v1562
      %v1639 = vadd.f32 %v1437, %v1567
      %v1640 = vadd.f32 %v1438, %v1570
      %v1641 = vadd.f32 %v1439, %v1575
      %v1642 = vadd.f32 %v1440, %v1578
      %v1643 = vadd.f32 %v1441, %v1583
      %v1644 = vadd.f32 %v1442, %v1586
      %v1645 = vadd.f32 %v1443, %v1591
      %v1646 = vadd.f32 %v1444, %v1594
      %v1647 = vadd.f32 %v1445, %v1599
      %v1648 = vadd.f32 %v1446, %v1602
      %v1649 = vadd.f32 %v1447, %v1607
      %v1650 = vadd.f32 %v1448, %v1610
      %v1651 = vadd.f32 %v1449, %v1615
      %v1652 = vadd.f32 %v1450, %v1618
      %v1656 = vrot.slane %v449, 1
      %v1657 = vrot.slane %v450, 1
      %v1658 = vsel %vm520, %v1656, %v1657
      %v1659 = vrot.slane %v451, 1
      %v1660 = vsel %vm520, %v1657, %v1659
      %v1663 = vpack.c.bf16 %v1660, %v1658
      %s1664 = scalar_lea.vmem %s1, 16
      %v1665 = vld [vmem:[%s1664] sm:$0xf]
      %v1667 = vsel %vm312, %v1663, 0
      %v1670 = vsel %vm699, %v1665, 0
      %1672 = vmatprep.subr.bf16.mxu0 0
      %1673 = vmatpush1.bf16.msra.mxu0 0
      %1674 = vmatprep.subr.bf16.mxu0 0
      %1675 = vmatpush1.bf16.msra.mxu0 0
      %1676 = vmatprep.subr.bf16.mxu0 0
      %1677 = vmatpush1.bf16.msra.mxu0 0
      %1678 = vmatprep.subr.bf16.mxu0 0
      %1679 = vmatpush1.bf16.msra.mxu0 0
      %1680 = vmatprep.subr.bf16.mxu0 0
      %1681 = vmatpush1.bf16.msra.mxu0 0
      %1682 = vmatprep.subr.bf16.mxu0 0
      %1683 = vmatpush1.bf16.msra.mxu0 0
      %1684 = vmatprep.subr.bf16.mxu0 0
      %1685 = vmatpush1.bf16.msra.mxu0 0
      %1686 = vmatprep.subr.bf16.mxu0 0
      %1687 = vmatpush1.bf16.msra.mxu0 %v1670
      %1688 = vmatprep.subr.bf16.mxu0 0
      %1689 = vmatpush2.bf16.msra.mxu0 0
      %1690 = vmatprep.subr.bf16.mxu0 0
      %1691 = vmatpush2.bf16.msra.mxu0 0
      %1692 = vmatprep.subr.bf16.mxu0 0
      %1693 = vmatpush2.bf16.msra.mxu0 0
      %1694 = vmatprep.subr.bf16.mxu0 0
      %1695 = vmatpush2.bf16.msra.mxu0 0
      %1696 = vmatprep.subr.bf16.mxu0 0
      %1697 = vmatpush2.bf16.msra.mxu0 0
      %1698 = vmatprep.subr.bf16.mxu0 0
      %1699 = vmatpush2.bf16.msra.mxu0 0
      %1700 = vmatprep.subr.bf16.mxu0 0
      %1701 = vmatpush2.bf16.msra.mxu0 0
      %1702 = vmatprep.subr.bf16.mxu0 0
      %1703 = vmatpush2.bf16.msra.mxu0 0
      %1704 = vmatprep.mubr.bf16.mxu0 0
      %1705 = vmatmul.mubr.bf16.gmra.mxu0 %v655
      %v1706 = vpop.f32.mrf.mxu0
      %v1707 = vadd.f32 0.0, %v1706
      %v1708 = vpop.f32.mrf.mxu0
      %v1709 = vpop.f32.mrf.mxu0
      %v1710 = vadd.f32 0.0, %v1709
      %v1711 = vpop.f32.mrf.mxu0
      %1712 = vmatprep.mubr.bf16.mxu0 0
      %1713 = vmatmul.mubr.bf16.gmra.mxu0 %v658
      %v1714 = vpop.f32.mrf.mxu0
      %v1715 = vadd.f32 0.0, %v1714
      %v1716 = vpop.f32.mrf.mxu0
      %v1717 = vpop.f32.mrf.mxu0
      %v1718 = vadd.f32 0.0, %v1717
      %v1719 = vpop.f32.mrf.mxu0
      %1720 = vmatprep.mubr.bf16.mxu0 0
      %1721 = vmatmul.mubr.bf16.gmra.mxu0 %v661
      %v1722 = vpop.f32.mrf.mxu0
      %v1723 = vadd.f32 0.0, %v1722
      %v1724 = vpop.f32.mrf.mxu0
      %v1725 = vpop.f32.mrf.mxu0
      %v1726 = vadd.f32 0.0, %v1725
      %v1727 = vpop.f32.mrf.mxu0
      %1728 = vmatprep.mubr.bf16.mxu0 0
      %1729 = vmatmul.mubr.bf16.gmra.mxu0 %v664
      %v1730 = vpop.f32.mrf.mxu0
      %v1731 = vadd.f32 0.0, %v1730
      %v1732 = vpop.f32.mrf.mxu0
      %v1733 = vpop.f32.mrf.mxu0
      %v1734 = vadd.f32 0.0, %v1733
      %v1735 = vpop.f32.mrf.mxu0
      %1736 = vmatprep.mubr.bf16.mxu0 0
      %1737 = vmatmul.mubr.bf16.gmra.mxu0 %v667
      %v1738 = vpop.f32.mrf.mxu0
      %v1739 = vadd.f32 0.0, %v1738
      %v1740 = vpop.f32.mrf.mxu0
      %v1741 = vpop.f32.mrf.mxu0
      %v1742 = vadd.f32 0.0, %v1741
      %v1743 = vpop.f32.mrf.mxu0
      %1744 = vmatprep.mubr.bf16.mxu0 0
      %1745 = vmatmul.mubr.bf16.gmra.mxu0 %v670
      %v1746 = vpop.f32.mrf.mxu0
      %v1747 = vadd.f32 0.0, %v1746
      %v1748 = vpop.f32.mrf.mxu0
      %v1749 = vpop.f32.mrf.mxu0
      %v1750 = vadd.f32 0.0, %v1749
      %v1751 = vpop.f32.mrf.mxu0
      %1752 = vmatprep.mubr.bf16.mxu0 0
      %1753 = vmatmul.mubr.bf16.gmra.mxu0 %v673
      %v1754 = vpop.f32.mrf.mxu0
      %v1755 = vadd.f32 0.0, %v1754
      %v1756 = vpop.f32.mrf.mxu0
      %v1757 = vpop.f32.mrf.mxu0
      %v1758 = vadd.f32 0.0, %v1757
      %v1759 = vpop.f32.mrf.mxu0
      %1760 = vmatprep.mubr.bf16.mxu0 0
      %1761 = vmatmul.mubr.bf16.gmra.mxu0 %v676
      %v1762 = vpop.f32.mrf.mxu0
      %v1763 = vadd.f32 0.0, %v1762
      %v1764 = vpop.f32.mrf.mxu0
      %v1765 = vpop.f32.mrf.mxu0
      %v1766 = vadd.f32 0.0, %v1765
      %v1767 = vpop.f32.mrf.mxu0
      %1768 = vmatprep.mubr.bf16.mxu0 0
      %1769 = vmatmul.mubr.bf16.gmra.mxu0 %v679
      %v1770 = vpop.f32.mrf.mxu0
      %v1771 = vadd.f32 0.0, %v1770
      %v1772 = vpop.f32.mrf.mxu0
      %v1773 = vpop.f32.mrf.mxu0
      %v1774 = vadd.f32 0.0, %v1773
      %v1775 = vpop.f32.mrf.mxu0
      %1776 = vmatprep.mubr.bf16.mxu0 0
      %1777 = vmatmul.mubr.bf16.gmra.mxu0 %v682
      %v1778 = vpop.f32.mrf.mxu0
      %v1779 = vadd.f32 0.0, %v1778
      %v1780 = vpop.f32.mrf.mxu0
      %v1781 = vpop.f32.mrf.mxu0
      %v1782 = vadd.f32 0.0, %v1781
      %v1783 = vpop.f32.mrf.mxu0
      %1784 = vmatprep.mubr.bf16.mxu0 0
      %1785 = vmatmul.mubr.bf16.gmra.mxu0 %v685
      %v1786 = vpop.f32.mrf.mxu0
      %v1787 = vadd.f32 0.0, %v1786
      %v1788 = vpop.f32.mrf.mxu0
      %v1789 = vpop.f32.mrf.mxu0
      %v1790 = vadd.f32 0.0, %v1789
      %v1791 = vpop.f32.mrf.mxu0
      %1792 = vmatprep.mubr.bf16.mxu0 0
      %1793 = vmatmul.mubr.bf16.gmra.mxu0 %v688
      %v1794 = vpop.f32.mrf.mxu0
      %v1795 = vadd.f32 0.0, %v1794
      %v1796 = vpop.f32.mrf.mxu0
      %v1797 = vpop.f32.mrf.mxu0
      %v1798 = vadd.f32 0.0, %v1797
      %v1799 = vpop.f32.mrf.mxu0
      %1800 = vmatprep.mubr.bf16.mxu0 0
      %1801 = vmatmul.mubr.bf16.gmra.mxu0 %v691
      %v1802 = vpop.f32.mrf.mxu0
      %v1803 = vadd.f32 0.0, %v1802
      %v1804 = vpop.f32.mrf.mxu0
      %v1805 = vpop.f32.mrf.mxu0
      %v1806 = vadd.f32 0.0, %v1805
      %v1807 = vpop.f32.mrf.mxu0
      %1808 = vmatprep.mubr.bf16.mxu0 0
      %1809 = vmatmul.mubr.bf16.gmra.mxu0 %v694
      %v1810 = vpop.f32.mrf.mxu0
      %v1811 = vadd.f32 0.0, %v1810
      %v1812 = vpop.f32.mrf.mxu0
      %v1813 = vpop.f32.mrf.mxu0
      %v1814 = vadd.f32 0.0, %v1813
      %v1815 = vpop.f32.mrf.mxu0
      %1816 = vmatprep.mubr.bf16.mxu0 0
      %1817 = vmatmul.mubr.bf16.gmra.mxu0 %v697
      %v1818 = vpop.f32.mrf.mxu0
      %v1819 = vadd.f32 0.0, %v1818
      %v1820 = vpop.f32.mrf.mxu0
      %v1821 = vpop.f32.mrf.mxu0
      %v1822 = vadd.f32 0.0, %v1821
      %v1823 = vpop.f32.mrf.mxu0
      %1824 = vmatprep.mubr.bf16.mxu0 0
      %1825 = vmatmul.mubr.bf16.gmra.mxu0 %v1667
      %v1826 = vpop.f32.mrf.mxu0
      %v1827 = vadd.f32 0.0, %v1826
      %v1828 = vpop.f32.mrf.mxu0
      %v1829 = vpop.f32.mrf.mxu0
      %v1830 = vadd.f32 0.0, %v1829
      %v1831 = vpop.f32.mrf.mxu0
      %1832 = vdwg.mxu0
      %v1833 = vadd.f32 %v1621, %v1707
      %v1834 = vadd.f32 %v1622, %v1710
      %v1835 = vadd.f32 %v1623, %v1715
      %v1836 = vadd.f32 %v1624, %v1718
      %v1837 = vadd.f32 %v1625, %v1723
      %v1838 = vadd.f32 %v1626, %v1726
      %v1839 = vadd.f32 %v1627, %v1731
      %v1840 = vadd.f32 %v1628, %v1734
      %v1841 = vadd.f32 %v1629, %v1739
      %v1842 = vadd.f32 %v1630, %v1742
      %v1843 = vadd.f32 %v1631, %v1747
      %v1844 = vadd.f32 %v1632, %v1750
      %v1845 = vadd.f32 %v1633, %v1755
      %v1846 = vadd.f32 %v1634, %v1758
      %v1847 = vadd.f32 %v1635, %v1763
      %v1848 = vadd.f32 %v1636, %v1766
      %v1849 = vadd.f32 %v1637, %v1771
      %v1850 = vadd.f32 %v1638, %v1774
      %v1851 = vadd.f32 %v1639, %v1779
      %v1852 = vadd.f32 %v1640, %v1782
      %v1853 = vadd.f32 %v1641, %v1787
      %v1854 = vadd.f32 %v1642, %v1790
      %v1855 = vadd.f32 %v1643, %v1795
      %v1856 = vadd.f32 %v1644, %v1798
      %v1857 = vadd.f32 %v1645, %v1803
      %v1858 = vadd.f32 %v1646, %v1806
      %v1859 = vadd.f32 %v1647, %v1811
      %v1860 = vadd.f32 %v1648, %v1814
      %v1861 = vadd.f32 %v1649, %v1819
      %v1862 = vadd.f32 %v1650, %v1822
      %v1863 = vadd.f32 %v1651, %v1827
      %v1864 = vadd.f32 %v1652, %v1830
      %v1865 = vrot.slane %v449, 2
      %v1866 = vrot.slane %v450, 2
      %v1867 = vsel %vm1076, %v1865, %v1866
      %v1868 = vrot.slane %v451, 2
      %v1869 = vsel %vm1076, %v1866, %v1868
      %v1872 = vpack.c.bf16 %v1869, %v1867
      %s1873 = scalar_lea.vmem %s1, 20
      %v1874 = vld [vmem:[%s1873] sm:$0xf]
      %v1876 = vsel %vm312, %v1872, 0
      %v1879 = vsel %vm699, %v1874, 0
      %1881 = vmatprep.subr.bf16.mxu0 0
      %1882 = vmatpush1.bf16.msra.mxu0 0
      %1883 = vmatprep.subr.bf16.mxu0 0
      %1884 = vmatpush1.bf16.msra.mxu0 0
      %1885 = vmatprep.subr.bf16.mxu0 0
      %1886 = vmatpush1.bf16.msra.mxu0 0
      %1887 = vmatprep.subr.bf16.mxu0 0
      %1888 = vmatpush1.bf16.msra.mxu0 0
      %1889 = vmatprep.subr.bf16.mxu0 0
      %1890 = vmatpush1.bf16.msra.mxu0 0
      %1891 = vmatprep.subr.bf16.mxu0 0
      %1892 = vmatpush1.bf16.msra.mxu0 0
      %1893 = vmatprep.subr.bf16.mxu0 0
      %1894 = vmatpush1.bf16.msra.mxu0 0
      %1895 = vmatprep.subr.bf16.mxu0 0
      %1896 = vmatpush1.bf16.msra.mxu0 %v1879
      %1897 = vmatprep.subr.bf16.mxu0 0
      %1898 = vmatpush2.bf16.msra.mxu0 0
      %1899 = vmatprep.subr.bf16.mxu0 0
      %1900 = vmatpush2.bf16.msra.mxu0 0
      %1901 = vmatprep.subr.bf16.mxu0 0
      %1902 = vmatpush2.bf16.msra.mxu0 0
      %1903 = vmatprep.subr.bf16.mxu0 0
      %1904 = vmatpush2.bf16.msra.mxu0 0
      %1905 = vmatprep.subr.bf16.mxu0 0
      %1906 = vmatpush2.bf16.msra.mxu0 0
      %1907 = vmatprep.subr.bf16.mxu0 0
      %1908 = vmatpush2.bf16.msra.mxu0 0
      %1909 = vmatprep.subr.bf16.mxu0 0
      %1910 = vmatpush2.bf16.msra.mxu0 0
      %1911 = vmatprep.subr.bf16.mxu0 0
      %1912 = vmatpush2.bf16.msra.mxu0 0
      %1913 = vmatprep.mubr.bf16.mxu0 0
      %1914 = vmatmul.mubr.bf16.gmra.mxu0 %v1211
      %v1915 = vpop.f32.mrf.mxu0
      %v1916 = vadd.f32 0.0, %v1915
      %v1917 = vpop.f32.mrf.mxu0
      %v1918 = vpop.f32.mrf.mxu0
      %v1919 = vadd.f32 0.0, %v1918
      %v1920 = vpop.f32.mrf.mxu0
      %1921 = vmatprep.mubr.bf16.mxu0 0
      %1922 = vmatmul.mubr.bf16.gmra.mxu0 %v1214
      %v1923 = vpop.f32.mrf.mxu0
      %v1924 = vadd.f32 0.0, %v1923
      %v1925 = vpop.f32.mrf.mxu0
      %v1926 = vpop.f32.mrf.mxu0
      %v1927 = vadd.f32 0.0, %v1926
      %v1928 = vpop.f32.mrf.mxu0
      %1929 = vmatprep.mubr.bf16.mxu0 0
      %1930 = vmatmul.mubr.bf16.gmra.mxu0 %v1217
      %v1931 = vpop.f32.mrf.mxu0
      %v1932 = vadd.f32 0.0, %v1931
      %v1933 = vpop.f32.mrf.mxu0
      %v1934 = vpop.f32.mrf.mxu0
      %v1935 = vadd.f32 0.0, %v1934
      %v1936 = vpop.f32.mrf.mxu0
      %1937 = vmatprep.mubr.bf16.mxu0 0
      %1938 = vmatmul.mubr.bf16.gmra.mxu0 %v1220
      %v1939 = vpop.f32.mrf.mxu0
      %v1940 = vadd.f32 0.0, %v1939
      %v1941 = vpop.f32.mrf.mxu0
      %v1942 = vpop.f32.mrf.mxu0
      %v1943 = vadd.f32 0.0, %v1942
      %v1944 = vpop.f32.mrf.mxu0
      %1945 = vmatprep.mubr.bf16.mxu0 0
      %1946 = vmatmul.mubr.bf16.gmra.mxu0 %v1223
      %v1947 = vpop.f32.mrf.mxu0
      %v1948 = vadd.f32 0.0, %v1947
      %v1949 = vpop.f32.mrf.mxu0
      %v1950 = vpop.f32.mrf.mxu0
      %v1951 = vadd.f32 0.0, %v1950
      %v1952 = vpop.f32.mrf.mxu0
      %1953 = vmatprep.mubr.bf16.mxu0 0
      %1954 = vmatmul.mubr.bf16.gmra.mxu0 %v1226
      %v1955 = vpop.f32.mrf.mxu0
      %v1956 = vadd.f32 0.0, %v1955
      %v1957 = vpop.f32.mrf.mxu0
      %v1958 = vpop.f32.mrf.mxu0
      %v1959 = vadd.f32 0.0, %v1958
      %v1960 = vpop.f32.mrf.mxu0
      %1961 = vmatprep.mubr.bf16.mxu0 0
      %1962 = vmatmul.mubr.bf16.gmra.mxu0 %v1229
      %v1963 = vpop.f32.mrf.mxu0
      %v1964 = vadd.f32 0.0, %v1963
      %v1965 = vpop.f32.mrf.mxu0
      %v1966 = vpop.f32.mrf.mxu0
      %v1967 = vadd.f32 0.0, %v1966
      %v1968 = vpop.f32.mrf.mxu0
      %1969 = vmatprep.mubr.bf16.mxu0 0
      %1970 = vmatmul.mubr.bf16.gmra.mxu0 %v1232
      %v1971 = vpop.f32.mrf.mxu0
      %v1972 = vadd.f32 0.0, %v1971
      %v1973 = vpop.f32.mrf.mxu0
      %v1974 = vpop.f32.mrf.mxu0
      %v1975 = vadd.f32 0.0, %v1974
      %v1976 = vpop.f32.mrf.mxu0
      %1977 = vmatprep.mubr.bf16.mxu0 0
      %1978 = vmatmul.mubr.bf16.gmra.mxu0 %v1235
      %v1979 = vpop.f32.mrf.mxu0
      %v1980 = vadd.f32 0.0, %v1979
      %v1981 = vpop.f32.mrf.mxu0
      %v1982 = vpop.f32.mrf.mxu0
      %v1983 = vadd.f32 0.0, %v1982
      %v1984 = vpop.f32.mrf.mxu0
      %1985 = vmatprep.mubr.bf16.mxu0 0
      %1986 = vmatmul.mubr.bf16.gmra.mxu0 %v1238
      %v1987 = vpop.f32.mrf.mxu0
      %v1988 = vadd.f32 0.0, %v1987
      %v1989 = vpop.f32.mrf.mxu0
      %v1990 = vpop.f32.mrf.mxu0
      %v1991 = vadd.f32 0.0, %v1990
      %v1992 = vpop.f32.mrf.mxu0
      %1993 = vmatprep.mubr.bf16.mxu0 0
      %1994 = vmatmul.mubr.bf16.gmra.mxu0 %v1241
      %v1995 = vpop.f32.mrf.mxu0
      %v1996 = vadd.f32 0.0, %v1995
      %v1997 = vpop.f32.mrf.mxu0
      %v1998 = vpop.f32.mrf.mxu0
      %v1999 = vadd.f32 0.0, %v1998
      %v2000 = vpop.f32.mrf.mxu0
      %2001 = vmatprep.mubr.bf16.mxu0 0
      %2002 = vmatmul.mubr.bf16.gmra.mxu0 %v1244
      %v2003 = vpop.f32.mrf.mxu0
      %v2004 = vadd.f32 0.0, %v2003
      %v2005 = vpop.f32.mrf.mxu0
      %v2006 = vpop.f32.mrf.mxu0
      %v2007 = vadd.f32 0.0, %v2006
      %v2008 = vpop.f32.mrf.mxu0
      %2009 = vmatprep.mubr.bf16.mxu0 0
      %2010 = vmatmul.mubr.bf16.gmra.mxu0 %v1247
      %v2011 = vpop.f32.mrf.mxu0
      %v2012 = vadd.f32 0.0, %v2011
      %v2013 = vpop.f32.mrf.mxu0
      %v2014 = vpop.f32.mrf.mxu0
      %v2015 = vadd.f32 0.0, %v2014
      %v2016 = vpop.f32.mrf.mxu0
      %2017 = vmatprep.mubr.bf16.mxu0 0
      %2018 = vmatmul.mubr.bf16.gmra.mxu0 %v1250
      %v2019 = vpop.f32.mrf.mxu0
      %v2020 = vadd.f32 0.0, %v2019
      %v2021 = vpop.f32.mrf.mxu0
      %v2022 = vpop.f32.mrf.mxu0
      %v2023 = vadd.f32 0.0, %v2022
      %v2024 = vpop.f32.mrf.mxu0
      %2025 = vmatprep.mubr.bf16.mxu0 0
      %2026 = vmatmul.mubr.bf16.gmra.mxu0 %v1253
      %v2027 = vpop.f32.mrf.mxu0
      %v2028 = vadd.f32 0.0, %v2027
      %v2029 = vpop.f32.mrf.mxu0
      %v2030 = vpop.f32.mrf.mxu0
      %v2031 = vadd.f32 0.0, %v2030
      %v2032 = vpop.f32.mrf.mxu0
      %2033 = vmatprep.mubr.bf16.mxu0 0
      %2034 = vmatmul.mubr.bf16.gmra.mxu0 %v1876
      %v2035 = vpop.f32.mrf.mxu0
      %v2036 = vadd.f32 0.0, %v2035
      %v2037 = vpop.f32.mrf.mxu0
      %v2038 = vpop.f32.mrf.mxu0
      %v2039 = vadd.f32 0.0, %v2038
      %v2040 = vpop.f32.mrf.mxu0
      %2041 = vdwg.mxu0
      %v2042 = vadd.f32 %v1833, %v1916
      %v2043 = vadd.f32 %v1834, %v1919
      %v2044 = vadd.f32 %v1835, %v1924
      %v2045 = vadd.f32 %v1836, %v1927
      %v2046 = vadd.f32 %v1837, %v1932
      %v2047 = vadd.f32 %v1838, %v1935
      %v2048 = vadd.f32 %v1839, %v1940
      %v2049 = vadd.f32 %v1840, %v1943
      %v2050 = vadd.f32 %v1841, %v1948
      %v2051 = vadd.f32 %v1842, %v1951
      %v2052 = vadd.f32 %v1843, %v1956
      %v2053 = vadd.f32 %v1844, %v1959
      %v2054 = vadd.f32 %v1845, %v1964
      %v2055 = vadd.f32 %v1846, %v1967
      %v2056 = vadd.f32 %v1847, %v1972
      %v2057 = vadd.f32 %v1848, %v1975
      %v2058 = vadd.f32 %v1849, %v1980
      %v2059 = vadd.f32 %v1850, %v1983
      %v2060 = vadd.f32 %v1851, %v1988
      %v2061 = vadd.f32 %v1852, %v1991
      %v2062 = vadd.f32 %v1853, %v1996
      %v2063 = vadd.f32 %v1854, %v1999
      %v2064 = vadd.f32 %v1855, %v2004
      %v2065 = vadd.f32 %v1856, %v2007
      %v2066 = vadd.f32 %v1857, %v2012
      %v2067 = vadd.f32 %v1858, %v2015
      %v2068 = vadd.f32 %v1859, %v2020
      %v2069 = vadd.f32 %v1860, %v2023
      %v2070 = vadd.f32 %v1861, %v2028
      %v2071 = vadd.f32 %v1862, %v2031
      %v2072 = vadd.f32 %v1863, %v2036
      %v2073 = vadd.f32 %v1864, %v2039
      %v2074 = vpack.c.bf16 %v453, %v452
      %s2075 = scalar_lea.vmem %s1, 24
      %v2076 = vld [vmem:[%s2075] sm:$0xf]
      %v2078 = vsel %vm312, %v2074, 0
      %v2081 = vsel %vm699, %v2076, 0
      %2083 = vmatprep.subr.bf16.mxu0 0
      %2084 = vmatpush1.bf16.msra.mxu0 0
      %2085 = vmatprep.subr.bf16.mxu0 0
      %2086 = vmatpush1.bf16.msra.mxu0 0
      %2087 = vmatprep.subr.bf16.mxu0 0
      %2088 = vmatpush1.bf16.msra.mxu0 0
      %2089 = vmatprep.subr.bf16.mxu0 0
      %2090 = vmatpush1.bf16.msra.mxu0 0
      %2091 = vmatprep.subr.bf16.mxu0 0
      %2092 = vmatpush1.bf16.msra.mxu0 0
      %2093 = vmatprep.subr.bf16.mxu0 0
      %2094 = vmatpush1.bf16.msra.mxu0 0
      %2095 = vmatprep.subr.bf16.mxu0 0
      %2096 = vmatpush1.bf16.msra.mxu0 0
      %2097 = vmatprep.subr.bf16.mxu0 0
      %2098 = vmatpush1.bf16.msra.mxu0 %v2081
      %2099 = vmatprep.subr.bf16.mxu0 0
      %2100 = vmatpush2.bf16.msra.mxu0 0
      %2101 = vmatprep.subr.bf16.mxu0 0
      %2102 = vmatpush2.bf16.msra.mxu0 0
      %2103 = vmatprep.subr.bf16.mxu0 0
      %2104 = vmatpush2.bf16.msra.mxu0 0
      %2105 = vmatprep.subr.bf16.mxu0 0
      %2106 = vmatpush2.bf16.msra.mxu0 0
      %2107 = vmatprep.subr.bf16.mxu0 0
      %2108 = vmatpush2.bf16.msra.mxu0 0
      %2109 = vmatprep.subr.bf16.mxu0 0
      %2110 = vmatpush2.bf16.msra.mxu0 0
      %2111 = vmatprep.subr.bf16.mxu0 0
      %2112 = vmatpush2.bf16.msra.mxu0 0
      %2113 = vmatprep.subr.bf16.mxu0 0
      %2114 = vmatpush2.bf16.msra.mxu0 0
      %2115 = vmatprep.mubr.bf16.mxu0 0
      %2116 = vmatmul.mubr.bf16.gmra.mxu0 %v871
      %v2117 = vpop.f32.mrf.mxu0
      %v2118 = vadd.f32 0.0, %v2117
      %v2119 = vpop.f32.mrf.mxu0
      %v2120 = vpop.f32.mrf.mxu0
      %v2121 = vadd.f32 0.0, %v2120
      %v2122 = vpop.f32.mrf.mxu0
      %2123 = vmatprep.mubr.bf16.mxu0 0
      %2124 = vmatmul.mubr.bf16.gmra.mxu0 %v874
      %v2125 = vpop.f32.mrf.mxu0
      %v2126 = vadd.f32 0.0, %v2125
      %v2127 = vpop.f32.mrf.mxu0
      %v2128 = vpop.f32.mrf.mxu0
      %v2129 = vadd.f32 0.0, %v2128
      %v2130 = vpop.f32.mrf.mxu0
      %2131 = vmatprep.mubr.bf16.mxu0 0
      %2132 = vmatmul.mubr.bf16.gmra.mxu0 %v877
      %v2133 = vpop.f32.mrf.mxu0
      %v2134 = vadd.f32 0.0, %v2133
      %v2135 = vpop.f32.mrf.mxu0
      %v2136 = vpop.f32.mrf.mxu0
      %v2137 = vadd.f32 0.0, %v2136
      %v2138 = vpop.f32.mrf.mxu0
      %2139 = vmatprep.mubr.bf16.mxu0 0
      %2140 = vmatmul.mubr.bf16.gmra.mxu0 %v880
      %v2141 = vpop.f32.mrf.mxu0
      %v2142 = vadd.f32 0.0, %v2141
      %v2143 = vpop.f32.mrf.mxu0
      %v2144 = vpop.f32.mrf.mxu0
      %v2145 = vadd.f32 0.0, %v2144
      %v2146 = vpop.f32.mrf.mxu0
      %2147 = vmatprep.mubr.bf16.mxu0 0
      %2148 = vmatmul.mubr.bf16.gmra.mxu0 %v883
      %v2149 = vpop.f32.mrf.mxu0
      %v2150 = vadd.f32 0.0, %v2149
      %v2151 = vpop.f32.mrf.mxu0
      %v2152 = vpop.f32.mrf.mxu0
      %v2153 = vadd.f32 0.0, %v2152
      %v2154 = vpop.f32.mrf.mxu0
      %2155 = vmatprep.mubr.bf16.mxu0 0
      %2156 = vmatmul.mubr.bf16.gmra.mxu0 %v886
      %v2157 = vpop.f32.mrf.mxu0
      %v2158 = vadd.f32 0.0, %v2157
      %v2159 = vpop.f32.mrf.mxu0
      %v2160 = vpop.f32.mrf.mxu0
      %v2161 = vadd.f32 0.0, %v2160
      %v2162 = vpop.f32.mrf.mxu0
      %2163 = vmatprep.mubr.bf16.mxu0 0
      %2164 = vmatmul.mubr.bf16.gmra.mxu0 %v889
      %v2165 = vpop.f32.mrf.mxu0
      %v2166 = vadd.f32 0.0, %v2165
      %v2167 = vpop.f32.mrf.mxu0
      %v2168 = vpop.f32.mrf.mxu0
      %v2169 = vadd.f32 0.0, %v2168
      %v2170 = vpop.f32.mrf.mxu0
      %2171 = vmatprep.mubr.bf16.mxu0 0
      %2172 = vmatmul.mubr.bf16.gmra.mxu0 %v892
      %v2173 = vpop.f32.mrf.mxu0
      %v2174 = vadd.f32 0.0, %v2173
      %v2175 = vpop.f32.mrf.mxu0
      %v2176 = vpop.f32.mrf.mxu0
      %v2177 = vadd.f32 0.0, %v2176
      %v2178 = vpop.f32.mrf.mxu0
      %2179 = vmatprep.mubr.bf16.mxu0 0
      %2180 = vmatmul.mubr.bf16.gmra.mxu0 %v895
      %v2181 = vpop.f32.mrf.mxu0
      %v2182 = vadd.f32 0.0, %v2181
      %v2183 = vpop.f32.mrf.mxu0
      %v2184 = vpop.f32.mrf.mxu0
      %v2185 = vadd.f32 0.0, %v2184
      %v2186 = vpop.f32.mrf.mxu0
      %2187 = vmatprep.mubr.bf16.mxu0 0
      %2188 = vmatmul.mubr.bf16.gmra.mxu0 %v898
      %v2189 = vpop.f32.mrf.mxu0
      %v2190 = vadd.f32 0.0, %v2189
      %v2191 = vpop.f32.mrf.mxu0
      %v2192 = vpop.f32.mrf.mxu0
      %v2193 = vadd.f32 0.0, %v2192
      %v2194 = vpop.f32.mrf.mxu0
      %2195 = vmatprep.mubr.bf16.mxu0 0
      %2196 = vmatmul.mubr.bf16.gmra.mxu0 %v901
      %v2197 = vpop.f32.mrf.mxu0
      %v2198 = vadd.f32 0.0, %v2197
      %v2199 = vpop.f32.mrf.mxu0
      %v2200 = vpop.f32.mrf.mxu0
      %v2201 = vadd.f32 0.0, %v2200
      %v2202 = vpop.f32.mrf.mxu0
      %2203 = vmatprep.mubr.bf16.mxu0 0
      %2204 = vmatmul.mubr.bf16.gmra.mxu0 %v904
      %v2205 = vpop.f32.mrf.mxu0
      %v2206 = vadd.f32 0.0, %v2205
      %v2207 = vpop.f32.mrf.mxu0
      %v2208 = vpop.f32.mrf.mxu0
      %v2209 = vadd.f32 0.0, %v2208
      %v2210 = vpop.f32.mrf.mxu0
      %2211 = vmatprep.mubr.bf16.mxu0 0
      %2212 = vmatmul.mubr.bf16.gmra.mxu0 %v907
      %v2213 = vpop.f32.mrf.mxu0
      %v2214 = vadd.f32 0.0, %v2213
      %v2215 = vpop.f32.mrf.mxu0
      %v2216 = vpop.f32.mrf.mxu0
      %v2217 = vadd.f32 0.0, %v2216
      %v2218 = vpop.f32.mrf.mxu0
      %2219 = vmatprep.mubr.bf16.mxu0 0
      %2220 = vmatmul.mubr.bf16.gmra.mxu0 %v910
      %v2221 = vpop.f32.mrf.mxu0
      %v2222 = vadd.f32 0.0, %v2221
      %v2223 = vpop.f32.mrf.mxu0
      %v2224 = vpop.f32.mrf.mxu0
      %v2225 = vadd.f32 0.0, %v2224
      %v2226 = vpop.f32.mrf.mxu0
      %2227 = vmatprep.mubr.bf16.mxu0 0
      %2228 = vmatmul.mubr.bf16.gmra.mxu0 %v1455
      %v2229 = vpop.f32.mrf.mxu0
      %v2230 = vadd.f32 0.0, %v2229
      %v2231 = vpop.f32.mrf.mxu0
      %v2232 = vpop.f32.mrf.mxu0
      %v2233 = vadd.f32 0.0, %v2232
      %v2234 = vpop.f32.mrf.mxu0
      %2235 = vmatprep.mubr.bf16.mxu0 0
      %2236 = vmatmul.mubr.bf16.gmra.mxu0 %v2078
      %v2237 = vpop.f32.mrf.mxu0
      %v2238 = vadd.f32 0.0, %v2237
      %v2239 = vpop.f32.mrf.mxu0
      %v2240 = vpop.f32.mrf.mxu0
      %v2241 = vadd.f32 0.0, %v2240
      %v2242 = vpop.f32.mrf.mxu0
      %2243 = vdwg.mxu0
      %v2244 = vadd.f32 %v2042, %v2118
      %v2245 = vadd.f32 %v2043, %v2121
      %v2246 = vadd.f32 %v2044, %v2126
      %v2247 = vadd.f32 %v2045, %v2129
      %v2248 = vadd.f32 %v2046, %v2134
      %v2249 = vadd.f32 %v2047, %v2137
      %v2250 = vadd.f32 %v2048, %v2142
      %v2251 = vadd.f32 %v2049, %v2145
      %v2252 = vadd.f32 %v2050, %v2150
      %v2253 = vadd.f32 %v2051, %v2153
      %v2254 = vadd.f32 %v2052, %v2158
      %v2255 = vadd.f32 %v2053, %v2161
      %v2256 = vadd.f32 %v2054, %v2166
      %v2257 = vadd.f32 %v2055, %v2169
      %v2258 = vadd.f32 %v2056, %v2174
      %v2259 = vadd.f32 %v2057, %v2177
      %v2260 = vadd.f32 %v2058, %v2182
      %v2261 = vadd.f32 %v2059, %v2185
      %v2262 = vadd.f32 %v2060, %v2190
      %v2263 = vadd.f32 %v2061, %v2193
      %v2264 = vadd.f32 %v2062, %v2198
      %v2265 = vadd.f32 %v2063, %v2201
      %v2266 = vadd.f32 %v2064, %v2206
      %v2267 = vadd.f32 %v2065, %v2209
      %v2268 = vadd.f32 %v2066, %v2214
      %v2269 = vadd.f32 %v2067, %v2217
      %v2270 = vadd.f32 %v2068, %v2222
      %v2271 = vadd.f32 %v2069, %v2225
      %v2272 = vadd.f32 %v2070, %v2230
      %v2273 = vadd.f32 %v2071, %v2233
      %v2274 = vadd.f32 %v2072, %v2238
      %v2275 = vadd.f32 %v2073, %v2241
      %v2279 = vrot.slane %v452, 1
      %v2280 = vrot.slane %v453, 1
      %v2281 = vsel %vm520, %v2279, %v2280
      %v2282 = vrot.slane %v454, 1
      %v2283 = vsel %vm520, %v2280, %v2282
      %v2286 = vpack.c.bf16 %v2283, %v2281
      %s2287 = scalar_lea.vmem %s1, 28
      %v2288 = vld [vmem:[%s2287] sm:$0xf]
      %v2290 = vsel %vm312, %v2286, 0
      %v2293 = vsel %vm699, %v2288, 0
      %2295 = vmatprep.subr.bf16.mxu0 0
      %2296 = vmatpush1.bf16.msra.mxu0 0
      %2297 = vmatprep.subr.bf16.mxu0 0
      %2298 = vmatpush1.bf16.msra.mxu0 0
      %2299 = vmatprep.subr.bf16.mxu0 0
      %2300 = vmatpush1.bf16.msra.mxu0 0
      %2301 = vmatprep.subr.bf16.mxu0 0
      %2302 = vmatpush1.bf16.msra.mxu0 0
      %2303 = vmatprep.subr.bf16.mxu0 0
      %2304 = vmatpush1.bf16.msra.mxu0 0
      %2305 = vmatprep.subr.bf16.mxu0 0
      %2306 = vmatpush1.bf16.msra.mxu0 0
      %2307 = vmatprep.subr.bf16.mxu0 0
      %2308 = vmatpush1.bf16.msra.mxu0 0
      %2309 = vmatprep.subr.bf16.mxu0 0
      %2310 = vmatpush1.bf16.msra.mxu0 %v2293
      %2311 = vmatprep.subr.bf16.mxu0 0
      %2312 = vmatpush2.bf16.msra.mxu0 0
      %2313 = vmatprep.subr.bf16.mxu0 0
      %2314 = vmatpush2.bf16.msra.mxu0 0
      %2315 = vmatprep.subr.bf16.mxu0 0
      %2316 = vmatpush2.bf16.msra.mxu0 0
      %2317 = vmatprep.subr.bf16.mxu0 0
      %2318 = vmatpush2.bf16.msra.mxu0 0
      %2319 = vmatprep.subr.bf16.mxu0 0
      %2320 = vmatpush2.bf16.msra.mxu0 0
      %2321 = vmatprep.subr.bf16.mxu0 0
      %2322 = vmatpush2.bf16.msra.mxu0 0
      %2323 = vmatprep.subr.bf16.mxu0 0
      %2324 = vmatpush2.bf16.msra.mxu0 0
      %2325 = vmatprep.subr.bf16.mxu0 0
      %2326 = vmatpush2.bf16.msra.mxu0 0
      %2327 = vmatprep.mubr.bf16.mxu0 0
      %2328 = vmatmul.mubr.bf16.gmra.mxu0 %v658
      %v2329 = vpop.f32.mrf.mxu0
      %v2330 = vadd.f32 0.0, %v2329
      %v2331 = vpop.f32.mrf.mxu0
      %v2332 = vpop.f32.mrf.mxu0
      %v2333 = vadd.f32 0.0, %v2332
      %v2334 = vpop.f32.mrf.mxu0
      %2335 = vmatprep.mubr.bf16.mxu0 0
      %2336 = vmatmul.mubr.bf16.gmra.mxu0 %v661
      %v2337 = vpop.f32.mrf.mxu0
      %v2338 = vadd.f32 0.0, %v2337
      %v2339 = vpop.f32.mrf.mxu0
      %v2340 = vpop.f32.mrf.mxu0
      %v2341 = vadd.f32 0.0, %v2340
      %v2342 = vpop.f32.mrf.mxu0
      %2343 = vmatprep.mubr.bf16.mxu0 0
      %2344 = vmatmul.mubr.bf16.gmra.mxu0 %v664
      %v2345 = vpop.f32.mrf.mxu0
      %v2346 = vadd.f32 0.0, %v2345
      %v2347 = vpop.f32.mrf.mxu0
      %v2348 = vpop.f32.mrf.mxu0
      %v2349 = vadd.f32 0.0, %v2348
      %v2350 = vpop.f32.mrf.mxu0
      %2351 = vmatprep.mubr.bf16.mxu0 0
      %2352 = vmatmul.mubr.bf16.gmra.mxu0 %v667
      %v2353 = vpop.f32.mrf.mxu0
      %v2354 = vadd.f32 0.0, %v2353
      %v2355 = vpop.f32.mrf.mxu0
      %v2356 = vpop.f32.mrf.mxu0
      %v2357 = vadd.f32 0.0, %v2356
      %v2358 = vpop.f32.mrf.mxu0
      %2359 = vmatprep.mubr.bf16.mxu0 0
      %2360 = vmatmul.mubr.bf16.gmra.mxu0 %v670
      %v2361 = vpop.f32.mrf.mxu0
      %v2362 = vadd.f32 0.0, %v2361
      %v2363 = vpop.f32.mrf.mxu0
      %v2364 = vpop.f32.mrf.mxu0
      %v2365 = vadd.f32 0.0, %v2364
      %v2366 = vpop.f32.mrf.mxu0
      %2367 = vmatprep.mubr.bf16.mxu0 0
      %2368 = vmatmul.mubr.bf16.gmra.mxu0 %v673
      %v2369 = vpop.f32.mrf.mxu0
      %v2370 = vadd.f32 0.0, %v2369
      %v2371 = vpop.f32.mrf.mxu0
      %v2372 = vpop.f32.mrf.mxu0
      %v2373 = vadd.f32 0.0, %v2372
      %v2374 = vpop.f32.mrf.mxu0
      %2375 = vmatprep.mubr.bf16.mxu0 0
      %2376 = vmatmul.mubr.bf16.gmra.mxu0 %v676
      %v2377 = vpop.f32.mrf.mxu0
      %v2378 = vadd.f32 0.0, %v2377
      %v2379 = vpop.f32.mrf.mxu0
      %v2380 = vpop.f32.mrf.mxu0
      %v2381 = vadd.f32 0.0, %v2380
      %v2382 = vpop.f32.mrf.mxu0
      %2383 = vmatprep.mubr.bf16.mxu0 0
      %2384 = vmatmul.mubr.bf16.gmra.mxu0 %v679
      %v2385 = vpop.f32.mrf.mxu0
      %v2386 = vadd.f32 0.0, %v2385
      %v2387 = vpop.f32.mrf.mxu0
      %v2388 = vpop.f32.mrf.mxu0
      %v2389 = vadd.f32 0.0, %v2388
      %v2390 = vpop.f32.mrf.mxu0
      %2391 = vmatprep.mubr.bf16.mxu0 0
      %2392 = vmatmul.mubr.bf16.gmra.mxu0 %v682
      %v2393 = vpop.f32.mrf.mxu0
      %v2394 = vadd.f32 0.0, %v2393
      %v2395 = vpop.f32.mrf.mxu0
      %v2396 = vpop.f32.mrf.mxu0
      %v2397 = vadd.f32 0.0, %v2396
      %v2398 = vpop.f32.mrf.mxu0
      %2399 = vmatprep.mubr.bf16.mxu0 0
      %2400 = vmatmul.mubr.bf16.gmra.mxu0 %v685
      %v2401 = vpop.f32.mrf.mxu0
      %v2402 = vadd.f32 0.0, %v2401
      %v2403 = vpop.f32.mrf.mxu0
      %v2404 = vpop.f32.mrf.mxu0
      %v2405 = vadd.f32 0.0, %v2404
      %v2406 = vpop.f32.mrf.mxu0
      %2407 = vmatprep.mubr.bf16.mxu0 0
      %2408 = vmatmul.mubr.bf16.gmra.mxu0 %v688
      %v2409 = vpop.f32.mrf.mxu0
      %v2410 = vadd.f32 0.0, %v2409
      %v2411 = vpop.f32.mrf.mxu0
      %v2412 = vpop.f32.mrf.mxu0
      %v2413 = vadd.f32 0.0, %v2412
      %v2414 = vpop.f32.mrf.mxu0
      %2415 = vmatprep.mubr.bf16.mxu0 0
      %2416 = vmatmul.mubr.bf16.gmra.mxu0 %v691
      %v2417 = vpop.f32.mrf.mxu0
      %v2418 = vadd.f32 0.0, %v2417
      %v2419 = vpop.f32.mrf.mxu0
      %v2420 = vpop.f32.mrf.mxu0
      %v2421 = vadd.f32 0.0, %v2420
      %v2422 = vpop.f32.mrf.mxu0
      %2423 = vmatprep.mubr.bf16.mxu0 0
      %2424 = vmatmul.mubr.bf16.gmra.mxu0 %v694
      %v2425 = vpop.f32.mrf.mxu0
      %v2426 = vadd.f32 0.0, %v2425
      %v2427 = vpop.f32.mrf.mxu0
      %v2428 = vpop.f32.mrf.mxu0
      %v2429 = vadd.f32 0.0, %v2428
      %v2430 = vpop.f32.mrf.mxu0
      %2431 = vmatprep.mubr.bf16.mxu0 0
      %2432 = vmatmul.mubr.bf16.gmra.mxu0 %v697
      %v2433 = vpop.f32.mrf.mxu0
      %v2434 = vadd.f32 0.0, %v2433
      %v2435 = vpop.f32.mrf.mxu0
      %v2436 = vpop.f32.mrf.mxu0
      %v2437 = vadd.f32 0.0, %v2436
      %v2438 = vpop.f32.mrf.mxu0
      %2439 = vmatprep.mubr.bf16.mxu0 0
      %2440 = vmatmul.mubr.bf16.gmra.mxu0 %v1667
      %v2441 = vpop.f32.mrf.mxu0
      %v2442 = vadd.f32 0.0, %v2441
      %v2443 = vpop.f32.mrf.mxu0
      %v2444 = vpop.f32.mrf.mxu0
      %v2445 = vadd.f32 0.0, %v2444
      %v2446 = vpop.f32.mrf.mxu0
      %2447 = vmatprep.mubr.bf16.mxu0 0
      %2448 = vmatmul.mubr.bf16.gmra.mxu0 %v2290
      %v2449 = vpop.f32.mrf.mxu0
      %v2450 = vadd.f32 0.0, %v2449
      %v2451 = vpop.f32.mrf.mxu0
      %v2452 = vpop.f32.mrf.mxu0
      %v2453 = vadd.f32 0.0, %v2452
      %v2454 = vpop.f32.mrf.mxu0
      %2455 = vdwg.mxu0
      %v2456 = vadd.f32 %v2244, %v2330
      %v2457 = vadd.f32 %v2245, %v2333
      %v2458 = vadd.f32 %v2246, %v2338
      %v2459 = vadd.f32 %v2247, %v2341
      %v2460 = vadd.f32 %v2248, %v2346
      %v2461 = vadd.f32 %v2249, %v2349
      %v2462 = vadd.f32 %v2250, %v2354
      %v2463 = vadd.f32 %v2251, %v2357
      %v2464 = vadd.f32 %v2252, %v2362
      %v2465 = vadd.f32 %v2253, %v2365
      %v2466 = vadd.f32 %v2254, %v2370
      %v2467 = vadd.f32 %v2255, %v2373
      %v2468 = vadd.f32 %v2256, %v2378
      %v2469 = vadd.f32 %v2257, %v2381
      %v2470 = vadd.f32 %v2258, %v2386
      %v2471 = vadd.f32 %v2259, %v2389
      %v2472 = vadd.f32 %v2260, %v2394
      %v2473 = vadd.f32 %v2261, %v2397
      %v2474 = vadd.f32 %v2262, %v2402
      %v2475 = vadd.f32 %v2263, %v2405
      %v2476 = vadd.f32 %v2264, %v2410
      %v2477 = vadd.f32 %v2265, %v2413
      %v2478 = vadd.f32 %v2266, %v2418
      %v2479 = vadd.f32 %v2267, %v2421
      %v2480 = vadd.f32 %v2268, %v2426
      %v2481 = vadd.f32 %v2269, %v2429
      %v2482 = vadd.f32 %v2270, %v2434
      %v2483 = vadd.f32 %v2271, %v2437
      %v2484 = vadd.f32 %v2272, %v2442
      %v2485 = vadd.f32 %v2273, %v2445
      %v2486 = vadd.f32 %v2274, %v2450
      %v2487 = vadd.f32 %v2275, %v2453
      %v2488 = vrot.slane %v452, 2
      %v2489 = vrot.slane %v453, 2
      %v2490 = vsel %vm1076, %v2488, %v2489
      %v2491 = vrot.slane %v454, 2
      %v2492 = vsel %vm1076, %v2489, %v2491
      %v2495 = vpack.c.bf16 %v2492, %v2490
      %s2496 = scalar_lea.vmem %s1, 32
      %v2497 = vld [vmem:[%s2496] sm:$0xf]
      %v2499 = vsel %vm312, %v2495, 0
      %v2502 = vsel %vm699, %v2497, 0
      %2504 = vmatprep.subr.bf16.mxu0 0
      %2505 = vmatpush1.bf16.msra.mxu0 0
      %2506 = vmatprep.subr.bf16.mxu0 0
      %2507 = vmatpush1.bf16.msra.mxu0 0
      %2508 = vmatprep.subr.bf16.mxu0 0
      %2509 = vmatpush1.bf16.msra.mxu0 0
      %2510 = vmatprep.subr.bf16.mxu0 0
      %2511 = vmatpush1.bf16.msra.mxu0 0
      %2512 = vmatprep.subr.bf16.mxu0 0
      %2513 = vmatpush1.bf16.msra.mxu0 0
      %2514 = vmatprep.subr.bf16.mxu0 0
      %2515 = vmatpush1.bf16.msra.mxu0 0
      %2516 = vmatprep.subr.bf16.mxu0 0
      %2517 = vmatpush1.bf16.msra.mxu0 0
      %2518 = vmatprep.subr.bf16.mxu0 0
      %2519 = vmatpush1.bf16.msra.mxu0 %v2502
      %2520 = vmatprep.subr.bf16.mxu0 0
      %2521 = vmatpush2.bf16.msra.mxu0 0
      %2522 = vmatprep.subr.bf16.mxu0 0
      %2523 = vmatpush2.bf16.msra.mxu0 0
      %2524 = vmatprep.subr.bf16.mxu0 0
      %2525 = vmatpush2.bf16.msra.mxu0 0
      %2526 = vmatprep.subr.bf16.mxu0 0
      %2527 = vmatpush2.bf16.msra.mxu0 0
      %2528 = vmatprep.subr.bf16.mxu0 0
      %2529 = vmatpush2.bf16.msra.mxu0 0
      %2530 = vmatprep.subr.bf16.mxu0 0
      %2531 = vmatpush2.bf16.msra.mxu0 0
      %2532 = vmatprep.subr.bf16.mxu0 0
      %2533 = vmatpush2.bf16.msra.mxu0 0
      %2534 = vmatprep.subr.bf16.mxu0 0
      %2535 = vmatpush2.bf16.msra.mxu0 0
      %2536 = vmatprep.mubr.bf16.mxu0 0
      %2537 = vmatmul.mubr.bf16.gmra.mxu0 %v1214
      %v2538 = vpop.f32.mrf.mxu0
      %v2539 = vadd.f32 0.0, %v2538
      %v2540 = vpop.f32.mrf.mxu0
      %v2541 = vpop.f32.mrf.mxu0
      %v2542 = vadd.f32 0.0, %v2541
      %v2543 = vpop.f32.mrf.mxu0
      %2544 = vmatprep.mubr.bf16.mxu0 0
      %2545 = vmatmul.mubr.bf16.gmra.mxu0 %v1217
      %v2546 = vpop.f32.mrf.mxu0
      %v2547 = vadd.f32 0.0, %v2546
      %v2548 = vpop.f32.mrf.mxu0
      %v2549 = vpop.f32.mrf.mxu0
      %v2550 = vadd.f32 0.0, %v2549
      %v2551 = vpop.f32.mrf.mxu0
      %2552 = vmatprep.mubr.bf16.mxu0 0
      %2553 = vmatmul.mubr.bf16.gmra.mxu0 %v1220
      %v2554 = vpop.f32.mrf.mxu0
      %v2555 = vadd.f32 0.0, %v2554
      %v2556 = vpop.f32.mrf.mxu0
      %v2557 = vpop.f32.mrf.mxu0
      %v2558 = vadd.f32 0.0, %v2557
      %v2559 = vpop.f32.mrf.mxu0
      %2560 = vmatprep.mubr.bf16.mxu0 0
      %2561 = vmatmul.mubr.bf16.gmra.mxu0 %v1223
      %v2562 = vpop.f32.mrf.mxu0
      %v2563 = vadd.f32 0.0, %v2562
      %v2564 = vpop.f32.mrf.mxu0
      %v2565 = vpop.f32.mrf.mxu0
      %v2566 = vadd.f32 0.0, %v2565
      %v2567 = vpop.f32.mrf.mxu0
      %2568 = vmatprep.mubr.bf16.mxu0 0
      %2569 = vmatmul.mubr.bf16.gmra.mxu0 %v1226
      %v2570 = vpop.f32.mrf.mxu0
      %v2571 = vadd.f32 0.0, %v2570
      %v2572 = vpop.f32.mrf.mxu0
      %v2573 = vpop.f32.mrf.mxu0
      %v2574 = vadd.f32 0.0, %v2573
      %v2575 = vpop.f32.mrf.mxu0
      %2576 = vmatprep.mubr.bf16.mxu0 0
      %2577 = vmatmul.mubr.bf16.gmra.mxu0 %v1229
      %v2578 = vpop.f32.mrf.mxu0
      %v2579 = vadd.f32 0.0, %v2578
      %v2580 = vpop.f32.mrf.mxu0
      %v2581 = vpop.f32.mrf.mxu0
      %v2582 = vadd.f32 0.0, %v2581
      %v2583 = vpop.f32.mrf.mxu0
      %2584 = vmatprep.mubr.bf16.mxu0 0
      %2585 = vmatmul.mubr.bf16.gmra.mxu0 %v1232
      %v2586 = vpop.f32.mrf.mxu0
      %v2587 = vadd.f32 0.0, %v2586
      %v2588 = vpop.f32.mrf.mxu0
      %v2589 = vpop.f32.mrf.mxu0
      %v2590 = vadd.f32 0.0, %v2589
      %v2591 = vpop.f32.mrf.mxu0
      %2592 = vmatprep.mubr.bf16.mxu0 0
      %2593 = vmatmul.mubr.bf16.gmra.mxu0 %v1235
      %v2594 = vpop.f32.mrf.mxu0
      %v2595 = vadd.f32 0.0, %v2594
      %v2596 = vpop.f32.mrf.mxu0
      %v2597 = vpop.f32.mrf.mxu0
      %v2598 = vadd.f32 0.0, %v2597
      %v2599 = vpop.f32.mrf.mxu0
      %2600 = vmatprep.mubr.bf16.mxu0 0
      %2601 = vmatmul.mubr.bf16.gmra.mxu0 %v1238
      %v2602 = vpop.f32.mrf.mxu0
      %v2603 = vadd.f32 0.0, %v2602
      %v2604 = vpop.f32.mrf.mxu0
      %v2605 = vpop.f32.mrf.mxu0
      %v2606 = vadd.f32 0.0, %v2605
      %v2607 = vpop.f32.mrf.mxu0
      %2608 = vmatprep.mubr.bf16.mxu0 0
      %2609 = vmatmul.mubr.bf16.gmra.mxu0 %v1241
      %v2610 = vpop.f32.mrf.mxu0
      %v2611 = vadd.f32 0.0, %v2610
      %v2612 = vpop.f32.mrf.mxu0
      %v2613 = vpop.f32.mrf.mxu0
      %v2614 = vadd.f32 0.0, %v2613
      %v2615 = vpop.f32.mrf.mxu0
      %2616 = vmatprep.mubr.bf16.mxu0 0
      %2617 = vmatmul.mubr.bf16.gmra.mxu0 %v1244
      %v2618 = vpop.f32.mrf.mxu0
      %v2619 = vadd.f32 0.0, %v2618
      %v2620 = vpop.f32.mrf.mxu0
      %v2621 = vpop.f32.mrf.mxu0
      %v2622 = vadd.f32 0.0, %v2621
      %v2623 = vpop.f32.mrf.mxu0
      %2624 = vmatprep.mubr.bf16.mxu0 0
      %2625 = vmatmul.mubr.bf16.gmra.mxu0 %v1247
      %v2626 = vpop.f32.mrf.mxu0
      %v2627 = vadd.f32 0.0, %v2626
      %v2628 = vpop.f32.mrf.mxu0
      %v2629 = vpop.f32.mrf.mxu0
      %v2630 = vadd.f32 0.0, %v2629
      %v2631 = vpop.f32.mrf.mxu0
      %2632 = vmatprep.mubr.bf16.mxu0 0
      %2633 = vmatmul.mubr.bf16.gmra.mxu0 %v1250
      %v2634 = vpop.f32.mrf.mxu0
      %v2635 = vadd.f32 0.0, %v2634
      %v2636 = vpop.f32.mrf.mxu0
      %v2637 = vpop.f32.mrf.mxu0
      %v2638 = vadd.f32 0.0, %v2637
      %v2639 = vpop.f32.mrf.mxu0
      %2640 = vmatprep.mubr.bf16.mxu0 0
      %2641 = vmatmul.mubr.bf16.gmra.mxu0 %v1253
      %v2642 = vpop.f32.mrf.mxu0
      %v2643 = vadd.f32 0.0, %v2642
      %v2644 = vpop.f32.mrf.mxu0
      %v2645 = vpop.f32.mrf.mxu0
      %v2646 = vadd.f32 0.0, %v2645
      %v2647 = vpop.f32.mrf.mxu0
      %2648 = vmatprep.mubr.bf16.mxu0 0
      %2649 = vmatmul.mubr.bf16.gmra.mxu0 %v1876
      %v2650 = vpop.f32.mrf.mxu0
      %v2651 = vadd.f32 0.0, %v2650
      %v2652 = vpop.f32.mrf.mxu0
      %v2653 = vpop.f32.mrf.mxu0
      %v2654 = vadd.f32 0.0, %v2653
      %v2655 = vpop.f32.mrf.mxu0
      %2656 = vmatprep.mubr.bf16.mxu0 0
      %2657 = vmatmul.mubr.bf16.gmra.mxu0 %v2499
      %v2658 = vpop.f32.mrf.mxu0
      %v2659 = vadd.f32 0.0, %v2658
      %v2660 = vpop.f32.mrf.mxu0
      %v2661 = vpop.f32.mrf.mxu0
      %v2662 = vadd.f32 0.0, %v2661
      %v2663 = vpop.f32.mrf.mxu0
      %2664 = vdwg.mxu0
      %v2665 = vadd.f32 %v2456, %v2539
      %v2666 = vadd.f32 %v2457, %v2542
      %v2667 = vadd.f32 %v2458, %v2547
      %v2668 = vadd.f32 %v2459, %v2550
      %v2669 = vadd.f32 %v2460, %v2555
      %v2670 = vadd.f32 %v2461, %v2558
      %v2671 = vadd.f32 %v2462, %v2563
      %v2672 = vadd.f32 %v2463, %v2566
      %v2673 = vadd.f32 %v2464, %v2571
      %v2674 = vadd.f32 %v2465, %v2574
      %v2675 = vadd.f32 %v2466, %v2579
      %v2676 = vadd.f32 %v2467, %v2582
      %v2677 = vadd.f32 %v2468, %v2587
      %v2678 = vadd.f32 %v2469, %v2590
      %v2679 = vadd.f32 %v2470, %v2595
      %v2680 = vadd.f32 %v2471, %v2598
      %v2681 = vadd.f32 %v2472, %v2603
      %v2682 = vadd.f32 %v2473, %v2606
      %v2683 = vadd.f32 %v2474, %v2611
      %v2684 = vadd.f32 %v2475, %v2614
      %v2685 = vadd.f32 %v2476, %v2619
      %v2686 = vadd.f32 %v2477, %v2622
      %v2687 = vadd.f32 %v2478, %v2627
      %v2688 = vadd.f32 %v2479, %v2630
      %v2689 = vadd.f32 %v2480, %v2635
      %v2690 = vadd.f32 %v2481, %v2638
      %v2691 = vadd.f32 %v2482, %v2643
      %v2692 = vadd.f32 %v2483, %v2646
      %v2693 = vadd.f32 %v2484, %v2651
      %v2694 = vadd.f32 %v2485, %v2654
      %v2695 = vadd.f32 %v2486, %v2659
      %v2696 = vadd.f32 %v2487, %v2662
      %v2697 = vld [vmem:[%s3] sm:$0x1]
      %v2699 = vlaneseq
      %v2700 = vshrl.u32 %v2699, 7
      %v2701 = vsub.s32 0, %v2700
      %v2702 = vrot.slane %v2697, %v2701
      %v2704 = vmul.f32 %v2665, %v2702
      %v2705 = vmul.f32 %v2666, %v2702
      %v2706 = vmul.f32 %v2667, %v2702
      %v2707 = vmul.f32 %v2668, %v2702
      %v2708 = vmul.f32 %v2669, %v2702
      %v2709 = vmul.f32 %v2670, %v2702
      %v2710 = vmul.f32 %v2671, %v2702
      %v2711 = vmul.f32 %v2672, %v2702
      %v2712 = vmul.f32 %v2673, %v2702
      %v2713 = vmul.f32 %v2674, %v2702
      %v2714 = vmul.f32 %v2675, %v2702
      %v2715 = vmul.f32 %v2676, %v2702
      %v2716 = vmul.f32 %v2677, %v2702
      %v2717 = vmul.f32 %v2678, %v2702
      %v2718 = vmul.f32 %v2679, %v2702
      %v2719 = vmul.f32 %v2680, %v2702
      %v2720 = vmul.f32 %v2681, %v2702
      %v2721 = vmul.f32 %v2682, %v2702
      %v2722 = vmul.f32 %v2683, %v2702
      %v2723 = vmul.f32 %v2684, %v2702
      %v2724 = vmul.f32 %v2685, %v2702
      %v2725 = vmul.f32 %v2686, %v2702
      %v2726 = vmul.f32 %v2687, %v2702
      %v2727 = vmul.f32 %v2688, %v2702
      %v2728 = vmul.f32 %v2689, %v2702
      %v2729 = vmul.f32 %v2690, %v2702
      %v2730 = vmul.f32 %v2691, %v2702
      %v2731 = vmul.f32 %v2692, %v2702
      %v2732 = vmul.f32 %v2693, %v2702
      %v2733 = vmul.f32 %v2694, %v2702
      %v2734 = vmul.f32 %v2695, %v2702
      %v2735 = vmul.f32 %v2696, %v2702
      %v2736 = vld [vmem:[%s4] sm:$0x1]
      %v2738 = vlaneseq
      %v2739 = vshrl.u32 %v2738, 7
      %v2740 = vsub.s32 0, %v2739
      %v2741 = vrot.slane %v2736, %v2740
      %v2743 = vadd.f32 %v2704, %v2741
      %v2744 = vadd.f32 %v2705, %v2741
      %v2745 = vadd.f32 %v2706, %v2741
      %v2746 = vadd.f32 %v2707, %v2741
      %v2747 = vadd.f32 %v2708, %v2741
      %v2748 = vadd.f32 %v2709, %v2741
      %v2749 = vadd.f32 %v2710, %v2741
      %v2750 = vadd.f32 %v2711, %v2741
      %v2751 = vadd.f32 %v2712, %v2741
      %v2752 = vadd.f32 %v2713, %v2741
      %v2753 = vadd.f32 %v2714, %v2741
      %v2754 = vadd.f32 %v2715, %v2741
      %v2755 = vadd.f32 %v2716, %v2741
      %v2756 = vadd.f32 %v2717, %v2741
      %v2757 = vadd.f32 %v2718, %v2741
      %v2758 = vadd.f32 %v2719, %v2741
      %v2759 = vadd.f32 %v2720, %v2741
      %v2760 = vadd.f32 %v2721, %v2741
      %v2761 = vadd.f32 %v2722, %v2741
      %v2762 = vadd.f32 %v2723, %v2741
      %v2763 = vadd.f32 %v2724, %v2741
      %v2764 = vadd.f32 %v2725, %v2741
      %v2765 = vadd.f32 %v2726, %v2741
      %v2766 = vadd.f32 %v2727, %v2741
      %v2767 = vadd.f32 %v2728, %v2741
      %v2768 = vadd.f32 %v2729, %v2741
      %v2769 = vadd.f32 %v2730, %v2741
      %v2770 = vadd.f32 %v2731, %v2741
      %v2771 = vadd.f32 %v2732, %v2741
      %v2772 = vadd.f32 %v2733, %v2741
      %v2773 = vadd.f32 %v2734, %v2741
      %v2774 = vadd.f32 %v2735, %v2741
      %v2775 = vmax.f32 %v2743, 0.0
      %v2776 = vmax.f32 %v2744, 0.0
      %v2777 = vmax.f32 %v2745, 0.0
      %v2778 = vmax.f32 %v2746, 0.0
      %v2779 = vmax.f32 %v2747, 0.0
      %v2780 = vmax.f32 %v2748, 0.0
      %v2781 = vmax.f32 %v2749, 0.0
      %v2782 = vmax.f32 %v2750, 0.0
      %v2783 = vmax.f32 %v2751, 0.0
      %v2784 = vmax.f32 %v2752, 0.0
      %v2785 = vmax.f32 %v2753, 0.0
      %v2786 = vmax.f32 %v2754, 0.0
      %v2787 = vmax.f32 %v2755, 0.0
      %v2788 = vmax.f32 %v2756, 0.0
      %v2789 = vmax.f32 %v2757, 0.0
      %v2790 = vmax.f32 %v2758, 0.0
      %v2791 = vmax.f32 %v2759, 0.0
      %v2792 = vmax.f32 %v2760, 0.0
      %v2793 = vmax.f32 %v2761, 0.0
      %v2794 = vmax.f32 %v2762, 0.0
      %v2795 = vmax.f32 %v2763, 0.0
      %v2796 = vmax.f32 %v2764, 0.0
      %v2797 = vmax.f32 %v2765, 0.0
      %v2798 = vmax.f32 %v2766, 0.0
      %v2799 = vmax.f32 %v2767, 0.0
      %v2800 = vmax.f32 %v2768, 0.0
      %v2801 = vmax.f32 %v2769, 0.0
      %v2802 = vmax.f32 %v2770, 0.0
      %v2803 = vmax.f32 %v2771, 0.0
      %v2804 = vmax.f32 %v2772, 0.0
      %v2805 = vmax.f32 %v2773, 0.0
      %v2806 = vmax.f32 %v2774, 0.0
      %2807 = vst.msk [vmem:[%s368 + $0x1] sm:$0xff] %vm312, %v2775
      %2808 = vst.msk [vmem:[%s368 + $0x9] sm:$0xff] %vm312, %v2776
      %2809 = vst.msk [vmem:[%s368 + $0x19] sm:$0xff] %vm312, %v2777
      %2810 = vst.msk [vmem:[%s368 + $0x21] sm:$0xff] %vm312, %v2778
      %2811 = vst.msk [vmem:[%s368 + $0x31] sm:$0xff] %vm312, %v2779
      %2812 = vst.msk [vmem:[%s368 + $0x39] sm:$0xff] %vm312, %v2780
      %2813 = vst.msk [vmem:[%s368 + $0x49] sm:$0xff] %vm312, %v2781
      %2814 = vst.msk [vmem:[%s368 + $0x51] sm:$0xff] %vm312, %v2782
      %2815 = vst.msk [vmem:[%s368 + $0x61] sm:$0xff] %vm312, %v2783
      %2816 = vst.msk [vmem:[%s368 + $0x69] sm:$0xff] %vm312, %v2784
      %2817 = vst.msk [vmem:[%s368 + $0x79] sm:$0xff] %vm312, %v2785
      %2818 = vst.msk [vmem:[%s368 + $0x81] sm:$0xff] %vm312, %v2786
      %2819 = vst.msk [vmem:[%s368 + $0x91] sm:$0xff] %vm312, %v2787
      %2820 = vst.msk [vmem:[%s368 + $0x99] sm:$0xff] %vm312, %v2788
      %2821 = vst.msk [vmem:[%s368 + $0xa9] sm:$0xff] %vm312, %v2789
      %2822 = vst.msk [vmem:[%s368 + $0xb1] sm:$0xff] %vm312, %v2790
      %2823 = vst.msk [vmem:[%s368 + $0xc1] sm:$0xff] %vm312, %v2791
      %2824 = vst.msk [vmem:[%s368 + $0xc9] sm:$0xff] %vm312, %v2792
      %2825 = vst.msk [vmem:[%s368 + $0xd9] sm:$0xff] %vm312, %v2793
      %2826 = vst.msk [vmem:[%s368 + $0xe1] sm:$0xff] %vm312, %v2794
      %2827 = vst.msk [vmem:[%s368 + $0xf1] sm:$0xff] %vm312, %v2795
      %2828 = vst.msk [vmem:[%s368 + $0xf9] sm:$0xff] %vm312, %v2796
      %2829 = vst.msk [vmem:[%s368 + $0x109] sm:$0xff] %vm312, %v2797
      %2830 = vst.msk [vmem:[%s368 + $0x111] sm:$0xff] %vm312, %v2798
      %2831 = vst.msk [vmem:[%s368 + $0x121] sm:$0xff] %vm312, %v2799
      %2832 = vst.msk [vmem:[%s368 + $0x129] sm:$0xff] %vm312, %v2800
      %2833 = vst.msk [vmem:[%s368 + $0x139] sm:$0xff] %vm312, %v2801
      %2834 = vst.msk [vmem:[%s368 + $0x141] sm:$0xff] %vm312, %v2802
      %2835 = vst.msk [vmem:[%s368 + $0x151] sm:$0xff] %vm312, %v2803
      %2836 = vst.msk [vmem:[%s368 + $0x159] sm:$0xff] %vm312, %v2804
      %2837 = vst.msk [vmem:[%s368 + $0x169] sm:$0xff] %vm312, %v2805
      %2838 = vst.msk [vmem:[%s368 + $0x171] sm:$0xff] %vm312, %v2806
      %v2839 = vld [vmem:[#allocation2] sm:$0xff]
      %v2840 = vld [vmem:[#allocation2 + $0x8] sm:$0xff]
      %v2841 = vld [vmem:[#allocation2 + $0x10] sm:$0x3]
      %v2842 = vld [vmem:[#allocation2 + $0x18] sm:$0xff]
      %v2843 = vld [vmem:[#allocation2 + $0x20] sm:$0xff]
      %v2844 = vld [vmem:[#allocation2 + $0x28] sm:$0x3]
      %v2845 = vld [vmem:[#allocation2 + $0x30] sm:$0xff]
      %v2846 = vld [vmem:[#allocation2 + $0x38] sm:$0xff]
      %v2847 = vld [vmem:[#allocation2 + $0x40] sm:$0x3]
      %v2848 = vld [vmem:[#allocation2 + $0x48] sm:$0xff]
      %v2849 = vld [vmem:[#allocation2 + $0x50] sm:$0xff]
      %v2850 = vld [vmem:[#allocation2 + $0x58] sm:$0x3]
      %v2851 = vld [vmem:[#allocation2 + $0x60] sm:$0xff]
      %v2852 = vld [vmem:[#allocation2 + $0x68] sm:$0xff]
      %v2853 = vld [vmem:[#allocation2 + $0x70] sm:$0x3]
      %v2854 = vld [vmem:[#allocation2 + $0x78] sm:$0xff]
      %v2855 = vld [vmem:[#allocation2 + $0x80] sm:$0xff]
      %v2856 = vld [vmem:[#allocation2 + $0x88] sm:$0x3]
      %v2857 = vld [vmem:[#allocation2 + $0x90] sm:$0xff]
      %v2858 = vld [vmem:[#allocation2 + $0x98] sm:$0xff]
      %v2859 = vld [vmem:[#allocation2 + $0xa0] sm:$0x3]
      %v2860 = vld [vmem:[#allocation2 + $0xa8] sm:$0xff]
      %v2861 = vld [vmem:[#allocation2 + $0xb0] sm:$0xff]
      %v2862 = vld [vmem:[#allocation2 + $0xb8] sm:$0x3]
      %v2863 = vld [vmem:[#allocation2 + $0xc0] sm:$0xff]
      %v2864 = vld [vmem:[#allocation2 + $0xc8] sm:$0xff]
      %v2865 = vld [vmem:[#allocation2 + $0xd0] sm:$0x3]
      %v2866 = vld [vmem:[#allocation2 + $0xd8] sm:$0xff]
      %v2867 = vld [vmem:[#allocation2 + $0xe0] sm:$0xff]
      %v2868 = vld [vmem:[#allocation2 + $0xe8] sm:$0x3]
      %v2869 = vld [vmem:[#allocation2 + $0xf0] sm:$0xff]
      %v2870 = vld [vmem:[#allocation2 + $0xf8] sm:$0xff]
      %v2871 = vld [vmem:[#allocation2 + $0x100] sm:$0x3]
      %v2872 = vld [vmem:[#allocation2 + $0x108] sm:$0xff]
      %v2873 = vld [vmem:[#allocation2 + $0x110] sm:$0xff]
      %v2874 = vld [vmem:[#allocation2 + $0x118] sm:$0x3]
      %v2875 = vld [vmem:[#allocation2 + $0x120] sm:$0xff]
      %v2876 = vld [vmem:[#allocation2 + $0x128] sm:$0xff]
      %v2877 = vld [vmem:[#allocation2 + $0x130] sm:$0x3]
      %v2878 = vld [vmem:[#allocation2 + $0x138] sm:$0xff]
      %v2879 = vld [vmem:[#allocation2 + $0x140] sm:$0xff]
      %v2880 = vld [vmem:[#allocation2 + $0x148] sm:$0x3]
      %v2881 = vld [vmem:[#allocation2 + $0x150] sm:$0xff]
      %v2882 = vld [vmem:[#allocation2 + $0x158] sm:$0xff]
      %v2883 = vld [vmem:[#allocation2 + $0x160] sm:$0x3]
      %v2884 = vld [vmem:[#allocation2 + $0x168] sm:$0xff]
      %v2885 = vld [vmem:[#allocation2 + $0x170] sm:$0xff]
      %v2886 = vld [vmem:[#allocation2 + $0x178] sm:$0x3]
      %v2887 = vld [vmem:[#allocation2 + $0x180] sm:$0xff]
      %v2888 = vld [vmem:[#allocation2 + $0x188] sm:$0xff]
      %v2889 = vld [vmem:[#allocation2 + $0x190] sm:$0x3]
      %v2890 = vld [vmem:[#allocation2 + $0x198] sm:$0xff]
      %v2891 = vld [vmem:[#allocation2 + $0x1a0] sm:$0xff]
      %v2892 = vld [vmem:[#allocation2 + $0x1a8] sm:$0x3]
      %v2893 = vpack.c.bf16 %v2840, %v2839
      %v2894 = vpack.c.bf16 %v2843, %v2842
      %v2895 = vpack.c.bf16 %v2846, %v2845
      %v2896 = vpack.c.bf16 %v2849, %v2848
      %v2897 = vpack.c.bf16 %v2852, %v2851
      %v2898 = vpack.c.bf16 %v2855, %v2854
      %v2899 = vpack.c.bf16 %v2858, %v2857
      %v2900 = vpack.c.bf16 %v2861, %v2860
      %v2901 = vpack.c.bf16 %v2864, %v2863
      %v2902 = vpack.c.bf16 %v2867, %v2866
      %v2903 = vpack.c.bf16 %v2870, %v2869
      %v2904 = vpack.c.bf16 %v2873, %v2872
      %v2905 = vpack.c.bf16 %v2876, %v2875
      %v2906 = vpack.c.bf16 %v2879, %v2878
      %v2907 = vpack.c.bf16 %v2882, %v2881
      %v2908 = vpack.c.bf16 %v2885, %v2884
      %v2909 = vld [vmem:[%s2] sm:$0xf]
      %v2958 = vrot.slane %v2839, 1
      %v2959 = vrot.slane %v2840, 1
      %v2960 = vsel %vm520, %v2958, %v2959
      %v2961 = vrot.slane %v2841, 1
      %v2962 = vsel %vm520, %v2959, %v2961
      %v2963 = vrot.slane %v2842, 1
      %v2964 = vrot.slane %v2843, 1
      %v2965 = vsel %vm520, %v2963, %v2964
      %v2966 = vrot.slane %v2844, 1
      %v2967 = vsel %vm520, %v2964, %v2966
      %v2968 = vrot.slane %v2845, 1
      %v2969 = vrot.slane %v2846, 1
      %v2970 = vsel %vm520, %v2968, %v2969
      %v2971 = vrot.slane %v2847, 1
      %v2972 = vsel %vm520, %v2969, %v2971
      %v2973 = vrot.slane %v2848, 1
      %v2974 = vrot.slane %v2849, 1
      %v2975 = vsel %vm520, %v2973, %v2974
      %v2976 = vrot.slane %v2850, 1
      %v2977 = vsel %vm520, %v2974, %v2976
      %v2978 = vrot.slane %v2851, 1
      %v2979 = vrot.slane %v2852, 1
      %v2980 = vsel %vm520, %v2978, %v2979
      %v2981 = vrot.slane %v2853, 1
      %v2982 = vsel %vm520, %v2979, %v2981
      %v2983 = vrot.slane %v2854, 1
      %v2984 = vrot.slane %v2855, 1
      %v2985 = vsel %vm520, %v2983, %v2984
      %v2986 = vrot.slane %v2856, 1
      %v2987 = vsel %vm520, %v2984, %v2986
      %v2988 = vrot.slane %v2857, 1
      %v2989 = vrot.slane %v2858, 1
      %v2990 = vsel %vm520, %v2988, %v2989
      %v2991 = vrot.slane %v2859, 1
      %v2992 = vsel %vm520, %v2989, %v2991
      %v2993 = vrot.slane %v2860, 1
      %v2994 = vrot.slane %v2861, 1
      %v2995 = vsel %vm520, %v2993, %v2994
      %v2996 = vrot.slane %v2862, 1
      %v2997 = vsel %vm520, %v2994, %v2996
      %v2998 = vrot.slane %v2863, 1
      %v2999 = vrot.slane %v2864, 1
      %v3000 = vsel %vm520, %v2998, %v2999
      %v3001 = vrot.slane %v2865, 1
      %v3002 = vsel %vm520, %v2999, %v3001
      %v3003 = vrot.slane %v2866, 1
      %v3004 = vrot.slane %v2867, 1
      %v3005 = vsel %vm520, %v3003, %v3004
      %v3006 = vrot.slane %v2868, 1
      %v3007 = vsel %vm520, %v3004, %v3006
      %v3008 = vrot.slane %v2869, 1
      %v3009 = vrot.slane %v2870, 1
      %v3010 = vsel %vm520, %v3008, %v3009
      %v3011 = vrot.slane %v2871, 1
      %v3012 = vsel %vm520, %v3009, %v3011
      %v3013 = vrot.slane %v2872, 1
      %v3014 = vrot.slane %v2873, 1
      %v3015 = vsel %vm520, %v3013, %v3014
      %v3016 = vrot.slane %v2874, 1
      %v3017 = vsel %vm520, %v3014, %v3016
      %v3018 = vrot.slane %v2875, 1
      %v3019 = vrot.slane %v2876, 1
      %v3020 = vsel %vm520, %v3018, %v3019
      %v3021 = vrot.slane %v2877, 1
      %v3022 = vsel %vm520, %v3019, %v3021
      %v3023 = vrot.slane %v2878, 1
      %v3024 = vrot.slane %v2879, 1
      %v3025 = vsel %vm520, %v3023, %v3024
      %v3026 = vrot.slane %v2880, 1
      %v3027 = vsel %vm520, %v3024, %v3026
      %v3028 = vrot.slane %v2881, 1
      %v3029 = vrot.slane %v2882, 1
      %v3030 = vsel %vm520, %v3028, %v3029
      %v3031 = vrot.slane %v2883, 1
      %v3032 = vsel %vm520, %v3029, %v3031
      %v3033 = vrot.slane %v2884, 1
      %v3034 = vrot.slane %v2885, 1
      %v3035 = vsel %vm520, %v3033, %v3034
      %v3036 = vrot.slane %v2886, 1
      %v3037 = vsel %vm520, %v3034, %v3036
      %v3070 = vpack.c.bf16 %v2962, %v2960
      %v3071 = vpack.c.bf16 %v2967, %v2965
      %v3072 = vpack.c.bf16 %v2972, %v2970
      %v3073 = vpack.c.bf16 %v2977, %v2975
      %v3074 = vpack.c.bf16 %v2982, %v2980
      %v3075 = vpack.c.bf16 %v2987, %v2985
      %v3076 = vpack.c.bf16 %v2992, %v2990
      %v3077 = vpack.c.bf16 %v2997, %v2995
      %v3078 = vpack.c.bf16 %v3002, %v3000
      %v3079 = vpack.c.bf16 %v3007, %v3005
      %v3080 = vpack.c.bf16 %v3012, %v3010
      %v3081 = vpack.c.bf16 %v3017, %v3015
      %v3082 = vpack.c.bf16 %v3022, %v3020
      %v3083 = vpack.c.bf16 %v3027, %v3025
      %v3084 = vpack.c.bf16 %v3032, %v3030
      %v3085 = vpack.c.bf16 %v3037, %v3035
      %s3086 = scalar_lea.vmem %s2, 4
      %v3087 = vld [vmem:[%s3086] sm:$0xf]
      %v3089 = vsel %vm312, %v3070, 0
      %v3092 = vsel %vm312, %v3071, 0
      %v3095 = vsel %vm312, %v3072, 0
      %v3098 = vsel %vm312, %v3073, 0
      %v3101 = vsel %vm312, %v3074, 0
      %v3104 = vsel %vm312, %v3075, 0
      %v3107 = vsel %vm312, %v3076, 0
      %v3110 = vsel %vm312, %v3077, 0
      %v3113 = vsel %vm312, %v3078, 0
      %v3116 = vsel %vm312, %v3079, 0
      %v3119 = vsel %vm312, %v3080, 0
      %v3122 = vsel %vm312, %v3081, 0
      %v3125 = vsel %vm312, %v3082, 0
      %v3128 = vsel %vm312, %v3083, 0
      %v3131 = vsel %vm312, %v3084, 0
      %v3134 = vsel %vm312, %v3085, 0
      %v3137 = vsel %vm699, %v3087, 0
      %3139 = vmatprep.subr.bf16.mxu0 0
      %3140 = vmatpush1.bf16.msra.mxu0 0
      %3141 = vmatprep.subr.bf16.mxu0 0
      %3142 = vmatpush1.bf16.msra.mxu0 0
      %3143 = vmatprep.subr.bf16.mxu0 0
      %3144 = vmatpush1.bf16.msra.mxu0 0
      %3145 = vmatprep.subr.bf16.mxu0 0
      %3146 = vmatpush1.bf16.msra.mxu0 0
      %3147 = vmatprep.subr.bf16.mxu0 0
      %3148 = vmatpush1.bf16.msra.mxu0 0
      %3149 = vmatprep.subr.bf16.mxu0 0
      %3150 = vmatpush1.bf16.msra.mxu0 0
      %3151 = vmatprep.subr.bf16.mxu0 0
      %3152 = vmatpush1.bf16.msra.mxu0 0
      %3153 = vmatprep.subr.bf16.mxu0 0
      %3154 = vmatpush1.bf16.msra.mxu0 %v3137
      %3155 = vmatprep.subr.bf16.mxu0 0
      %3156 = vmatpush2.bf16.msra.mxu0 0
      %3157 = vmatprep.subr.bf16.mxu0 0
      %3158 = vmatpush2.bf16.msra.mxu0 0
      %3159 = vmatprep.subr.bf16.mxu0 0
      %3160 = vmatpush2.bf16.msra.mxu0 0
      %3161 = vmatprep.subr.bf16.mxu0 0
      %3162 = vmatpush2.bf16.msra.mxu0 0
      %3163 = vmatprep.subr.bf16.mxu0 0
      %3164 = vmatpush2.bf16.msra.mxu0 0
      %3165 = vmatprep.subr.bf16.mxu0 0
      %3166 = vmatpush2.bf16.msra.mxu0 0
      %3167 = vmatprep.subr.bf16.mxu0 0
      %3168 = vmatpush2.bf16.msra.mxu0 0
      %3169 = vmatprep.subr.bf16.mxu0 0
      %3170 = vmatpush2.bf16.msra.mxu0 0
      %3171 = vmatprep.mubr.bf16.mxu0 0
      %3172 = vmatmul.mubr.bf16.gmra.mxu0 %v3089
      %v3173 = vpop.f32.mrf.mxu0
      %v3174 = vadd.f32 0.0, %v3173
      %v3175 = vpop.f32.mrf.mxu0
      %v3176 = vpop.f32.mrf.mxu0
      %v3177 = vadd.f32 0.0, %v3176
      %v3178 = vpop.f32.mrf.mxu0
      %3179 = vmatprep.mubr.bf16.mxu0 0
      %3180 = vmatmul.mubr.bf16.gmra.mxu0 %v3092
      %v3181 = vpop.f32.mrf.mxu0
      %v3182 = vadd.f32 0.0, %v3181
      %v3183 = vpop.f32.mrf.mxu0
      %v3184 = vpop.f32.mrf.mxu0
      %v3185 = vadd.f32 0.0, %v3184
      %v3186 = vpop.f32.mrf.mxu0
      %3187 = vmatprep.mubr.bf16.mxu0 0
      %3188 = vmatmul.mubr.bf16.gmra.mxu0 %v3095
      %v3189 = vpop.f32.mrf.mxu0
      %v3190 = vadd.f32 0.0, %v3189
      %v3191 = vpop.f32.mrf.mxu0
      %v3192 = vpop.f32.mrf.mxu0
      %v3193 = vadd.f32 0.0, %v3192
      %v3194 = vpop.f32.mrf.mxu0
      %3195 = vmatprep.mubr.bf16.mxu0 0
      %3196 = vmatmul.mubr.bf16.gmra.mxu0 %v3098
      %v3197 = vpop.f32.mrf.mxu0
      %v3198 = vadd.f32 0.0, %v3197
      %v3199 = vpop.f32.mrf.mxu0
      %v3200 = vpop.f32.mrf.mxu0
      %v3201 = vadd.f32 0.0, %v3200
      %v3202 = vpop.f32.mrf.mxu0
      %3203 = vmatprep.mubr.bf16.mxu0 0
      %3204 = vmatmul.mubr.bf16.gmra.mxu0 %v3101
      %v3205 = vpop.f32.mrf.mxu0
      %v3206 = vadd.f32 0.0, %v3205
      %v3207 = vpop.f32.mrf.mxu0
      %v3208 = vpop.f32.mrf.mxu0
      %v3209 = vadd.f32 0.0, %v3208
      %v3210 = vpop.f32.mrf.mxu0
      %3211 = vmatprep.mubr.bf16.mxu0 0
      %3212 = vmatmul.mubr.bf16.gmra.mxu0 %v3104
      %v3213 = vpop.f32.mrf.mxu0
      %v3214 = vadd.f32 0.0, %v3213
      %v3215 = vpop.f32.mrf.mxu0
      %v3216 = vpop.f32.mrf.mxu0
      %v3217 = vadd.f32 0.0, %v3216
      %v3218 = vpop.f32.mrf.mxu0
      %3219 = vmatprep.mubr.bf16.mxu0 0
      %3220 = vmatmul.mubr.bf16.gmra.mxu0 %v3107
      %v3221 = vpop.f32.mrf.mxu0
      %v3222 = vadd.f32 0.0, %v3221
      %v3223 = vpop.f32.mrf.mxu0
      %v3224 = vpop.f32.mrf.mxu0
      %v3225 = vadd.f32 0.0, %v3224
      %v3226 = vpop.f32.mrf.mxu0
      %3227 = vmatprep.mubr.bf16.mxu0 0
      %3228 = vmatmul.mubr.bf16.gmra.mxu0 %v3110
      %v3229 = vpop.f32.mrf.mxu0
      %v3230 = vadd.f32 0.0, %v3229
      %v3231 = vpop.f32.mrf.mxu0
      %v3232 = vpop.f32.mrf.mxu0
      %v3233 = vadd.f32 0.0, %v3232
      %v3234 = vpop.f32.mrf.mxu0
      %3235 = vmatprep.mubr.bf16.mxu0 0
      %3236 = vmatmul.mubr.bf16.gmra.mxu0 %v3113
      %v3237 = vpop.f32.mrf.mxu0
      %v3238 = vadd.f32 0.0, %v3237
      %v3239 = vpop.f32.mrf.mxu0
      %v3240 = vpop.f32.mrf.mxu0
      %v3241 = vadd.f32 0.0, %v3240
      %v3242 = vpop.f32.mrf.mxu0
      %3243 = vmatprep.mubr.bf16.mxu0 0
      %3244 = vmatmul.mubr.bf16.gmra.mxu0 %v3116
      %v3245 = vpop.f32.mrf.mxu0
      %v3246 = vadd.f32 0.0, %v3245
      %v3247 = vpop.f32.mrf.mxu0
      %v3248 = vpop.f32.mrf.mxu0
      %v3249 = vadd.f32 0.0, %v3248
      %v3250 = vpop.f32.mrf.mxu0
      %3251 = vmatprep.mubr.bf16.mxu0 0
      %3252 = vmatmul.mubr.bf16.gmra.mxu0 %v3119
      %v3253 = vpop.f32.mrf.mxu0
      %v3254 = vadd.f32 0.0, %v3253
      %v3255 = vpop.f32.mrf.mxu0
      %v3256 = vpop.f32.mrf.mxu0
      %v3257 = vadd.f32 0.0, %v3256
      %v3258 = vpop.f32.mrf.mxu0
      %3259 = vmatprep.mubr.bf16.mxu0 0
      %3260 = vmatmul.mubr.bf16.gmra.mxu0 %v3122
      %v3261 = vpop.f32.mrf.mxu0
      %v3262 = vadd.f32 0.0, %v3261
      %v3263 = vpop.f32.mrf.mxu0
      %v3264 = vpop.f32.mrf.mxu0
      %v3265 = vadd.f32 0.0, %v3264
      %v3266 = vpop.f32.mrf.mxu0
      %3267 = vmatprep.mubr.bf16.mxu0 0
      %3268 = vmatmul.mubr.bf16.gmra.mxu0 %v3125
      %v3269 = vpop.f32.mrf.mxu0
      %v3270 = vadd.f32 0.0, %v3269
      %v3271 = vpop.f32.mrf.mxu0
      %v3272 = vpop.f32.mrf.mxu0
      %v3273 = vadd.f32 0.0, %v3272
      %v3274 = vpop.f32.mrf.mxu0
      %3275 = vmatprep.mubr.bf16.mxu0 0
      %3276 = vmatmul.mubr.bf16.gmra.mxu0 %v3128
      %v3277 = vpop.f32.mrf.mxu0
      %v3278 = vadd.f32 0.0, %v3277
      %v3279 = vpop.f32.mrf.mxu0
      %v3280 = vpop.f32.mrf.mxu0
      %v3281 = vadd.f32 0.0, %v3280
      %v3282 = vpop.f32.mrf.mxu0
      %3283 = vmatprep.mubr.bf16.mxu0 0
      %3284 = vmatmul.mubr.bf16.gmra.mxu0 %v3131
      %v3285 = vpop.f32.mrf.mxu0
      %v3286 = vadd.f32 0.0, %v3285
      %v3287 = vpop.f32.mrf.mxu0
      %v3288 = vpop.f32.mrf.mxu0
      %v3289 = vadd.f32 0.0, %v3288
      %v3290 = vpop.f32.mrf.mxu0
      %3291 = vmatprep.mubr.bf16.mxu0 0
      %3292 = vmatmul.mubr.bf16.gmra.mxu0 %v3134
      %v3293 = vpop.f32.mrf.mxu0
      %v3294 = vadd.f32 0.0, %v3293
      %v3295 = vpop.f32.mrf.mxu0
      %v3296 = vpop.f32.mrf.mxu0
      %v3297 = vadd.f32 0.0, %v3296
      %v3298 = vpop.f32.mrf.mxu0
      %3299 = vdwg.mxu0
      %v3301 = vsel %vm312, %v2893, 0
      %v3304 = vsel %vm312, %v2894, 0
      %v3307 = vsel %vm312, %v2895, 0
      %v3310 = vsel %vm312, %v2896, 0
      %v3313 = vsel %vm312, %v2897, 0
      %v3316 = vsel %vm312, %v2898, 0
      %v3319 = vsel %vm312, %v2899, 0
      %v3322 = vsel %vm312, %v2900, 0
      %v3325 = vsel %vm312, %v2901, 0
      %v3328 = vsel %vm312, %v2902, 0
      %v3331 = vsel %vm312, %v2903, 0
      %v3334 = vsel %vm312, %v2904, 0
      %v3337 = vsel %vm312, %v2905, 0
      %v3340 = vsel %vm312, %v2906, 0
      %v3343 = vsel %vm312, %v2907, 0
      %v3346 = vsel %vm312, %v2908, 0
      %v3349 = vsel %vm699, %v2909, 0
      %3351 = vmatprep.subr.bf16.mxu0 0
      %3352 = vmatpush1.bf16.msra.mxu0 0
      %3353 = vmatprep.subr.bf16.mxu0 0
      %3354 = vmatpush1.bf16.msra.mxu0 0
      %3355 = vmatprep.subr.bf16.mxu0 0
      %3356 = vmatpush1.bf16.msra.mxu0 0
      %3357 = vmatprep.subr.bf16.mxu0 0
      %3358 = vmatpush1.bf16.msra.mxu0 0
      %3359 = vmatprep.subr.bf16.mxu0 0
      %3360 = vmatpush1.bf16.msra.mxu0 0
      %3361 = vmatprep.subr.bf16.mxu0 0
      %3362 = vmatpush1.bf16.msra.mxu0 0
      %3363 = vmatprep.subr.bf16.mxu0 0
      %3364 = vmatpush1.bf16.msra.mxu0 0
      %3365 = vmatprep.subr.bf16.mxu0 0
      %3366 = vmatpush1.bf16.msra.mxu0 %v3349
      %3367 = vmatprep.subr.bf16.mxu0 0
      %3368 = vmatpush2.bf16.msra.mxu0 0
      %3369 = vmatprep.subr.bf16.mxu0 0
      %3370 = vmatpush2.bf16.msra.mxu0 0
      %3371 = vmatprep.subr.bf16.mxu0 0
      %3372 = vmatpush2.bf16.msra.mxu0 0
      %3373 = vmatprep.subr.bf16.mxu0 0
      %3374 = vmatpush2.bf16.msra.mxu0 0
      %3375 = vmatprep.subr.bf16.mxu0 0
      %3376 = vmatpush2.bf16.msra.mxu0 0
      %3377 = vmatprep.subr.bf16.mxu0 0
      %3378 = vmatpush2.bf16.msra.mxu0 0
      %3379 = vmatprep.subr.bf16.mxu0 0
      %3380 = vmatpush2.bf16.msra.mxu0 0
      %3381 = vmatprep.subr.bf16.mxu0 0
      %3382 = vmatpush2.bf16.msra.mxu0 0
      %3383 = vmatprep.mubr.bf16.mxu0 0
      %3384 = vmatmul.mubr.bf16.gmra.mxu0 %v3301
      %v3385 = vpop.f32.mrf.mxu0
      %v3386 = vadd.f32 %v3174, %v3385
      %v3387 = vpop.f32.mrf.mxu0
      %v3388 = vpop.f32.mrf.mxu0
      %v3389 = vadd.f32 %v3177, %v3388
      %v3390 = vpop.f32.mrf.mxu0
      %3391 = vmatprep.mubr.bf16.mxu0 0
      %3392 = vmatmul.mubr.bf16.gmra.mxu0 %v3304
      %v3393 = vpop.f32.mrf.mxu0
      %v3394 = vadd.f32 %v3182, %v3393
      %v3395 = vpop.f32.mrf.mxu0
      %v3396 = vpop.f32.mrf.mxu0
      %v3397 = vadd.f32 %v3185, %v3396
      %v3398 = vpop.f32.mrf.mxu0
      %3399 = vmatprep.mubr.bf16.mxu0 0
      %3400 = vmatmul.mubr.bf16.gmra.mxu0 %v3307
      %v3401 = vpop.f32.mrf.mxu0
      %v3402 = vadd.f32 %v3190, %v3401
      %v3403 = vpop.f32.mrf.mxu0
      %v3404 = vpop.f32.mrf.mxu0
      %v3405 = vadd.f32 %v3193, %v3404
      %v3406 = vpop.f32.mrf.mxu0
      %3407 = vmatprep.mubr.bf16.mxu0 0
      %3408 = vmatmul.mubr.bf16.gmra.mxu0 %v3310
      %v3409 = vpop.f32.mrf.mxu0
      %v3410 = vadd.f32 %v3198, %v3409
      %v3411 = vpop.f32.mrf.mxu0
      %v3412 = vpop.f32.mrf.mxu0
      %v3413 = vadd.f32 %v3201, %v3412
      %v3414 = vpop.f32.mrf.mxu0
      %3415 = vmatprep.mubr.bf16.mxu0 0
      %3416 = vmatmul.mubr.bf16.gmra.mxu0 %v3313
      %v3417 = vpop.f32.mrf.mxu0
      %v3418 = vadd.f32 %v3206, %v3417
      %v3419 = vpop.f32.mrf.mxu0
      %v3420 = vpop.f32.mrf.mxu0
      %v3421 = vadd.f32 %v3209, %v3420
      %v3422 = vpop.f32.mrf.mxu0
      %3423 = vmatprep.mubr.bf16.mxu0 0
      %3424 = vmatmul.mubr.bf16.gmra.mxu0 %v3316
      %v3425 = vpop.f32.mrf.mxu0
      %v3426 = vadd.f32 %v3214, %v3425
      %v3427 = vpop.f32.mrf.mxu0
      %v3428 = vpop.f32.mrf.mxu0
      %v3429 = vadd.f32 %v3217, %v3428
      %v3430 = vpop.f32.mrf.mxu0
      %3431 = vmatprep.mubr.bf16.mxu0 0
      %3432 = vmatmul.mubr.bf16.gmra.mxu0 %v3319
      %v3433 = vpop.f32.mrf.mxu0
      %v3434 = vadd.f32 %v3222, %v3433
      %v3435 = vpop.f32.mrf.mxu0
      %v3436 = vpop.f32.mrf.mxu0
      %v3437 = vadd.f32 %v3225, %v3436
      %v3438 = vpop.f32.mrf.mxu0
      %3439 = vmatprep.mubr.bf16.mxu0 0
      %3440 = vmatmul.mubr.bf16.gmra.mxu0 %v3322
      %v3441 = vpop.f32.mrf.mxu0
      %v3442 = vadd.f32 %v3230, %v3441
      %v3443 = vpop.f32.mrf.mxu0
      %v3444 = vpop.f32.mrf.mxu0
      %v3445 = vadd.f32 %v3233, %v3444
      %v3446 = vpop.f32.mrf.mxu0
      %3447 = vmatprep.mubr.bf16.mxu0 0
      %3448 = vmatmul.mubr.bf16.gmra.mxu0 %v3325
      %v3449 = vpop.f32.mrf.mxu0
      %v3450 = vadd.f32 %v3238, %v3449
      %v3451 = vpop.f32.mrf.mxu0
      %v3452 = vpop.f32.mrf.mxu0
      %v3453 = vadd.f32 %v3241, %v3452
      %v3454 = vpop.f32.mrf.mxu0
      %3455 = vmatprep.mubr.bf16.mxu0 0
      %3456 = vmatmul.mubr.bf16.gmra.mxu0 %v3328
      %v3457 = vpop.f32.mrf.mxu0
      %v3458 = vadd.f32 %v3246, %v3457
      %v3459 = vpop.f32.mrf.mxu0
      %v3460 = vpop.f32.mrf.mxu0
      %v3461 = vadd.f32 %v3249, %v3460
      %v3462 = vpop.f32.mrf.mxu0
      %3463 = vmatprep.mubr.bf16.mxu0 0
      %3464 = vmatmul.mubr.bf16.gmra.mxu0 %v3331
      %v3465 = vpop.f32.mrf.mxu0
      %v3466 = vadd.f32 %v3254, %v3465
      %v3467 = vpop.f32.mrf.mxu0
      %v3468 = vpop.f32.mrf.mxu0
      %v3469 = vadd.f32 %v3257, %v3468
      %v3470 = vpop.f32.mrf.mxu0
      %3471 = vmatprep.mubr.bf16.mxu0 0
      %3472 = vmatmul.mubr.bf16.gmra.mxu0 %v3334
      %v3473 = vpop.f32.mrf.mxu0
      %v3474 = vadd.f32 %v3262, %v3473
      %v3475 = vpop.f32.mrf.mxu0
      %v3476 = vpop.f32.mrf.mxu0
      %v3477 = vadd.f32 %v3265, %v3476
      %v3478 = vpop.f32.mrf.mxu0
      %3479 = vmatprep.mubr.bf16.mxu0 0
      %3480 = vmatmul.mubr.bf16.gmra.mxu0 %v3337
      %v3481 = vpop.f32.mrf.mxu0
      %v3482 = vadd.f32 %v3270, %v3481
      %v3483 = vpop.f32.mrf.mxu0
      %v3484 = vpop.f32.mrf.mxu0
      %v3485 = vadd.f32 %v3273, %v3484
      %v3486 = vpop.f32.mrf.mxu0
      %3487 = vmatprep.mubr.bf16.mxu0 0
      %3488 = vmatmul.mubr.bf16.gmra.mxu0 %v3340
      %v3489 = vpop.f32.mrf.mxu0
      %v3490 = vadd.f32 %v3278, %v3489
      %v3491 = vpop.f32.mrf.mxu0
      %v3492 = vpop.f32.mrf.mxu0
      %v3493 = vadd.f32 %v3281, %v3492
      %v3494 = vpop.f32.mrf.mxu0
      %3495 = vmatprep.mubr.bf16.mxu0 0
      %3496 = vmatmul.mubr.bf16.gmra.mxu0 %v3343
      %v3497 = vpop.f32.mrf.mxu0
      %v3498 = vadd.f32 %v3286, %v3497
      %v3499 = vpop.f32.mrf.mxu0
      %v3500 = vpop.f32.mrf.mxu0
      %v3501 = vadd.f32 %v3289, %v3500
      %v3502 = vpop.f32.mrf.mxu0
      %3503 = vmatprep.mubr.bf16.mxu0 0
      %3504 = vmatmul.mubr.bf16.gmra.mxu0 %v3346
      %v3505 = vpop.f32.mrf.mxu0
      %v3506 = vadd.f32 %v3294, %v3505
      %v3507 = vpop.f32.mrf.mxu0
      %v3508 = vpop.f32.mrf.mxu0
      %v3509 = vadd.f32 %v3297, %v3508
      %v3510 = vpop.f32.mrf.mxu0
      %3511 = vdwg.mxu0
      %v3512 = vrot.slane %v2839, 2
      %v3513 = vrot.slane %v2840, 2
      %v3514 = vsel %vm1076, %v3512, %v3513
      %v3515 = vrot.slane %v2841, 2
      %v3516 = vsel %vm1076, %v3513, %v3515
      %v3517 = vrot.slane %v2842, 2
      %v3518 = vrot.slane %v2843, 2
      %v3519 = vsel %vm1076, %v3517, %v3518
      %v3520 = vrot.slane %v2844, 2
      %v3521 = vsel %vm1076, %v3518, %v3520
      %v3522 = vrot.slane %v2845, 2
      %v3523 = vrot.slane %v2846, 2
      %v3524 = vsel %vm1076, %v3522, %v3523
      %v3525 = vrot.slane %v2847, 2
      %v3526 = vsel %vm1076, %v3523, %v3525
      %v3527 = vrot.slane %v2848, 2
      %v3528 = vrot.slane %v2849, 2
      %v3529 = vsel %vm1076, %v3527, %v3528
      %v3530 = vrot.slane %v2850, 2
      %v3531 = vsel %vm1076, %v3528, %v3530
      %v3532 = vrot.slane %v2851, 2
      %v3533 = vrot.slane %v2852, 2
      %v3534 = vsel %vm1076, %v3532, %v3533
      %v3535 = vrot.slane %v2853, 2
      %v3536 = vsel %vm1076, %v3533, %v3535
      %v3537 = vrot.slane %v2854, 2
      %v3538 = vrot.slane %v2855, 2
      %v3539 = vsel %vm1076, %v3537, %v3538
      %v3540 = vrot.slane %v2856, 2
      %v3541 = vsel %vm1076, %v3538, %v3540
      %v3542 = vrot.slane %v2857, 2
      %v3543 = vrot.slane %v2858, 2
      %v3544 = vsel %vm1076, %v3542, %v3543
      %v3545 = vrot.slane %v2859, 2
      %v3546 = vsel %vm1076, %v3543, %v3545
      %v3547 = vrot.slane %v2860, 2
      %v3548 = vrot.slane %v2861, 2
      %v3549 = vsel %vm1076, %v3547, %v3548
      %v3550 = vrot.slane %v2862, 2
      %v3551 = vsel %vm1076, %v3548, %v3550
      %v3552 = vrot.slane %v2863, 2
      %v3553 = vrot.slane %v2864, 2
      %v3554 = vsel %vm1076, %v3552, %v3553
      %v3555 = vrot.slane %v2865, 2
      %v3556 = vsel %vm1076, %v3553, %v3555
      %v3557 = vrot.slane %v2866, 2
      %v3558 = vrot.slane %v2867, 2
      %v3559 = vsel %vm1076, %v3557, %v3558
      %v3560 = vrot.slane %v2868, 2
      %v3561 = vsel %vm1076, %v3558, %v3560
      %v3562 = vrot.slane %v2869, 2
      %v3563 = vrot.slane %v2870, 2
      %v3564 = vsel %vm1076, %v3562, %v3563
      %v3565 = vrot.slane %v2871, 2
      %v3566 = vsel %vm1076, %v3563, %v3565
      %v3567 = vrot.slane %v2872, 2
      %v3568 = vrot.slane %v2873, 2
      %v3569 = vsel %vm1076, %v3567, %v3568
      %v3570 = vrot.slane %v2874, 2
      %v3571 = vsel %vm1076, %v3568, %v3570
      %v3572 = vrot.slane %v2875, 2
      %v3573 = vrot.slane %v2876, 2
      %v3574 = vsel %vm1076, %v3572, %v3573
      %v3575 = vrot.slane %v2877, 2
      %v3576 = vsel %vm1076, %v3573, %v3575
      %v3577 = vrot.slane %v2878, 2
      %v3578 = vrot.slane %v2879, 2
      %v3579 = vsel %vm1076, %v3577, %v3578
      %v3580 = vrot.slane %v2880, 2
      %v3581 = vsel %vm1076, %v3578, %v3580
      %v3582 = vrot.slane %v2881, 2
      %v3583 = vrot.slane %v2882, 2
      %v3584 = vsel %vm1076, %v3582, %v3583
      %v3585 = vrot.slane %v2883, 2
      %v3586 = vsel %vm1076, %v3583, %v3585
      %v3587 = vrot.slane %v2884, 2
      %v3588 = vrot.slane %v2885, 2
      %v3589 = vsel %vm1076, %v3587, %v3588
      %v3590 = vrot.slane %v2886, 2
      %v3591 = vsel %vm1076, %v3588, %v3590
      %v3624 = vpack.c.bf16 %v3516, %v3514
      %v3625 = vpack.c.bf16 %v3521, %v3519
      %v3626 = vpack.c.bf16 %v3526, %v3524
      %v3627 = vpack.c.bf16 %v3531, %v3529
      %v3628 = vpack.c.bf16 %v3536, %v3534
      %v3629 = vpack.c.bf16 %v3541, %v3539
      %v3630 = vpack.c.bf16 %v3546, %v3544
      %v3631 = vpack.c.bf16 %v3551, %v3549
      %v3632 = vpack.c.bf16 %v3556, %v3554
      %v3633 = vpack.c.bf16 %v3561, %v3559
      %v3634 = vpack.c.bf16 %v3566, %v3564
      %v3635 = vpack.c.bf16 %v3571, %v3569
      %v3636 = vpack.c.bf16 %v3576, %v3574
      %v3637 = vpack.c.bf16 %v3581, %v3579
      %v3638 = vpack.c.bf16 %v3586, %v3584
      %v3639 = vpack.c.bf16 %v3591, %v3589
      %s3640 = scalar_lea.vmem %s2, 8
      %v3641 = vld [vmem:[%s3640] sm:$0xf]
      %v3643 = vsel %vm312, %v3624, 0
      %v3646 = vsel %vm312, %v3625, 0
      %v3649 = vsel %vm312, %v3626, 0
      %v3652 = vsel %vm312, %v3627, 0
      %v3655 = vsel %vm312, %v3628, 0
      %v3658 = vsel %vm312, %v3629, 0
      %v3661 = vsel %vm312, %v3630, 0
      %v3664 = vsel %vm312, %v3631, 0
      %v3667 = vsel %vm312, %v3632, 0
      %v3670 = vsel %vm312, %v3633, 0
      %v3673 = vsel %vm312, %v3634, 0
      %v3676 = vsel %vm312, %v3635, 0
      %v3679 = vsel %vm312, %v3636, 0
      %v3682 = vsel %vm312, %v3637, 0
      %v3685 = vsel %vm312, %v3638, 0
      %v3688 = vsel %vm312, %v3639, 0
      %v3691 = vsel %vm699, %v3641, 0
      %3693 = vmatprep.subr.bf16.mxu0 0
      %3694 = vmatpush1.bf16.msra.mxu0 0
      %3695 = vmatprep.subr.bf16.mxu0 0
      %3696 = vmatpush1.bf16.msra.mxu0 0
      %3697 = vmatprep.subr.bf16.mxu0 0
      %3698 = vmatpush1.bf16.msra.mxu0 0
      %3699 = vmatprep.subr.bf16.mxu0 0
      %3700 = vmatpush1.bf16.msra.mxu0 0
      %3701 = vmatprep.subr.bf16.mxu0 0
      %3702 = vmatpush1.bf16.msra.mxu0 0
      %3703 = vmatprep.subr.bf16.mxu0 0
      %3704 = vmatpush1.bf16.msra.mxu0 0
      %3705 = vmatprep.subr.bf16.mxu0 0
      %3706 = vmatpush1.bf16.msra.mxu0 0
      %3707 = vmatprep.subr.bf16.mxu0 0
      %3708 = vmatpush1.bf16.msra.mxu0 %v3691
      %3709 = vmatprep.subr.bf16.mxu0 0
      %3710 = vmatpush2.bf16.msra.mxu0 0
      %3711 = vmatprep.subr.bf16.mxu0 0
      %3712 = vmatpush2.bf16.msra.mxu0 0
      %3713 = vmatprep.subr.bf16.mxu0 0
      %3714 = vmatpush2.bf16.msra.mxu0 0
      %3715 = vmatprep.subr.bf16.mxu0 0
      %3716 = vmatpush2.bf16.msra.mxu0 0
      %3717 = vmatprep.subr.bf16.mxu0 0
      %3718 = vmatpush2.bf16.msra.mxu0 0
      %3719 = vmatprep.subr.bf16.mxu0 0
      %3720 = vmatpush2.bf16.msra.mxu0 0
      %3721 = vmatprep.subr.bf16.mxu0 0
      %3722 = vmatpush2.bf16.msra.mxu0 0
      %3723 = vmatprep.subr.bf16.mxu0 0
      %3724 = vmatpush2.bf16.msra.mxu0 0
      %3725 = vmatprep.mubr.bf16.mxu0 0
      %3726 = vmatmul.mubr.bf16.gmra.mxu0 %v3643
      %v3727 = vpop.f32.mrf.mxu0
      %v3728 = vadd.f32 0.0, %v3727
      %v3729 = vpop.f32.mrf.mxu0
      %v3730 = vpop.f32.mrf.mxu0
      %v3731 = vadd.f32 0.0, %v3730
      %v3732 = vpop.f32.mrf.mxu0
      %3733 = vmatprep.mubr.bf16.mxu0 0
      %3734 = vmatmul.mubr.bf16.gmra.mxu0 %v3646
      %v3735 = vpop.f32.mrf.mxu0
      %v3736 = vadd.f32 0.0, %v3735
      %v3737 = vpop.f32.mrf.mxu0
      %v3738 = vpop.f32.mrf.mxu0
      %v3739 = vadd.f32 0.0, %v3738
      %v3740 = vpop.f32.mrf.mxu0
      %3741 = vmatprep.mubr.bf16.mxu0 0
      %3742 = vmatmul.mubr.bf16.gmra.mxu0 %v3649
      %v3743 = vpop.f32.mrf.mxu0
      %v3744 = vadd.f32 0.0, %v3743
      %v3745 = vpop.f32.mrf.mxu0
      %v3746 = vpop.f32.mrf.mxu0
      %v3747 = vadd.f32 0.0, %v3746
      %v3748 = vpop.f32.mrf.mxu0
      %3749 = vmatprep.mubr.bf16.mxu0 0
      %3750 = vmatmul.mubr.bf16.gmra.mxu0 %v3652
      %v3751 = vpop.f32.mrf.mxu0
      %v3752 = vadd.f32 0.0, %v3751
      %v3753 = vpop.f32.mrf.mxu0
      %v3754 = vpop.f32.mrf.mxu0
      %v3755 = vadd.f32 0.0, %v3754
      %v3756 = vpop.f32.mrf.mxu0
      %3757 = vmatprep.mubr.bf16.mxu0 0
      %3758 = vmatmul.mubr.bf16.gmra.mxu0 %v3655
      %v3759 = vpop.f32.mrf.mxu0
      %v3760 = vadd.f32 0.0, %v3759
      %v3761 = vpop.f32.mrf.mxu0
      %v3762 = vpop.f32.mrf.mxu0
      %v3763 = vadd.f32 0.0, %v3762
      %v3764 = vpop.f32.mrf.mxu0
      %3765 = vmatprep.mubr.bf16.mxu0 0
      %3766 = vmatmul.mubr.bf16.gmra.mxu0 %v3658
      %v3767 = vpop.f32.mrf.mxu0
      %v3768 = vadd.f32 0.0, %v3767
      %v3769 = vpop.f32.mrf.mxu0
      %v3770 = vpop.f32.mrf.mxu0
      %v3771 = vadd.f32 0.0, %v3770
      %v3772 = vpop.f32.mrf.mxu0
      %3773 = vmatprep.mubr.bf16.mxu0 0
      %3774 = vmatmul.mubr.bf16.gmra.mxu0 %v3661
      %v3775 = vpop.f32.mrf.mxu0
      %v3776 = vadd.f32 0.0, %v3775
      %v3777 = vpop.f32.mrf.mxu0
      %v3778 = vpop.f32.mrf.mxu0
      %v3779 = vadd.f32 0.0, %v3778
      %v3780 = vpop.f32.mrf.mxu0
      %3781 = vmatprep.mubr.bf16.mxu0 0
      %3782 = vmatmul.mubr.bf16.gmra.mxu0 %v3664
      %v3783 = vpop.f32.mrf.mxu0
      %v3784 = vadd.f32 0.0, %v3783
      %v3785 = vpop.f32.mrf.mxu0
      %v3786 = vpop.f32.mrf.mxu0
      %v3787 = vadd.f32 0.0, %v3786
      %v3788 = vpop.f32.mrf.mxu0
      %3789 = vmatprep.mubr.bf16.mxu0 0
      %3790 = vmatmul.mubr.bf16.gmra.mxu0 %v3667
      %v3791 = vpop.f32.mrf.mxu0
      %v3792 = vadd.f32 0.0, %v3791
      %v3793 = vpop.f32.mrf.mxu0
      %v3794 = vpop.f32.mrf.mxu0
      %v3795 = vadd.f32 0.0, %v3794
      %v3796 = vpop.f32.mrf.mxu0
      %3797 = vmatprep.mubr.bf16.mxu0 0
      %3798 = vmatmul.mubr.bf16.gmra.mxu0 %v3670
      %v3799 = vpop.f32.mrf.mxu0
      %v3800 = vadd.f32 0.0, %v3799
      %v3801 = vpop.f32.mrf.mxu0
      %v3802 = vpop.f32.mrf.mxu0
      %v3803 = vadd.f32 0.0, %v3802
      %v3804 = vpop.f32.mrf.mxu0
      %3805 = vmatprep.mubr.bf16.mxu0 0
      %3806 = vmatmul.mubr.bf16.gmra.mxu0 %v3673
      %v3807 = vpop.f32.mrf.mxu0
      %v3808 = vadd.f32 0.0, %v3807
      %v3809 = vpop.f32.mrf.mxu0
      %v3810 = vpop.f32.mrf.mxu0
      %v3811 = vadd.f32 0.0, %v3810
      %v3812 = vpop.f32.mrf.mxu0
      %3813 = vmatprep.mubr.bf16.mxu0 0
      %3814 = vmatmul.mubr.bf16.gmra.mxu0 %v3676
      %v3815 = vpop.f32.mrf.mxu0
      %v3816 = vadd.f32 0.0, %v3815
      %v3817 = vpop.f32.mrf.mxu0
      %v3818 = vpop.f32.mrf.mxu0
      %v3819 = vadd.f32 0.0, %v3818
      %v3820 = vpop.f32.mrf.mxu0
      %3821 = vmatprep.mubr.bf16.mxu0 0
      %3822 = vmatmul.mubr.bf16.gmra.mxu0 %v3679
      %v3823 = vpop.f32.mrf.mxu0
      %v3824 = vadd.f32 0.0, %v3823
      %v3825 = vpop.f32.mrf.mxu0
      %v3826 = vpop.f32.mrf.mxu0
      %v3827 = vadd.f32 0.0, %v3826
      %v3828 = vpop.f32.mrf.mxu0
      %3829 = vmatprep.mubr.bf16.mxu0 0
      %3830 = vmatmul.mubr.bf16.gmra.mxu0 %v3682
      %v3831 = vpop.f32.mrf.mxu0
      %v3832 = vadd.f32 0.0, %v3831
      %v3833 = vpop.f32.mrf.mxu0
      %v3834 = vpop.f32.mrf.mxu0
      %v3835 = vadd.f32 0.0, %v3834
      %v3836 = vpop.f32.mrf.mxu0
      %3837 = vmatprep.mubr.bf16.mxu0 0
      %3838 = vmatmul.mubr.bf16.gmra.mxu0 %v3685
      %v3839 = vpop.f32.mrf.mxu0
      %v3840 = vadd.f32 0.0, %v3839
      %v3841 = vpop.f32.mrf.mxu0
      %v3842 = vpop.f32.mrf.mxu0
      %v3843 = vadd.f32 0.0, %v3842
      %v3844 = vpop.f32.mrf.mxu0
      %3845 = vmatprep.mubr.bf16.mxu0 0
      %3846 = vmatmul.mubr.bf16.gmra.mxu0 %v3688
      %v3847 = vpop.f32.mrf.mxu0
      %v3848 = vadd.f32 0.0, %v3847
      %v3849 = vpop.f32.mrf.mxu0
      %v3850 = vpop.f32.mrf.mxu0
      %v3851 = vadd.f32 0.0, %v3850
      %v3852 = vpop.f32.mrf.mxu0
      %3853 = vdwg.mxu0
      %v3854 = vadd.f32 %v3386, %v3728
      %v3855 = vadd.f32 %v3389, %v3731
      %v3856 = vadd.f32 %v3394, %v3736
      %v3857 = vadd.f32 %v3397, %v3739
      %v3858 = vadd.f32 %v3402, %v3744
      %v3859 = vadd.f32 %v3405, %v3747
      %v3860 = vadd.f32 %v3410, %v3752
      %v3861 = vadd.f32 %v3413, %v3755
      %v3862 = vadd.f32 %v3418, %v3760
      %v3863 = vadd.f32 %v3421, %v3763
      %v3864 = vadd.f32 %v3426, %v3768
      %v3865 = vadd.f32 %v3429, %v3771
      %v3866 = vadd.f32 %v3434, %v3776
      %v3867 = vadd.f32 %v3437, %v3779
      %v3868 = vadd.f32 %v3442, %v3784
      %v3869 = vadd.f32 %v3445, %v3787
      %v3870 = vadd.f32 %v3450, %v3792
      %v3871 = vadd.f32 %v3453, %v3795
      %v3872 = vadd.f32 %v3458, %v3800
      %v3873 = vadd.f32 %v3461, %v3803
      %v3874 = vadd.f32 %v3466, %v3808
      %v3875 = vadd.f32 %v3469, %v3811
      %v3876 = vadd.f32 %v3474, %v3816
      %v3877 = vadd.f32 %v3477, %v3819
      %v3878 = vadd.f32 %v3482, %v3824
      %v3879 = vadd.f32 %v3485, %v3827
      %v3880 = vadd.f32 %v3490, %v3832
      %v3881 = vadd.f32 %v3493, %v3835
      %v3882 = vadd.f32 %v3498, %v3840
      %v3883 = vadd.f32 %v3501, %v3843
      %v3884 = vadd.f32 %v3506, %v3848
      %v3885 = vadd.f32 %v3509, %v3851
      %v3886 = vpack.c.bf16 %v2888, %v2887
      %s3887 = scalar_lea.vmem %s2, 12
      %v3888 = vld [vmem:[%s3887] sm:$0xf]
      %v3890 = vsel %vm312, %v3886, 0
      %v3893 = vsel %vm699, %v3888, 0
      %3895 = vmatprep.subr.bf16.mxu0 0
      %3896 = vmatpush1.bf16.msra.mxu0 0
      %3897 = vmatprep.subr.bf16.mxu0 0
      %3898 = vmatpush1.bf16.msra.mxu0 0
      %3899 = vmatprep.subr.bf16.mxu0 0
      %3900 = vmatpush1.bf16.msra.mxu0 0
      %3901 = vmatprep.subr.bf16.mxu0 0
      %3902 = vmatpush1.bf16.msra.mxu0 0
      %3903 = vmatprep.subr.bf16.mxu0 0
      %3904 = vmatpush1.bf16.msra.mxu0 0
      %3905 = vmatprep.subr.bf16.mxu0 0
      %3906 = vmatpush1.bf16.msra.mxu0 0
      %3907 = vmatprep.subr.bf16.mxu0 0
      %3908 = vmatpush1.bf16.msra.mxu0 0
      %3909 = vmatprep.subr.bf16.mxu0 0
      %3910 = vmatpush1.bf16.msra.mxu0 %v3893
      %3911 = vmatprep.subr.bf16.mxu0 0
      %3912 = vmatpush2.bf16.msra.mxu0 0
      %3913 = vmatprep.subr.bf16.mxu0 0
      %3914 = vmatpush2.bf16.msra.mxu0 0
      %3915 = vmatprep.subr.bf16.mxu0 0
      %3916 = vmatpush2.bf16.msra.mxu0 0
      %3917 = vmatprep.subr.bf16.mxu0 0
      %3918 = vmatpush2.bf16.msra.mxu0 0
      %3919 = vmatprep.subr.bf16.mxu0 0
      %3920 = vmatpush2.bf16.msra.mxu0 0
      %3921 = vmatprep.subr.bf16.mxu0 0
      %3922 = vmatpush2.bf16.msra.mxu0 0
      %3923 = vmatprep.subr.bf16.mxu0 0
      %3924 = vmatpush2.bf16.msra.mxu0 0
      %3925 = vmatprep.subr.bf16.mxu0 0
      %3926 = vmatpush2.bf16.msra.mxu0 0
      %3927 = vmatprep.mubr.bf16.mxu0 0
      %3928 = vmatmul.mubr.bf16.gmra.mxu0 %v3304
      %v3929 = vpop.f32.mrf.mxu0
      %v3930 = vadd.f32 0.0, %v3929
      %v3931 = vpop.f32.mrf.mxu0
      %v3932 = vpop.f32.mrf.mxu0
      %v3933 = vadd.f32 0.0, %v3932
      %v3934 = vpop.f32.mrf.mxu0
      %3935 = vmatprep.mubr.bf16.mxu0 0
      %3936 = vmatmul.mubr.bf16.gmra.mxu0 %v3307
      %v3937 = vpop.f32.mrf.mxu0
      %v3938 = vadd.f32 0.0, %v3937
      %v3939 = vpop.f32.mrf.mxu0
      %v3940 = vpop.f32.mrf.mxu0
      %v3941 = vadd.f32 0.0, %v3940
      %v3942 = vpop.f32.mrf.mxu0
      %3943 = vmatprep.mubr.bf16.mxu0 0
      %3944 = vmatmul.mubr.bf16.gmra.mxu0 %v3310
      %v3945 = vpop.f32.mrf.mxu0
      %v3946 = vadd.f32 0.0, %v3945
      %v3947 = vpop.f32.mrf.mxu0
      %v3948 = vpop.f32.mrf.mxu0
      %v3949 = vadd.f32 0.0, %v3948
      %v3950 = vpop.f32.mrf.mxu0
      %3951 = vmatprep.mubr.bf16.mxu0 0
      %3952 = vmatmul.mubr.bf16.gmra.mxu0 %v3313
      %v3953 = vpop.f32.mrf.mxu0
      %v3954 = vadd.f32 0.0, %v3953
      %v3955 = vpop.f32.mrf.mxu0
      %v3956 = vpop.f32.mrf.mxu0
      %v3957 = vadd.f32 0.0, %v3956
      %v3958 = vpop.f32.mrf.mxu0
      %3959 = vmatprep.mubr.bf16.mxu0 0
      %3960 = vmatmul.mubr.bf16.gmra.mxu0 %v3316
      %v3961 = vpop.f32.mrf.mxu0
      %v3962 = vadd.f32 0.0, %v3961
      %v3963 = vpop.f32.mrf.mxu0
      %v3964 = vpop.f32.mrf.mxu0
      %v3965 = vadd.f32 0.0, %v3964
      %v3966 = vpop.f32.mrf.mxu0
      %3967 = vmatprep.mubr.bf16.mxu0 0
      %3968 = vmatmul.mubr.bf16.gmra.mxu0 %v3319
      %v3969 = vpop.f32.mrf.mxu0
      %v3970 = vadd.f32 0.0, %v3969
      %v3971 = vpop.f32.mrf.mxu0
      %v3972 = vpop.f32.mrf.mxu0
      %v3973 = vadd.f32 0.0, %v3972
      %v3974 = vpop.f32.mrf.mxu0
      %3975 = vmatprep.mubr.bf16.mxu0 0
      %3976 = vmatmul.mubr.bf16.gmra.mxu0 %v3322
      %v3977 = vpop.f32.mrf.mxu0
      %v3978 = vadd.f32 0.0, %v3977
      %v3979 = vpop.f32.mrf.mxu0
      %v3980 = vpop.f32.mrf.mxu0
      %v3981 = vadd.f32 0.0, %v3980
      %v3982 = vpop.f32.mrf.mxu0
      %3983 = vmatprep.mubr.bf16.mxu0 0
      %3984 = vmatmul.mubr.bf16.gmra.mxu0 %v3325
      %v3985 = vpop.f32.mrf.mxu0
      %v3986 = vadd.f32 0.0, %v3985
      %v3987 = vpop.f32.mrf.mxu0
      %v3988 = vpop.f32.mrf.mxu0
      %v3989 = vadd.f32 0.0, %v3988
      %v3990 = vpop.f32.mrf.mxu0
      %3991 = vmatprep.mubr.bf16.mxu0 0
      %3992 = vmatmul.mubr.bf16.gmra.mxu0 %v3328
      %v3993 = vpop.f32.mrf.mxu0
      %v3994 = vadd.f32 0.0, %v3993
      %v3995 = vpop.f32.mrf.mxu0
      %v3996 = vpop.f32.mrf.mxu0
      %v3997 = vadd.f32 0.0, %v3996
      %v3998 = vpop.f32.mrf.mxu0
      %3999 = vmatprep.mubr.bf16.mxu0 0
      %4000 = vmatmul.mubr.bf16.gmra.mxu0 %v3331
      %v4001 = vpop.f32.mrf.mxu0
      %v4002 = vadd.f32 0.0, %v4001
      %v4003 = vpop.f32.mrf.mxu0
      %v4004 = vpop.f32.mrf.mxu0
      %v4005 = vadd.f32 0.0, %v4004
      %v4006 = vpop.f32.mrf.mxu0
      %4007 = vmatprep.mubr.bf16.mxu0 0
      %4008 = vmatmul.mubr.bf16.gmra.mxu0 %v3334
      %v4009 = vpop.f32.mrf.mxu0
      %v4010 = vadd.f32 0.0, %v4009
      %v4011 = vpop.f32.mrf.mxu0
      %v4012 = vpop.f32.mrf.mxu0
      %v4013 = vadd.f32 0.0, %v4012
      %v4014 = vpop.f32.mrf.mxu0
      %4015 = vmatprep.mubr.bf16.mxu0 0
      %4016 = vmatmul.mubr.bf16.gmra.mxu0 %v3337
      %v4017 = vpop.f32.mrf.mxu0
      %v4018 = vadd.f32 0.0, %v4017
      %v4019 = vpop.f32.mrf.mxu0
      %v4020 = vpop.f32.mrf.mxu0
      %v4021 = vadd.f32 0.0, %v4020
      %v4022 = vpop.f32.mrf.mxu0
      %4023 = vmatprep.mubr.bf16.mxu0 0
      %4024 = vmatmul.mubr.bf16.gmra.mxu0 %v3340
      %v4025 = vpop.f32.mrf.mxu0
      %v4026 = vadd.f32 0.0, %v4025
      %v4027 = vpop.f32.mrf.mxu0
      %v4028 = vpop.f32.mrf.mxu0
      %v4029 = vadd.f32 0.0, %v4028
      %v4030 = vpop.f32.mrf.mxu0
      %4031 = vmatprep.mubr.bf16.mxu0 0
      %4032 = vmatmul.mubr.bf16.gmra.mxu0 %v3343
      %v4033 = vpop.f32.mrf.mxu0
      %v4034 = vadd.f32 0.0, %v4033
      %v4035 = vpop.f32.mrf.mxu0
      %v4036 = vpop.f32.mrf.mxu0
      %v4037 = vadd.f32 0.0, %v4036
      %v4038 = vpop.f32.mrf.mxu0
      %4039 = vmatprep.mubr.bf16.mxu0 0
      %4040 = vmatmul.mubr.bf16.gmra.mxu0 %v3346
      %v4041 = vpop.f32.mrf.mxu0
      %v4042 = vadd.f32 0.0, %v4041
      %v4043 = vpop.f32.mrf.mxu0
      %v4044 = vpop.f32.mrf.mxu0
      %v4045 = vadd.f32 0.0, %v4044
      %v4046 = vpop.f32.mrf.mxu0
      %4047 = vmatprep.mubr.bf16.mxu0 0
      %4048 = vmatmul.mubr.bf16.gmra.mxu0 %v3890
      %v4049 = vpop.f32.mrf.mxu0
      %v4050 = vadd.f32 0.0, %v4049
      %v4051 = vpop.f32.mrf.mxu0
      %v4052 = vpop.f32.mrf.mxu0
      %v4053 = vadd.f32 0.0, %v4052
      %v4054 = vpop.f32.mrf.mxu0
      %4055 = vdwg.mxu0
      %v4056 = vadd.f32 %v3854, %v3930
      %v4057 = vadd.f32 %v3855, %v3933
      %v4058 = vadd.f32 %v3856, %v3938
      %v4059 = vadd.f32 %v3857, %v3941
      %v4060 = vadd.f32 %v3858, %v3946
      %v4061 = vadd.f32 %v3859, %v3949
      %v4062 = vadd.f32 %v3860, %v3954
      %v4063 = vadd.f32 %v3861, %v3957
      %v4064 = vadd.f32 %v3862, %v3962
      %v4065 = vadd.f32 %v3863, %v3965
      %v4066 = vadd.f32 %v3864, %v3970
      %v4067 = vadd.f32 %v3865, %v3973
      %v4068 = vadd.f32 %v3866, %v3978
      %v4069 = vadd.f32 %v3867, %v3981
      %v4070 = vadd.f32 %v3868, %v3986
      %v4071 = vadd.f32 %v3869, %v3989
      %v4072 = vadd.f32 %v3870, %v3994
      %v4073 = vadd.f32 %v3871, %v3997
      %v4074 = vadd.f32 %v3872, %v4002
      %v4075 = vadd.f32 %v3873, %v4005
      %v4076 = vadd.f32 %v3874, %v4010
      %v4077 = vadd.f32 %v3875, %v4013
      %v4078 = vadd.f32 %v3876, %v4018
      %v4079 = vadd.f32 %v3877, %v4021
      %v4080 = vadd.f32 %v3878, %v4026
      %v4081 = vadd.f32 %v3879, %v4029
      %v4082 = vadd.f32 %v3880, %v4034
      %v4083 = vadd.f32 %v3881, %v4037
      %v4084 = vadd.f32 %v3882, %v4042
      %v4085 = vadd.f32 %v3883, %v4045
      %v4086 = vadd.f32 %v3884, %v4050
      %v4087 = vadd.f32 %v3885, %v4053
      %v4091 = vrot.slane %v2887, 1
      %v4092 = vrot.slane %v2888, 1
      %v4093 = vsel %vm520, %v4091, %v4092
      %v4094 = vrot.slane %v2889, 1
      %v4095 = vsel %vm520, %v4092, %v4094
      %v4098 = vpack.c.bf16 %v4095, %v4093
      %s4099 = scalar_lea.vmem %s2, 16
      %v4100 = vld [vmem:[%s4099] sm:$0xf]
      %v4102 = vsel %vm312, %v4098, 0
      %v4105 = vsel %vm699, %v4100, 0
      %4107 = vmatprep.subr.bf16.mxu0 0
      %4108 = vmatpush1.bf16.msra.mxu0 0
      %4109 = vmatprep.subr.bf16.mxu0 0
      %4110 = vmatpush1.bf16.msra.mxu0 0
      %4111 = vmatprep.subr.bf16.mxu0 0
      %4112 = vmatpush1.bf16.msra.mxu0 0
      %4113 = vmatprep.subr.bf16.mxu0 0
      %4114 = vmatpush1.bf16.msra.mxu0 0
      %4115 = vmatprep.subr.bf16.mxu0 0
      %4116 = vmatpush1.bf16.msra.mxu0 0
      %4117 = vmatprep.subr.bf16.mxu0 0
      %4118 = vmatpush1.bf16.msra.mxu0 0
      %4119 = vmatprep.subr.bf16.mxu0 0
      %4120 = vmatpush1.bf16.msra.mxu0 0
      %4121 = vmatprep.subr.bf16.mxu0 0
      %4122 = vmatpush1.bf16.msra.mxu0 %v4105
      %4123 = vmatprep.subr.bf16.mxu0 0
      %4124 = vmatpush2.bf16.msra.mxu0 0
      %4125 = vmatprep.subr.bf16.mxu0 0
      %4126 = vmatpush2.bf16.msra.mxu0 0
      %4127 = vmatprep.subr.bf16.mxu0 0
      %4128 = vmatpush2.bf16.msra.mxu0 0
      %4129 = vmatprep.subr.bf16.mxu0 0
      %4130 = vmatpush2.bf16.msra.mxu0 0
      %4131 = vmatprep.subr.bf16.mxu0 0
      %4132 = vmatpush2.bf16.msra.mxu0 0
      %4133 = vmatprep.subr.bf16.mxu0 0
      %4134 = vmatpush2.bf16.msra.mxu0 0
      %4135 = vmatprep.subr.bf16.mxu0 0
      %4136 = vmatpush2.bf16.msra.mxu0 0
      %4137 = vmatprep.subr.bf16.mxu0 0
      %4138 = vmatpush2.bf16.msra.mxu0 0
      %4139 = vmatprep.mubr.bf16.mxu0 0
      %4140 = vmatmul.mubr.bf16.gmra.mxu0 %v3092
      %v4141 = vpop.f32.mrf.mxu0
      %v4142 = vadd.f32 0.0, %v4141
      %v4143 = vpop.f32.mrf.mxu0
      %v4144 = vpop.f32.mrf.mxu0
      %v4145 = vadd.f32 0.0, %v4144
      %v4146 = vpop.f32.mrf.mxu0
      %4147 = vmatprep.mubr.bf16.mxu0 0
      %4148 = vmatmul.mubr.bf16.gmra.mxu0 %v3095
      %v4149 = vpop.f32.mrf.mxu0
      %v4150 = vadd.f32 0.0, %v4149
      %v4151 = vpop.f32.mrf.mxu0
      %v4152 = vpop.f32.mrf.mxu0
      %v4153 = vadd.f32 0.0, %v4152
      %v4154 = vpop.f32.mrf.mxu0
      %4155 = vmatprep.mubr.bf16.mxu0 0
      %4156 = vmatmul.mubr.bf16.gmra.mxu0 %v3098
      %v4157 = vpop.f32.mrf.mxu0
      %v4158 = vadd.f32 0.0, %v4157
      %v4159 = vpop.f32.mrf.mxu0
      %v4160 = vpop.f32.mrf.mxu0
      %v4161 = vadd.f32 0.0, %v4160
      %v4162 = vpop.f32.mrf.mxu0
      %4163 = vmatprep.mubr.bf16.mxu0 0
      %4164 = vmatmul.mubr.bf16.gmra.mxu0 %v3101
      %v4165 = vpop.f32.mrf.mxu0
      %v4166 = vadd.f32 0.0, %v4165
      %v4167 = vpop.f32.mrf.mxu0
      %v4168 = vpop.f32.mrf.mxu0
      %v4169 = vadd.f32 0.0, %v4168
      %v4170 = vpop.f32.mrf.mxu0
      %4171 = vmatprep.mubr.bf16.mxu0 0
      %4172 = vmatmul.mubr.bf16.gmra.mxu0 %v3104
      %v4173 = vpop.f32.mrf.mxu0
      %v4174 = vadd.f32 0.0, %v4173
      %v4175 = vpop.f32.mrf.mxu0
      %v4176 = vpop.f32.mrf.mxu0
      %v4177 = vadd.f32 0.0, %v4176
      %v4178 = vpop.f32.mrf.mxu0
      %4179 = vmatprep.mubr.bf16.mxu0 0
      %4180 = vmatmul.mubr.bf16.gmra.mxu0 %v3107
      %v4181 = vpop.f32.mrf.mxu0
      %v4182 = vadd.f32 0.0, %v4181
      %v4183 = vpop.f32.mrf.mxu0
      %v4184 = vpop.f32.mrf.mxu0
      %v4185 = vadd.f32 0.0, %v4184
      %v4186 = vpop.f32.mrf.mxu0
      %4187 = vmatprep.mubr.bf16.mxu0 0
      %4188 = vmatmul.mubr.bf16.gmra.mxu0 %v3110
      %v4189 = vpop.f32.mrf.mxu0
      %v4190 = vadd.f32 0.0, %v4189
      %v4191 = vpop.f32.mrf.mxu0
      %v4192 = vpop.f32.mrf.mxu0
      %v4193 = vadd.f32 0.0, %v4192
      %v4194 = vpop.f32.mrf.mxu0
      %4195 = vmatprep.mubr.bf16.mxu0 0
      %4196 = vmatmul.mubr.bf16.gmra.mxu0 %v3113
      %v4197 = vpop.f32.mrf.mxu0
      %v4198 = vadd.f32 0.0, %v4197
      %v4199 = vpop.f32.mrf.mxu0
      %v4200 = vpop.f32.mrf.mxu0
      %v4201 = vadd.f32 0.0, %v4200
      %v4202 = vpop.f32.mrf.mxu0
      %4203 = vmatprep.mubr.bf16.mxu0 0
      %4204 = vmatmul.mubr.bf16.gmra.mxu0 %v3116
      %v4205 = vpop.f32.mrf.mxu0
      %v4206 = vadd.f32 0.0, %v4205
      %v4207 = vpop.f32.mrf.mxu0
      %v4208 = vpop.f32.mrf.mxu0
      %v4209 = vadd.f32 0.0, %v4208
      %v4210 = vpop.f32.mrf.mxu0
      %4211 = vmatprep.mubr.bf16.mxu0 0
      %4212 = vmatmul.mubr.bf16.gmra.mxu0 %v3119
      %v4213 = vpop.f32.mrf.mxu0
      %v4214 = vadd.f32 0.0, %v4213
      %v4215 = vpop.f32.mrf.mxu0
      %v4216 = vpop.f32.mrf.mxu0
      %v4217 = vadd.f32 0.0, %v4216
      %v4218 = vpop.f32.mrf.mxu0
      %4219 = vmatprep.mubr.bf16.mxu0 0
      %4220 = vmatmul.mubr.bf16.gmra.mxu0 %v3122
      %v4221 = vpop.f32.mrf.mxu0
      %v4222 = vadd.f32 0.0, %v4221
      %v4223 = vpop.f32.mrf.mxu0
      %v4224 = vpop.f32.mrf.mxu0
      %v4225 = vadd.f32 0.0, %v4224
      %v4226 = vpop.f32.mrf.mxu0
      %4227 = vmatprep.mubr.bf16.mxu0 0
      %4228 = vmatmul.mubr.bf16.gmra.mxu0 %v3125
      %v4229 = vpop.f32.mrf.mxu0
      %v4230 = vadd.f32 0.0, %v4229
      %v4231 = vpop.f32.mrf.mxu0
      %v4232 = vpop.f32.mrf.mxu0
      %v4233 = vadd.f32 0.0, %v4232
      %v4234 = vpop.f32.mrf.mxu0
      %4235 = vmatprep.mubr.bf16.mxu0 0
      %4236 = vmatmul.mubr.bf16.gmra.mxu0 %v3128
      %v4237 = vpop.f32.mrf.mxu0
      %v4238 = vadd.f32 0.0, %v4237
      %v4239 = vpop.f32.mrf.mxu0
      %v4240 = vpop.f32.mrf.mxu0
      %v4241 = vadd.f32 0.0, %v4240
      %v4242 = vpop.f32.mrf.mxu0
      %4243 = vmatprep.mubr.bf16.mxu0 0
      %4244 = vmatmul.mubr.bf16.gmra.mxu0 %v3131
      %v4245 = vpop.f32.mrf.mxu0
      %v4246 = vadd.f32 0.0, %v4245
      %v4247 = vpop.f32.mrf.mxu0
      %v4248 = vpop.f32.mrf.mxu0
      %v4249 = vadd.f32 0.0, %v4248
      %v4250 = vpop.f32.mrf.mxu0
      %4251 = vmatprep.mubr.bf16.mxu0 0
      %4252 = vmatmul.mubr.bf16.gmra.mxu0 %v3134
      %v4253 = vpop.f32.mrf.mxu0
      %v4254 = vadd.f32 0.0, %v4253
      %v4255 = vpop.f32.mrf.mxu0
      %v4256 = vpop.f32.mrf.mxu0
      %v4257 = vadd.f32 0.0, %v4256
      %v4258 = vpop.f32.mrf.mxu0
      %4259 = vmatprep.mubr.bf16.mxu0 0
      %4260 = vmatmul.mubr.bf16.gmra.mxu0 %v4102
      %v4261 = vpop.f32.mrf.mxu0
      %v4262 = vadd.f32 0.0, %v4261
      %v4263 = vpop.f32.mrf.mxu0
      %v4264 = vpop.f32.mrf.mxu0
      %v4265 = vadd.f32 0.0, %v4264
      %v4266 = vpop.f32.mrf.mxu0
      %4267 = vdwg.mxu0
      %v4268 = vadd.f32 %v4056, %v4142
      %v4269 = vadd.f32 %v4057, %v4145
      %v4270 = vadd.f32 %v4058, %v4150
      %v4271 = vadd.f32 %v4059, %v4153
      %v4272 = vadd.f32 %v4060, %v4158
      %v4273 = vadd.f32 %v4061, %v4161
      %v4274 = vadd.f32 %v4062, %v4166
      %v4275 = vadd.f32 %v4063, %v4169
      %v4276 = vadd.f32 %v4064, %v4174
      %v4277 = vadd.f32 %v4065, %v4177
      %v4278 = vadd.f32 %v4066, %v4182
      %v4279 = vadd.f32 %v4067, %v4185
      %v4280 = vadd.f32 %v4068, %v4190
      %v4281 = vadd.f32 %v4069, %v4193
      %v4282 = vadd.f32 %v4070, %v4198
      %v4283 = vadd.f32 %v4071, %v4201
      %v4284 = vadd.f32 %v4072, %v4206
      %v4285 = vadd.f32 %v4073, %v4209
      %v4286 = vadd.f32 %v4074, %v4214
      %v4287 = vadd.f32 %v4075, %v4217
      %v4288 = vadd.f32 %v4076, %v4222
      %v4289 = vadd.f32 %v4077, %v4225
      %v4290 = vadd.f32 %v4078, %v4230
      %v4291 = vadd.f32 %v4079, %v4233
      %v4292 = vadd.f32 %v4080, %v4238
      %v4293 = vadd.f32 %v4081, %v4241
      %v4294 = vadd.f32 %v4082, %v4246
      %v4295 = vadd.f32 %v4083, %v4249
      %v4296 = vadd.f32 %v4084, %v4254
      %v4297 = vadd.f32 %v4085, %v4257
      %v4298 = vadd.f32 %v4086, %v4262
      %v4299 = vadd.f32 %v4087, %v4265
      %v4300 = vrot.slane %v2887, 2
      %v4301 = vrot.slane %v2888, 2
      %v4302 = vsel %vm1076, %v4300, %v4301
      %v4303 = vrot.slane %v2889, 2
      %v4304 = vsel %vm1076, %v4301, %v4303
      %v4307 = vpack.c.bf16 %v4304, %v4302
      %s4308 = scalar_lea.vmem %s2, 20
      %v4309 = vld [vmem:[%s4308] sm:$0xf]
      %v4311 = vsel %vm312, %v4307, 0
      %v4314 = vsel %vm699, %v4309, 0
      %4316 = vmatprep.subr.bf16.mxu0 0
      %4317 = vmatpush1.bf16.msra.mxu0 0
      %4318 = vmatprep.subr.bf16.mxu0 0
      %4319 = vmatpush1.bf16.msra.mxu0 0
      %4320 = vmatprep.subr.bf16.mxu0 0
      %4321 = vmatpush1.bf16.msra.mxu0 0
      %4322 = vmatprep.subr.bf16.mxu0 0
      %4323 = vmatpush1.bf16.msra.mxu0 0
      %4324 = vmatprep.subr.bf16.mxu0 0
      %4325 = vmatpush1.bf16.msra.mxu0 0
      %4326 = vmatprep.subr.bf16.mxu0 0
      %4327 = vmatpush1.bf16.msra.mxu0 0
      %4328 = vmatprep.subr.bf16.mxu0 0
      %4329 = vmatpush1.bf16.msra.mxu0 0
      %4330 = vmatprep.subr.bf16.mxu0 0
      %4331 = vmatpush1.bf16.msra.mxu0 %v4314
      %4332 = vmatprep.subr.bf16.mxu0 0
      %4333 = vmatpush2.bf16.msra.mxu0 0
      %4334 = vmatprep.subr.bf16.mxu0 0
      %4335 = vmatpush2.bf16.msra.mxu0 0
      %4336 = vmatprep.subr.bf16.mxu0 0
      %4337 = vmatpush2.bf16.msra.mxu0 0
      %4338 = vmatprep.subr.bf16.mxu0 0
      %4339 = vmatpush2.bf16.msra.mxu0 0
      %4340 = vmatprep.subr.bf16.mxu0 0
      %4341 = vmatpush2.bf16.msra.mxu0 0
      %4342 = vmatprep.subr.bf16.mxu0 0
      %4343 = vmatpush2.bf16.msra.mxu0 0
      %4344 = vmatprep.subr.bf16.mxu0 0
      %4345 = vmatpush2.bf16.msra.mxu0 0
      %4346 = vmatprep.subr.bf16.mxu0 0
      %4347 = vmatpush2.bf16.msra.mxu0 0
      %4348 = vmatprep.mubr.bf16.mxu0 0
      %4349 = vmatmul.mubr.bf16.gmra.mxu0 %v3646
      %v4350 = vpop.f32.mrf.mxu0
      %v4351 = vadd.f32 0.0, %v4350
      %v4352 = vpop.f32.mrf.mxu0
      %v4353 = vpop.f32.mrf.mxu0
      %v4354 = vadd.f32 0.0, %v4353
      %v4355 = vpop.f32.mrf.mxu0
      %4356 = vmatprep.mubr.bf16.mxu0 0
      %4357 = vmatmul.mubr.bf16.gmra.mxu0 %v3649
      %v4358 = vpop.f32.mrf.mxu0
      %v4359 = vadd.f32 0.0, %v4358
      %v4360 = vpop.f32.mrf.mxu0
      %v4361 = vpop.f32.mrf.mxu0
      %v4362 = vadd.f32 0.0, %v4361
      %v4363 = vpop.f32.mrf.mxu0
      %4364 = vmatprep.mubr.bf16.mxu0 0
      %4365 = vmatmul.mubr.bf16.gmra.mxu0 %v3652
      %v4366 = vpop.f32.mrf.mxu0
      %v4367 = vadd.f32 0.0, %v4366
      %v4368 = vpop.f32.mrf.mxu0
      %v4369 = vpop.f32.mrf.mxu0
      %v4370 = vadd.f32 0.0, %v4369
      %v4371 = vpop.f32.mrf.mxu0
      %4372 = vmatprep.mubr.bf16.mxu0 0
      %4373 = vmatmul.mubr.bf16.gmra.mxu0 %v3655
      %v4374 = vpop.f32.mrf.mxu0
      %v4375 = vadd.f32 0.0, %v4374
      %v4376 = vpop.f32.mrf.mxu0
      %v4377 = vpop.f32.mrf.mxu0
      %v4378 = vadd.f32 0.0, %v4377
      %v4379 = vpop.f32.mrf.mxu0
      %4380 = vmatprep.mubr.bf16.mxu0 0
      %4381 = vmatmul.mubr.bf16.gmra.mxu0 %v3658
      %v4382 = vpop.f32.mrf.mxu0
      %v4383 = vadd.f32 0.0, %v4382
      %v4384 = vpop.f32.mrf.mxu0
      %v4385 = vpop.f32.mrf.mxu0
      %v4386 = vadd.f32 0.0, %v4385
      %v4387 = vpop.f32.mrf.mxu0
      %4388 = vmatprep.mubr.bf16.mxu0 0
      %4389 = vmatmul.mubr.bf16.gmra.mxu0 %v3661
      %v4390 = vpop.f32.mrf.mxu0
      %v4391 = vadd.f32 0.0, %v4390
      %v4392 = vpop.f32.mrf.mxu0
      %v4393 = vpop.f32.mrf.mxu0
      %v4394 = vadd.f32 0.0, %v4393
      %v4395 = vpop.f32.mrf.mxu0
      %4396 = vmatprep.mubr.bf16.mxu0 0
      %4397 = vmatmul.mubr.bf16.gmra.mxu0 %v3664
      %v4398 = vpop.f32.mrf.mxu0
      %v4399 = vadd.f32 0.0, %v4398
      %v4400 = vpop.f32.mrf.mxu0
      %v4401 = vpop.f32.mrf.mxu0
      %v4402 = vadd.f32 0.0, %v4401
      %v4403 = vpop.f32.mrf.mxu0
      %4404 = vmatprep.mubr.bf16.mxu0 0
      %4405 = vmatmul.mubr.bf16.gmra.mxu0 %v3667
      %v4406 = vpop.f32.mrf.mxu0
      %v4407 = vadd.f32 0.0, %v4406
      %v4408 = vpop.f32.mrf.mxu0
      %v4409 = vpop.f32.mrf.mxu0
      %v4410 = vadd.f32 0.0, %v4409
      %v4411 = vpop.f32.mrf.mxu0
      %4412 = vmatprep.mubr.bf16.mxu0 0
      %4413 = vmatmul.mubr.bf16.gmra.mxu0 %v3670
      %v4414 = vpop.f32.mrf.mxu0
      %v4415 = vadd.f32 0.0, %v4414
      %v4416 = vpop.f32.mrf.mxu0
      %v4417 = vpop.f32.mrf.mxu0
      %v4418 = vadd.f32 0.0, %v4417
      %v4419 = vpop.f32.mrf.mxu0
      %4420 = vmatprep.mubr.bf16.mxu0 0
      %4421 = vmatmul.mubr.bf16.gmra.mxu0 %v3673
      %v4422 = vpop.f32.mrf.mxu0
      %v4423 = vadd.f32 0.0, %v4422
      %v4424 = vpop.f32.mrf.mxu0
      %v4425 = vpop.f32.mrf.mxu0
      %v4426 = vadd.f32 0.0, %v4425
      %v4427 = vpop.f32.mrf.mxu0
      %4428 = vmatprep.mubr.bf16.mxu0 0
      %4429 = vmatmul.mubr.bf16.gmra.mxu0 %v3676
      %v4430 = vpop.f32.mrf.mxu0
      %v4431 = vadd.f32 0.0, %v4430
      %v4432 = vpop.f32.mrf.mxu0
      %v4433 = vpop.f32.mrf.mxu0
      %v4434 = vadd.f32 0.0, %v4433
      %v4435 = vpop.f32.mrf.mxu0
      %4436 = vmatprep.mubr.bf16.mxu0 0
      %4437 = vmatmul.mubr.bf16.gmra.mxu0 %v3679
      %v4438 = vpop.f32.mrf.mxu0
      %v4439 = vadd.f32 0.0, %v4438
      %v4440 = vpop.f32.mrf.mxu0
      %v4441 = vpop.f32.mrf.mxu0
      %v4442 = vadd.f32 0.0, %v4441
      %v4443 = vpop.f32.mrf.mxu0
      %4444 = vmatprep.mubr.bf16.mxu0 0
      %4445 = vmatmul.mubr.bf16.gmra.mxu0 %v3682
      %v4446 = vpop.f32.mrf.mxu0
      %v4447 = vadd.f32 0.0, %v4446
      %v4448 = vpop.f32.mrf.mxu0
      %v4449 = vpop.f32.mrf.mxu0
      %v4450 = vadd.f32 0.0, %v4449
      %v4451 = vpop.f32.mrf.mxu0
      %4452 = vmatprep.mubr.bf16.mxu0 0
      %4453 = vmatmul.mubr.bf16.gmra.mxu0 %v3685
      %v4454 = vpop.f32.mrf.mxu0
      %v4455 = vadd.f32 0.0, %v4454
      %v4456 = vpop.f32.mrf.mxu0
      %v4457 = vpop.f32.mrf.mxu0
      %v4458 = vadd.f32 0.0, %v4457
      %v4459 = vpop.f32.mrf.mxu0
      %4460 = vmatprep.mubr.bf16.mxu0 0
      %4461 = vmatmul.mubr.bf16.gmra.mxu0 %v3688
      %v4462 = vpop.f32.mrf.mxu0
      %v4463 = vadd.f32 0.0, %v4462
      %v4464 = vpop.f32.mrf.mxu0
      %v4465 = vpop.f32.mrf.mxu0
      %v4466 = vadd.f32 0.0, %v4465
      %v4467 = vpop.f32.mrf.mxu0
      %4468 = vmatprep.mubr.bf16.mxu0 0
      %4469 = vmatmul.mubr.bf16.gmra.mxu0 %v4311
      %v4470 = vpop.f32.mrf.mxu0
      %v4471 = vadd.f32 0.0, %v4470
      %v4472 = vpop.f32.mrf.mxu0
      %v4473 = vpop.f32.mrf.mxu0
      %v4474 = vadd.f32 0.0, %v4473
      %v4475 = vpop.f32.mrf.mxu0
      %4476 = vdwg.mxu0
      %v4477 = vadd.f32 %v4268, %v4351
      %v4478 = vadd.f32 %v4269, %v4354
      %v4479 = vadd.f32 %v4270, %v4359
      %v4480 = vadd.f32 %v4271, %v4362
      %v4481 = vadd.f32 %v4272, %v4367
      %v4482 = vadd.f32 %v4273, %v4370
      %v4483 = vadd.f32 %v4274, %v4375
      %v4484 = vadd.f32 %v4275, %v4378
      %v4485 = vadd.f32 %v4276, %v4383
      %v4486 = vadd.f32 %v4277, %v4386
      %v4487 = vadd.f32 %v4278, %v4391
      %v4488 = vadd.f32 %v4279, %v4394
      %v4489 = vadd.f32 %v4280, %v4399
      %v4490 = vadd.f32 %v4281, %v4402
      %v4491 = vadd.f32 %v4282, %v4407
      %v4492 = vadd.f32 %v4283, %v4410
      %v4493 = vadd.f32 %v4284, %v4415
      %v4494 = vadd.f32 %v4285, %v4418
      %v4495 = vadd.f32 %v4286, %v4423
      %v4496 = vadd.f32 %v4287, %v4426
      %v4497 = vadd.f32 %v4288, %v4431
      %v4498 = vadd.f32 %v4289, %v4434
      %v4499 = vadd.f32 %v4290, %v4439
      %v4500 = vadd.f32 %v4291, %v4442
      %v4501 = vadd.f32 %v4292, %v4447
      %v4502 = vadd.f32 %v4293, %v4450
      %v4503 = vadd.f32 %v4294, %v4455
      %v4504 = vadd.f32 %v4295, %v4458
      %v4505 = vadd.f32 %v4296, %v4463
      %v4506 = vadd.f32 %v4297, %v4466
      %v4507 = vadd.f32 %v4298, %v4471
      %v4508 = vadd.f32 %v4299, %v4474
      %v4509 = vpack.c.bf16 %v2891, %v2890
      %s4510 = scalar_lea.vmem %s2, 24
      %v4511 = vld [vmem:[%s4510] sm:$0xf]
      %v4513 = vsel %vm312, %v4509, 0
      %v4516 = vsel %vm699, %v4511, 0
      %4518 = vmatprep.subr.bf16.mxu0 0
      %4519 = vmatpush1.bf16.msra.mxu0 0
      %4520 = vmatprep.subr.bf16.mxu0 0
      %4521 = vmatpush1.bf16.msra.mxu0 0
      %4522 = vmatprep.subr.bf16.mxu0 0
      %4523 = vmatpush1.bf16.msra.mxu0 0
      %4524 = vmatprep.subr.bf16.mxu0 0
      %4525 = vmatpush1.bf16.msra.mxu0 0
      %4526 = vmatprep.subr.bf16.mxu0 0
      %4527 = vmatpush1.bf16.msra.mxu0 0
      %4528 = vmatprep.subr.bf16.mxu0 0
      %4529 = vmatpush1.bf16.msra.mxu0 0
      %4530 = vmatprep.subr.bf16.mxu0 0
      %4531 = vmatpush1.bf16.msra.mxu0 0
      %4532 = vmatprep.subr.bf16.mxu0 0
      %4533 = vmatpush1.bf16.msra.mxu0 %v4516
      %4534 = vmatprep.subr.bf16.mxu0 0
      %4535 = vmatpush2.bf16.msra.mxu0 0
      %4536 = vmatprep.subr.bf16.mxu0 0
      %4537 = vmatpush2.bf16.msra.mxu0 0
      %4538 = vmatprep.subr.bf16.mxu0 0
      %4539 = vmatpush2.bf16.msra.mxu0 0
      %4540 = vmatprep.subr.bf16.mxu0 0
      %4541 = vmatpush2.bf16.msra.mxu0 0
      %4542 = vmatprep.subr.bf16.mxu0 0
      %4543 = vmatpush2.bf16.msra.mxu0 0
      %4544 = vmatprep.subr.bf16.mxu0 0
      %4545 = vmatpush2.bf16.msra.mxu0 0
      %4546 = vmatprep.subr.bf16.mxu0 0
      %4547 = vmatpush2.bf16.msra.mxu0 0
      %4548 = vmatprep.subr.bf16.mxu0 0
      %4549 = vmatpush2.bf16.msra.mxu0 0
      %4550 = vmatprep.mubr.bf16.mxu0 0
      %4551 = vmatmul.mubr.bf16.gmra.mxu0 %v3307
      %v4552 = vpop.f32.mrf.mxu0
      %v4553 = vadd.f32 0.0, %v4552
      %v4554 = vpop.f32.mrf.mxu0
      %v4555 = vpop.f32.mrf.mxu0
      %v4556 = vadd.f32 0.0, %v4555
      %v4557 = vpop.f32.mrf.mxu0
      %4558 = vmatprep.mubr.bf16.mxu0 0
      %4559 = vmatmul.mubr.bf16.gmra.mxu0 %v3310
      %v4560 = vpop.f32.mrf.mxu0
      %v4561 = vadd.f32 0.0, %v4560
      %v4562 = vpop.f32.mrf.mxu0
      %v4563 = vpop.f32.mrf.mxu0
      %v4564 = vadd.f32 0.0, %v4563
      %v4565 = vpop.f32.mrf.mxu0
      %4566 = vmatprep.mubr.bf16.mxu0 0
      %4567 = vmatmul.mubr.bf16.gmra.mxu0 %v3313
      %v4568 = vpop.f32.mrf.mxu0
      %v4569 = vadd.f32 0.0, %v4568
      %v4570 = vpop.f32.mrf.mxu0
      %v4571 = vpop.f32.mrf.mxu0
      %v4572 = vadd.f32 0.0, %v4571
      %v4573 = vpop.f32.mrf.mxu0
      %4574 = vmatprep.mubr.bf16.mxu0 0
      %4575 = vmatmul.mubr.bf16.gmra.mxu0 %v3316
      %v4576 = vpop.f32.mrf.mxu0
      %v4577 = vadd.f32 0.0, %v4576
      %v4578 = vpop.f32.mrf.mxu0
      %v4579 = vpop.f32.mrf.mxu0
      %v4580 = vadd.f32 0.0, %v4579
      %v4581 = vpop.f32.mrf.mxu0
      %4582 = vmatprep.mubr.bf16.mxu0 0
      %4583 = vmatmul.mubr.bf16.gmra.mxu0 %v3319
      %v4584 = vpop.f32.mrf.mxu0
      %v4585 = vadd.f32 0.0, %v4584
      %v4586 = vpop.f32.mrf.mxu0
      %v4587 = vpop.f32.mrf.mxu0
      %v4588 = vadd.f32 0.0, %v4587
      %v4589 = vpop.f32.mrf.mxu0
      %4590 = vmatprep.mubr.bf16.mxu0 0
      %4591 = vmatmul.mubr.bf16.gmra.mxu0 %v3322
      %v4592 = vpop.f32.mrf.mxu0
      %v4593 = vadd.f32 0.0, %v4592
      %v4594 = vpop.f32.mrf.mxu0
      %v4595 = vpop.f32.mrf.mxu0
      %v4596 = vadd.f32 0.0, %v4595
      %v4597 = vpop.f32.mrf.mxu0
      %4598 = vmatprep.mubr.bf16.mxu0 0
      %4599 = vmatmul.mubr.bf16.gmra.mxu0 %v3325
      %v4600 = vpop.f32.mrf.mxu0
      %v4601 = vadd.f32 0.0, %v4600
      %v4602 = vpop.f32.mrf.mxu0
      %v4603 = vpop.f32.mrf.mxu0
      %v4604 = vadd.f32 0.0, %v4603
      %v4605 = vpop.f32.mrf.mxu0
      %4606 = vmatprep.mubr.bf16.mxu0 0
      %4607 = vmatmul.mubr.bf16.gmra.mxu0 %v3328
      %v4608 = vpop.f32.mrf.mxu0
      %v4609 = vadd.f32 0.0, %v4608
      %v4610 = vpop.f32.mrf.mxu0
      %v4611 = vpop.f32.mrf.mxu0
      %v4612 = vadd.f32 0.0, %v4611
      %v4613 = vpop.f32.mrf.mxu0
      %4614 = vmatprep.mubr.bf16.mxu0 0
      %4615 = vmatmul.mubr.bf16.gmra.mxu0 %v3331
      %v4616 = vpop.f32.mrf.mxu0
      %v4617 = vadd.f32 0.0, %v4616
      %v4618 = vpop.f32.mrf.mxu0
      %v4619 = vpop.f32.mrf.mxu0
      %v4620 = vadd.f32 0.0, %v4619
      %v4621 = vpop.f32.mrf.mxu0
      %4622 = vmatprep.mubr.bf16.mxu0 0
      %4623 = vmatmul.mubr.bf16.gmra.mxu0 %v3334
      %v4624 = vpop.f32.mrf.mxu0
      %v4625 = vadd.f32 0.0, %v4624
      %v4626 = vpop.f32.mrf.mxu0
      %v4627 = vpop.f32.mrf.mxu0
      %v4628 = vadd.f32 0.0, %v4627
      %v4629 = vpop.f32.mrf.mxu0
      %4630 = vmatprep.mubr.bf16.mxu0 0
      %4631 = vmatmul.mubr.bf16.gmra.mxu0 %v3337
      %v4632 = vpop.f32.mrf.mxu0
      %v4633 = vadd.f32 0.0, %v4632
      %v4634 = vpop.f32.mrf.mxu0
      %v4635 = vpop.f32.mrf.mxu0
      %v4636 = vadd.f32 0.0, %v4635
      %v4637 = vpop.f32.mrf.mxu0
      %4638 = vmatprep.mubr.bf16.mxu0 0
      %4639 = vmatmul.mubr.bf16.gmra.mxu0 %v3340
      %v4640 = vpop.f32.mrf.mxu0
      %v4641 = vadd.f32 0.0, %v4640
      %v4642 = vpop.f32.mrf.mxu0
      %v4643 = vpop.f32.mrf.mxu0
      %v4644 = vadd.f32 0.0, %v4643
      %v4645 = vpop.f32.mrf.mxu0
      %4646 = vmatprep.mubr.bf16.mxu0 0
      %4647 = vmatmul.mubr.bf16.gmra.mxu0 %v3343
      %v4648 = vpop.f32.mrf.mxu0
      %v4649 = vadd.f32 0.0, %v4648
      %v4650 = vpop.f32.mrf.mxu0
      %v4651 = vpop.f32.mrf.mxu0
      %v4652 = vadd.f32 0.0, %v4651
      %v4653 = vpop.f32.mrf.mxu0
      %4654 = vmatprep.mubr.bf16.mxu0 0
      %4655 = vmatmul.mubr.bf16.gmra.mxu0 %v3346
      %v4656 = vpop.f32.mrf.mxu0
      %v4657 = vadd.f32 0.0, %v4656
      %v4658 = vpop.f32.mrf.mxu0
      %v4659 = vpop.f32.mrf.mxu0
      %v4660 = vadd.f32 0.0, %v4659
      %v4661 = vpop.f32.mrf.mxu0
      %4662 = vmatprep.mubr.bf16.mxu0 0
      %4663 = vmatmul.mubr.bf16.gmra.mxu0 %v3890
      %v4664 = vpop.f32.mrf.mxu0
      %v4665 = vadd.f32 0.0, %v4664
      %v4666 = vpop.f32.mrf.mxu0
      %v4667 = vpop.f32.mrf.mxu0
      %v4668 = vadd.f32 0.0, %v4667
      %v4669 = vpop.f32.mrf.mxu0
      %4670 = vmatprep.mubr.bf16.mxu0 0
      %4671 = vmatmul.mubr.bf16.gmra.mxu0 %v4513
      %v4672 = vpop.f32.mrf.mxu0
      %v4673 = vadd.f32 0.0, %v4672
      %v4674 = vpop.f32.mrf.mxu0
      %v4675 = vpop.f32.mrf.mxu0
      %v4676 = vadd.f32 0.0, %v4675
      %v4677 = vpop.f32.mrf.mxu0
      %4678 = vdwg.mxu0
      %v4679 = vadd.f32 %v4477, %v4553
      %v4680 = vadd.f32 %v4478, %v4556
      %v4681 = vadd.f32 %v4479, %v4561
      %v4682 = vadd.f32 %v4480, %v4564
      %v4683 = vadd.f32 %v4481, %v4569
      %v4684 = vadd.f32 %v4482, %v4572
      %v4685 = vadd.f32 %v4483, %v4577
      %v4686 = vadd.f32 %v4484, %v4580
      %v4687 = vadd.f32 %v4485, %v4585
      %v4688 = vadd.f32 %v4486, %v4588
      %v4689 = vadd.f32 %v4487, %v4593
      %v4690 = vadd.f32 %v4488, %v4596
      %v4691 = vadd.f32 %v4489, %v4601
      %v4692 = vadd.f32 %v4490, %v4604
      %v4693 = vadd.f32 %v4491, %v4609
      %v4694 = vadd.f32 %v4492, %v4612
      %v4695 = vadd.f32 %v4493, %v4617
      %v4696 = vadd.f32 %v4494, %v4620
      %v4697 = vadd.f32 %v4495, %v4625
      %v4698 = vadd.f32 %v4496, %v4628
      %v4699 = vadd.f32 %v4497, %v4633
      %v4700 = vadd.f32 %v4498, %v4636
      %v4701 = vadd.f32 %v4499, %v4641
      %v4702 = vadd.f32 %v4500, %v4644
      %v4703 = vadd.f32 %v4501, %v4649
      %v4704 = vadd.f32 %v4502, %v4652
      %v4705 = vadd.f32 %v4503, %v4657
      %v4706 = vadd.f32 %v4504, %v4660
      %v4707 = vadd.f32 %v4505, %v4665
      %v4708 = vadd.f32 %v4506, %v4668
      %v4709 = vadd.f32 %v4507, %v4673
      %v4710 = vadd.f32 %v4508, %v4676
      %v4714 = vrot.slane %v2890, 1
      %v4715 = vrot.slane %v2891, 1
      %v4716 = vsel %vm520, %v4714, %v4715
      %v4717 = vrot.slane %v2892, 1
      %v4718 = vsel %vm520, %v4715, %v4717
      %v4721 = vpack.c.bf16 %v4718, %v4716
      %s4722 = scalar_lea.vmem %s2, 28
      %v4723 = vld [vmem:[%s4722] sm:$0xf]
      %v4725 = vsel %vm312, %v4721, 0
      %v4728 = vsel %vm699, %v4723, 0
      %4730 = vmatprep.subr.bf16.mxu0 0
      %4731 = vmatpush1.bf16.msra.mxu0 0
      %4732 = vmatprep.subr.bf16.mxu0 0
      %4733 = vmatpush1.bf16.msra.mxu0 0
      %4734 = vmatprep.subr.bf16.mxu0 0
      %4735 = vmatpush1.bf16.msra.mxu0 0
      %4736 = vmatprep.subr.bf16.mxu0 0
      %4737 = vmatpush1.bf16.msra.mxu0 0
      %4738 = vmatprep.subr.bf16.mxu0 0
      %4739 = vmatpush1.bf16.msra.mxu0 0
      %4740 = vmatprep.subr.bf16.mxu0 0
      %4741 = vmatpush1.bf16.msra.mxu0 0
      %4742 = vmatprep.subr.bf16.mxu0 0
      %4743 = vmatpush1.bf16.msra.mxu0 0
      %4744 = vmatprep.subr.bf16.mxu0 0
      %4745 = vmatpush1.bf16.msra.mxu0 %v4728
      %4746 = vmatprep.subr.bf16.mxu0 0
      %4747 = vmatpush2.bf16.msra.mxu0 0
      %4748 = vmatprep.subr.bf16.mxu0 0
      %4749 = vmatpush2.bf16.msra.mxu0 0
      %4750 = vmatprep.subr.bf16.mxu0 0
      %4751 = vmatpush2.bf16.msra.mxu0 0
      %4752 = vmatprep.subr.bf16.mxu0 0
      %4753 = vmatpush2.bf16.msra.mxu0 0
      %4754 = vmatprep.subr.bf16.mxu0 0
      %4755 = vmatpush2.bf16.msra.mxu0 0
      %4756 = vmatprep.subr.bf16.mxu0 0
      %4757 = vmatpush2.bf16.msra.mxu0 0
      %4758 = vmatprep.subr.bf16.mxu0 0
      %4759 = vmatpush2.bf16.msra.mxu0 0
      %4760 = vmatprep.subr.bf16.mxu0 0
      %4761 = vmatpush2.bf16.msra.mxu0 0
      %4762 = vmatprep.mubr.bf16.mxu0 0
      %4763 = vmatmul.mubr.bf16.gmra.mxu0 %v3095
      %v4764 = vpop.f32.mrf.mxu0
      %v4765 = vadd.f32 0.0, %v4764
      %v4766 = vpop.f32.mrf.mxu0
      %v4767 = vpop.f32.mrf.mxu0
      %v4768 = vadd.f32 0.0, %v4767
      %v4769 = vpop.f32.mrf.mxu0
      %4770 = vmatprep.mubr.bf16.mxu0 0
      %4771 = vmatmul.mubr.bf16.gmra.mxu0 %v3098
      %v4772 = vpop.f32.mrf.mxu0
      %v4773 = vadd.f32 0.0, %v4772
      %v4774 = vpop.f32.mrf.mxu0
      %v4775 = vpop.f32.mrf.mxu0
      %v4776 = vadd.f32 0.0, %v4775
      %v4777 = vpop.f32.mrf.mxu0
      %4778 = vmatprep.mubr.bf16.mxu0 0
      %4779 = vmatmul.mubr.bf16.gmra.mxu0 %v3101
      %v4780 = vpop.f32.mrf.mxu0
      %v4781 = vadd.f32 0.0, %v4780
      %v4782 = vpop.f32.mrf.mxu0
      %v4783 = vpop.f32.mrf.mxu0
      %v4784 = vadd.f32 0.0, %v4783
      %v4785 = vpop.f32.mrf.mxu0
      %4786 = vmatprep.mubr.bf16.mxu0 0
      %4787 = vmatmul.mubr.bf16.gmra.mxu0 %v3104
      %v4788 = vpop.f32.mrf.mxu0
      %v4789 = vadd.f32 0.0, %v4788
      %v4790 = vpop.f32.mrf.mxu0
      %v4791 = vpop.f32.mrf.mxu0
      %v4792 = vadd.f32 0.0, %v4791
      %v4793 = vpop.f32.mrf.mxu0
      %4794 = vmatprep.mubr.bf16.mxu0 0
      %4795 = vmatmul.mubr.bf16.gmra.mxu0 %v3107
      %v4796 = vpop.f32.mrf.mxu0
      %v4797 = vadd.f32 0.0, %v4796
      %v4798 = vpop.f32.mrf.mxu0
      %v4799 = vpop.f32.mrf.mxu0
      %v4800 = vadd.f32 0.0, %v4799
      %v4801 = vpop.f32.mrf.mxu0
      %4802 = vmatprep.mubr.bf16.mxu0 0
      %4803 = vmatmul.mubr.bf16.gmra.mxu0 %v3110
      %v4804 = vpop.f32.mrf.mxu0
      %v4805 = vadd.f32 0.0, %v4804
      %v4806 = vpop.f32.mrf.mxu0
      %v4807 = vpop.f32.mrf.mxu0
      %v4808 = vadd.f32 0.0, %v4807
      %v4809 = vpop.f32.mrf.mxu0
      %4810 = vmatprep.mubr.bf16.mxu0 0
      %4811 = vmatmul.mubr.bf16.gmra.mxu0 %v3113
      %v4812 = vpop.f32.mrf.mxu0
      %v4813 = vadd.f32 0.0, %v4812
      %v4814 = vpop.f32.mrf.mxu0
      %v4815 = vpop.f32.mrf.mxu0
      %v4816 = vadd.f32 0.0, %v4815
      %v4817 = vpop.f32.mrf.mxu0
      %4818 = vmatprep.mubr.bf16.mxu0 0
      %4819 = vmatmul.mubr.bf16.gmra.mxu0 %v3116
      %v4820 = vpop.f32.mrf.mxu0
      %v4821 = vadd.f32 0.0, %v4820
      %v4822 = vpop.f32.mrf.mxu0
      %v4823 = vpop.f32.mrf.mxu0
      %v4824 = vadd.f32 0.0, %v4823
      %v4825 = vpop.f32.mrf.mxu0
      %4826 = vmatprep.mubr.bf16.mxu0 0
      %4827 = vmatmul.mubr.bf16.gmra.mxu0 %v3119
      %v4828 = vpop.f32.mrf.mxu0
      %v4829 = vadd.f32 0.0, %v4828
      %v4830 = vpop.f32.mrf.mxu0
      %v4831 = vpop.f32.mrf.mxu0
      %v4832 = vadd.f32 0.0, %v4831
      %v4833 = vpop.f32.mrf.mxu0
      %4834 = vmatprep.mubr.bf16.mxu0 0
      %4835 = vmatmul.mubr.bf16.gmra.mxu0 %v3122
      %v4836 = vpop.f32.mrf.mxu0
      %v4837 = vadd.f32 0.0, %v4836
      %v4838 = vpop.f32.mrf.mxu0
      %v4839 = vpop.f32.mrf.mxu0
      %v4840 = vadd.f32 0.0, %v4839
      %v4841 = vpop.f32.mrf.mxu0
      %4842 = vmatprep.mubr.bf16.mxu0 0
      %4843 = vmatmul.mubr.bf16.gmra.mxu0 %v3125
      %v4844 = vpop.f32.mrf.mxu0
      %v4845 = vadd.f32 0.0, %v4844
      %v4846 = vpop.f32.mrf.mxu0
      %v4847 = vpop.f32.mrf.mxu0
      %v4848 = vadd.f32 0.0, %v4847
      %v4849 = vpop.f32.mrf.mxu0
      %4850 = vmatprep.mubr.bf16.mxu0 0
      %4851 = vmatmul.mubr.bf16.gmra.mxu0 %v3128
      %v4852 = vpop.f32.mrf.mxu0
      %v4853 = vadd.f32 0.0, %v4852
      %v4854 = vpop.f32.mrf.mxu0
      %v4855 = vpop.f32.mrf.mxu0
      %v4856 = vadd.f32 0.0, %v4855
      %v4857 = vpop.f32.mrf.mxu0
      %4858 = vmatprep.mubr.bf16.mxu0 0
      %4859 = vmatmul.mubr.bf16.gmra.mxu0 %v3131
      %v4860 = vpop.f32.mrf.mxu0
      %v4861 = vadd.f32 0.0, %v4860
      %v4862 = vpop.f32.mrf.mxu0
      %v4863 = vpop.f32.mrf.mxu0
      %v4864 = vadd.f32 0.0, %v4863
      %v4865 = vpop.f32.mrf.mxu0
      %4866 = vmatprep.mubr.bf16.mxu0 0
      %4867 = vmatmul.mubr.bf16.gmra.mxu0 %v3134
      %v4868 = vpop.f32.mrf.mxu0
      %v4869 = vadd.f32 0.0, %v4868
      %v4870 = vpop.f32.mrf.mxu0
      %v4871 = vpop.f32.mrf.mxu0
      %v4872 = vadd.f32 0.0, %v4871
      %v4873 = vpop.f32.mrf.mxu0
      %4874 = vmatprep.mubr.bf16.mxu0 0
      %4875 = vmatmul.mubr.bf16.gmra.mxu0 %v4102
      %v4876 = vpop.f32.mrf.mxu0
      %v4877 = vadd.f32 0.0, %v4876
      %v4878 = vpop.f32.mrf.mxu0
      %v4879 = vpop.f32.mrf.mxu0
      %v4880 = vadd.f32 0.0, %v4879
      %v4881 = vpop.f32.mrf.mxu0
      %4882 = vmatprep.mubr.bf16.mxu0 0
      %4883 = vmatmul.mubr.bf16.gmra.mxu0 %v4725
      %v4884 = vpop.f32.mrf.mxu0
      %v4885 = vadd.f32 0.0, %v4884
      %v4886 = vpop.f32.mrf.mxu0
      %v4887 = vpop.f32.mrf.mxu0
      %v4888 = vadd.f32 0.0, %v4887
      %v4889 = vpop.f32.mrf.mxu0
      %4890 = vdwg.mxu0
      %v4891 = vadd.f32 %v4679, %v4765
      %v4892 = vadd.f32 %v4680, %v4768
      %v4893 = vadd.f32 %v4681, %v4773
      %v4894 = vadd.f32 %v4682, %v4776
      %v4895 = vadd.f32 %v4683, %v4781
      %v4896 = vadd.f32 %v4684, %v4784
      %v4897 = vadd.f32 %v4685, %v4789
      %v4898 = vadd.f32 %v4686, %v4792
      %v4899 = vadd.f32 %v4687, %v4797
      %v4900 = vadd.f32 %v4688, %v4800
      %v4901 = vadd.f32 %v4689, %v4805
      %v4902 = vadd.f32 %v4690, %v4808
      %v4903 = vadd.f32 %v4691, %v4813
      %v4904 = vadd.f32 %v4692, %v4816
      %v4905 = vadd.f32 %v4693, %v4821
      %v4906 = vadd.f32 %v4694, %v4824
      %v4907 = vadd.f32 %v4695, %v4829
      %v4908 = vadd.f32 %v4696, %v4832
      %v4909 = vadd.f32 %v4697, %v4837
      %v4910 = vadd.f32 %v4698, %v4840
      %v4911 = vadd.f32 %v4699, %v4845
      %v4912 = vadd.f32 %v4700, %v4848
      %v4913 = vadd.f32 %v4701, %v4853
      %v4914 = vadd.f32 %v4702, %v4856
      %v4915 = vadd.f32 %v4703, %v4861
      %v4916 = vadd.f32 %v4704, %v4864
      %v4917 = vadd.f32 %v4705, %v4869
      %v4918 = vadd.f32 %v4706, %v4872
      %v4919 = vadd.f32 %v4707, %v4877
      %v4920 = vadd.f32 %v4708, %v4880
      %v4921 = vadd.f32 %v4709, %v4885
      %v4922 = vadd.f32 %v4710, %v4888
      %v4923 = vrot.slane %v2890, 2
      %v4924 = vrot.slane %v2891, 2
      %v4925 = vsel %vm1076, %v4923, %v4924
      %v4926 = vrot.slane %v2892, 2
      %v4927 = vsel %vm1076, %v4924, %v4926
      %v4930 = vpack.c.bf16 %v4927, %v4925
      %s4931 = scalar_lea.vmem %s2, 32
      %v4932 = vld [vmem:[%s4931] sm:$0xf]
      %v4934 = vsel %vm312, %v4930, 0
      %v4937 = vsel %vm699, %v4932, 0
      %4939 = vmatprep.subr.bf16.mxu0 0
      %4940 = vmatpush1.bf16.msra.mxu0 0
      %4941 = vmatprep.subr.bf16.mxu0 0
      %4942 = vmatpush1.bf16.msra.mxu0 0
      %4943 = vmatprep.subr.bf16.mxu0 0
      %4944 = vmatpush1.bf16.msra.mxu0 0
      %4945 = vmatprep.subr.bf16.mxu0 0
      %4946 = vmatpush1.bf16.msra.mxu0 0
      %4947 = vmatprep.subr.bf16.mxu0 0
      %4948 = vmatpush1.bf16.msra.mxu0 0
      %4949 = vmatprep.subr.bf16.mxu0 0
      %4950 = vmatpush1.bf16.msra.mxu0 0
      %4951 = vmatprep.subr.bf16.mxu0 0
      %4952 = vmatpush1.bf16.msra.mxu0 0
      %4953 = vmatprep.subr.bf16.mxu0 0
      %4954 = vmatpush1.bf16.msra.mxu0 %v4937
      %4955 = vmatprep.subr.bf16.mxu0 0
      %4956 = vmatpush2.bf16.msra.mxu0 0
      %4957 = vmatprep.subr.bf16.mxu0 0
      %4958 = vmatpush2.bf16.msra.mxu0 0
      %4959 = vmatprep.subr.bf16.mxu0 0
      %4960 = vmatpush2.bf16.msra.mxu0 0
      %4961 = vmatprep.subr.bf16.mxu0 0
      %4962 = vmatpush2.bf16.msra.mxu0 0
      %4963 = vmatprep.subr.bf16.mxu0 0
      %4964 = vmatpush2.bf16.msra.mxu0 0
      %4965 = vmatprep.subr.bf16.mxu0 0
      %4966 = vmatpush2.bf16.msra.mxu0 0
      %4967 = vmatprep.subr.bf16.mxu0 0
      %4968 = vmatpush2.bf16.msra.mxu0 0
      %4969 = vmatprep.subr.bf16.mxu0 0
      %4970 = vmatpush2.bf16.msra.mxu0 0
      %4971 = vmatprep.mubr.bf16.mxu0 0
      %4972 = vmatmul.mubr.bf16.gmra.mxu0 %v3649
      %v4973 = vpop.f32.mrf.mxu0
      %v4974 = vadd.f32 0.0, %v4973
      %v4975 = vpop.f32.mrf.mxu0
      %v4976 = vpop.f32.mrf.mxu0
      %v4977 = vadd.f32 0.0, %v4976
      %v4978 = vpop.f32.mrf.mxu0
      %4979 = vmatprep.mubr.bf16.mxu0 0
      %4980 = vmatmul.mubr.bf16.gmra.mxu0 %v3652
      %v4981 = vpop.f32.mrf.mxu0
      %v4982 = vadd.f32 0.0, %v4981
      %v4983 = vpop.f32.mrf.mxu0
      %v4984 = vpop.f32.mrf.mxu0
      %v4985 = vadd.f32 0.0, %v4984
      %v4986 = vpop.f32.mrf.mxu0
      %4987 = vmatprep.mubr.bf16.mxu0 0
      %4988 = vmatmul.mubr.bf16.gmra.mxu0 %v3655
      %v4989 = vpop.f32.mrf.mxu0
      %v4990 = vadd.f32 0.0, %v4989
      %v4991 = vpop.f32.mrf.mxu0
      %v4992 = vpop.f32.mrf.mxu0
      %v4993 = vadd.f32 0.0, %v4992
      %v4994 = vpop.f32.mrf.mxu0
      %4995 = vmatprep.mubr.bf16.mxu0 0
      %4996 = vmatmul.mubr.bf16.gmra.mxu0 %v3658
      %v4997 = vpop.f32.mrf.mxu0
      %v4998 = vadd.f32 0.0, %v4997
      %v4999 = vpop.f32.mrf.mxu0
      %v5000 = vpop.f32.mrf.mxu0
      %v5001 = vadd.f32 0.0, %v5000
      %v5002 = vpop.f32.mrf.mxu0
      %5003 = vmatprep.mubr.bf16.mxu0 0
      %5004 = vmatmul.mubr.bf16.gmra.mxu0 %v3661
      %v5005 = vpop.f32.mrf.mxu0
      %v5006 = vadd.f32 0.0, %v5005
      %v5007 = vpop.f32.mrf.mxu0
      %v5008 = vpop.f32.mrf.mxu0
      %v5009 = vadd.f32 0.0, %v5008
      %v5010 = vpop.f32.mrf.mxu0
      %5011 = vmatprep.mubr.bf16.mxu0 0
      %5012 = vmatmul.mubr.bf16.gmra.mxu0 %v3664
      %v5013 = vpop.f32.mrf.mxu0
      %v5014 = vadd.f32 0.0, %v5013
      %v5015 = vpop.f32.mrf.mxu0
      %v5016 = vpop.f32.mrf.mxu0
      %v5017 = vadd.f32 0.0, %v5016
      %v5018 = vpop.f32.mrf.mxu0
      %5019 = vmatprep.mubr.bf16.mxu0 0
      %5020 = vmatmul.mubr.bf16.gmra.mxu0 %v3667
      %v5021 = vpop.f32.mrf.mxu0
      %v5022 = vadd.f32 0.0, %v5021
      %v5023 = vpop.f32.mrf.mxu0
      %v5024 = vpop.f32.mrf.mxu0
      %v5025 = vadd.f32 0.0, %v5024
      %v5026 = vpop.f32.mrf.mxu0
      %5027 = vmatprep.mubr.bf16.mxu0 0
      %5028 = vmatmul.mubr.bf16.gmra.mxu0 %v3670
      %v5029 = vpop.f32.mrf.mxu0
      %v5030 = vadd.f32 0.0, %v5029
      %v5031 = vpop.f32.mrf.mxu0
      %v5032 = vpop.f32.mrf.mxu0
      %v5033 = vadd.f32 0.0, %v5032
      %v5034 = vpop.f32.mrf.mxu0
      %5035 = vmatprep.mubr.bf16.mxu0 0
      %5036 = vmatmul.mubr.bf16.gmra.mxu0 %v3673
      %v5037 = vpop.f32.mrf.mxu0
      %v5038 = vadd.f32 0.0, %v5037
      %v5039 = vpop.f32.mrf.mxu0
      %v5040 = vpop.f32.mrf.mxu0
      %v5041 = vadd.f32 0.0, %v5040
      %v5042 = vpop.f32.mrf.mxu0
      %5043 = vmatprep.mubr.bf16.mxu0 0
      %5044 = vmatmul.mubr.bf16.gmra.mxu0 %v3676
      %v5045 = vpop.f32.mrf.mxu0
      %v5046 = vadd.f32 0.0, %v5045
      %v5047 = vpop.f32.mrf.mxu0
      %v5048 = vpop.f32.mrf.mxu0
      %v5049 = vadd.f32 0.0, %v5048
      %v5050 = vpop.f32.mrf.mxu0
      %5051 = vmatprep.mubr.bf16.mxu0 0
      %5052 = vmatmul.mubr.bf16.gmra.mxu0 %v3679
      %v5053 = vpop.f32.mrf.mxu0
      %v5054 = vadd.f32 0.0, %v5053
      %v5055 = vpop.f32.mrf.mxu0
      %v5056 = vpop.f32.mrf.mxu0
      %v5057 = vadd.f32 0.0, %v5056
      %v5058 = vpop.f32.mrf.mxu0
      %5059 = vmatprep.mubr.bf16.mxu0 0
      %5060 = vmatmul.mubr.bf16.gmra.mxu0 %v3682
      %v5061 = vpop.f32.mrf.mxu0
      %v5062 = vadd.f32 0.0, %v5061
      %v5063 = vpop.f32.mrf.mxu0
      %v5064 = vpop.f32.mrf.mxu0
      %v5065 = vadd.f32 0.0, %v5064
      %v5066 = vpop.f32.mrf.mxu0
      %5067 = vmatprep.mubr.bf16.mxu0 0
      %5068 = vmatmul.mubr.bf16.gmra.mxu0 %v3685
      %v5069 = vpop.f32.mrf.mxu0
      %v5070 = vadd.f32 0.0, %v5069
      %v5071 = vpop.f32.mrf.mxu0
      %v5072 = vpop.f32.mrf.mxu0
      %v5073 = vadd.f32 0.0, %v5072
      %v5074 = vpop.f32.mrf.mxu0
      %5075 = vmatprep.mubr.bf16.mxu0 0
      %5076 = vmatmul.mubr.bf16.gmra.mxu0 %v3688
      %v5077 = vpop.f32.mrf.mxu0
      %v5078 = vadd.f32 0.0, %v5077
      %v5079 = vpop.f32.mrf.mxu0
      %v5080 = vpop.f32.mrf.mxu0
      %v5081 = vadd.f32 0.0, %v5080
      %v5082 = vpop.f32.mrf.mxu0
      %5083 = vmatprep.mubr.bf16.mxu0 0
      %5084 = vmatmul.mubr.bf16.gmra.mxu0 %v4311
      %v5085 = vpop.f32.mrf.mxu0
      %v5086 = vadd.f32 0.0, %v5085
      %v5087 = vpop.f32.mrf.mxu0
      %v5088 = vpop.f32.mrf.mxu0
      %v5089 = vadd.f32 0.0, %v5088
      %v5090 = vpop.f32.mrf.mxu0
      %5091 = vmatprep.mubr.bf16.mxu0 0
      %5092 = vmatmul.mubr.bf16.gmra.mxu0 %v4934
      %v5093 = vpop.f32.mrf.mxu0
      %v5094 = vadd.f32 0.0, %v5093
      %v5095 = vpop.f32.mrf.mxu0
      %v5096 = vpop.f32.mrf.mxu0
      %v5097 = vadd.f32 0.0, %v5096
      %v5098 = vpop.f32.mrf.mxu0
      %5099 = vdwg.mxu0
      %v5100 = vadd.f32 %v4891, %v4974
      %v5101 = vadd.f32 %v4892, %v4977
      %v5102 = vadd.f32 %v4893, %v4982
      %v5103 = vadd.f32 %v4894, %v4985
      %v5104 = vadd.f32 %v4895, %v4990
      %v5105 = vadd.f32 %v4896, %v4993
      %v5106 = vadd.f32 %v4897, %v4998
      %v5107 = vadd.f32 %v4898, %v5001
      %v5108 = vadd.f32 %v4899, %v5006
      %v5109 = vadd.f32 %v4900, %v5009
      %v5110 = vadd.f32 %v4901, %v5014
      %v5111 = vadd.f32 %v4902, %v5017
      %v5112 = vadd.f32 %v4903, %v5022
      %v5113 = vadd.f32 %v4904, %v5025
      %v5114 = vadd.f32 %v4905, %v5030
      %v5115 = vadd.f32 %v4906, %v5033
      %v5116 = vadd.f32 %v4907, %v5038
      %v5117 = vadd.f32 %v4908, %v5041
      %v5118 = vadd.f32 %v4909, %v5046
      %v5119 = vadd.f32 %v4910, %v5049
      %v5120 = vadd.f32 %v4911, %v5054
      %v5121 = vadd.f32 %v4912, %v5057
      %v5122 = vadd.f32 %v4913, %v5062
      %v5123 = vadd.f32 %v4914, %v5065
      %v5124 = vadd.f32 %v4915, %v5070
      %v5125 = vadd.f32 %v4916, %v5073
      %v5126 = vadd.f32 %v4917, %v5078
      %v5127 = vadd.f32 %v4918, %v5081
      %v5128 = vadd.f32 %v4919, %v5086
      %v5129 = vadd.f32 %v4920, %v5089
      %v5130 = vadd.f32 %v4921, %v5094
      %v5131 = vadd.f32 %v4922, %v5097
      %v5132 = vld [vmem:[%s5] sm:$0x1]
      %v5134 = vlaneseq
      %v5135 = vshrl.u32 %v5134, 7
      %v5136 = vsub.s32 0, %v5135
      %v5137 = vrot.slane %v5132, %v5136
      %v5139 = vmul.f32 %v5100, %v5137
      %v5140 = vmul.f32 %v5101, %v5137
      %v5141 = vmul.f32 %v5102, %v5137
      %v5142 = vmul.f32 %v5103, %v5137
      %v5143 = vmul.f32 %v5104, %v5137
      %v5144 = vmul.f32 %v5105, %v5137
      %v5145 = vmul.f32 %v5106, %v5137
      %v5146 = vmul.f32 %v5107, %v5137
      %v5147 = vmul.f32 %v5108, %v5137
      %v5148 = vmul.f32 %v5109, %v5137
      %v5149 = vmul.f32 %v5110, %v5137
      %v5150 = vmul.f32 %v5111, %v5137
      %v5151 = vmul.f32 %v5112, %v5137
      %v5152 = vmul.f32 %v5113, %v5137
      %v5153 = vmul.f32 %v5114, %v5137
      %v5154 = vmul.f32 %v5115, %v5137
      %v5155 = vmul.f32 %v5116, %v5137
      %v5156 = vmul.f32 %v5117, %v5137
      %v5157 = vmul.f32 %v5118, %v5137
      %v5158 = vmul.f32 %v5119, %v5137
      %v5159 = vmul.f32 %v5120, %v5137
      %v5160 = vmul.f32 %v5121, %v5137
      %v5161 = vmul.f32 %v5122, %v5137
      %v5162 = vmul.f32 %v5123, %v5137
      %v5163 = vmul.f32 %v5124, %v5137
      %v5164 = vmul.f32 %v5125, %v5137
      %v5165 = vmul.f32 %v5126, %v5137
      %v5166 = vmul.f32 %v5127, %v5137
      %v5167 = vmul.f32 %v5128, %v5137
      %v5168 = vmul.f32 %v5129, %v5137
      %v5169 = vmul.f32 %v5130, %v5137
      %v5170 = vmul.f32 %v5131, %v5137
      %v5171 = vld [vmem:[%s6] sm:$0x1]
      %v5173 = vlaneseq
      %v5174 = vshrl.u32 %v5173, 7
      %v5175 = vsub.s32 0, %v5174
      %v5176 = vrot.slane %v5171, %v5175
      %v5178 = vadd.f32 %v5139, %v5176
      %v5179 = vadd.f32 %v5140, %v5176
      %v5180 = vadd.f32 %v5141, %v5176
      %v5181 = vadd.f32 %v5142, %v5176
      %v5182 = vadd.f32 %v5143, %v5176
      %v5183 = vadd.f32 %v5144, %v5176
      %v5184 = vadd.f32 %v5145, %v5176
      %v5185 = vadd.f32 %v5146, %v5176
      %v5186 = vadd.f32 %v5147, %v5176
      %v5187 = vadd.f32 %v5148, %v5176
      %v5188 = vadd.f32 %v5149, %v5176
      %v5189 = vadd.f32 %v5150, %v5176
      %v5190 = vadd.f32 %v5151, %v5176
      %v5191 = vadd.f32 %v5152, %v5176
      %v5192 = vadd.f32 %v5153, %v5176
      %v5193 = vadd.f32 %v5154, %v5176
      %v5194 = vadd.f32 %v5155, %v5176
      %v5195 = vadd.f32 %v5156, %v5176
      %v5196 = vadd.f32 %v5157, %v5176
      %v5197 = vadd.f32 %v5158, %v5176
      %v5198 = vadd.f32 %v5159, %v5176
      %v5199 = vadd.f32 %v5160, %v5176
      %v5200 = vadd.f32 %v5161, %v5176
      %v5201 = vadd.f32 %v5162, %v5176
      %v5202 = vadd.f32 %v5163, %v5176
      %v5203 = vadd.f32 %v5164, %v5176
      %v5204 = vadd.f32 %v5165, %v5176
      %v5205 = vadd.f32 %v5166, %v5176
      %v5206 = vadd.f32 %v5167, %v5176
      %v5207 = vadd.f32 %v5168, %v5176
      %v5208 = vadd.f32 %v5169, %v5176
      %v5209 = vadd.f32 %v5170, %v5176
      %v5210 = vadd.f32 %v5178, %v280
      %v5211 = vadd.f32 %v5179, %v281
      %v5212 = vadd.f32 %v5180, %v282
      %v5213 = vadd.f32 %v5181, %v283
      %v5214 = vadd.f32 %v5182, %v284
      %v5215 = vadd.f32 %v5183, %v285
      %v5216 = vadd.f32 %v5184, %v286
      %v5217 = vadd.f32 %v5185, %v287
      %v5218 = vadd.f32 %v5186, %v288
      %v5219 = vadd.f32 %v5187, %v289
      %v5220 = vadd.f32 %v5188, %v290
      %v5221 = vadd.f32 %v5189, %v291
      %v5222 = vadd.f32 %v5190, %v292
      %v5223 = vadd.f32 %v5191, %v293
      %v5224 = vadd.f32 %v5192, %v294
      %v5225 = vadd.f32 %v5193, %v295
      %v5226 = vadd.f32 %v5194, %v296
      %v5227 = vadd.f32 %v5195, %v297
      %v5228 = vadd.f32 %v5196, %v298
      %v5229 = vadd.f32 %v5197, %v299
      %v5230 = vadd.f32 %v5198, %v300
      %v5231 = vadd.f32 %v5199, %v301
      %v5232 = vadd.f32 %v5200, %v302
      %v5233 = vadd.f32 %v5201, %v303
      %v5234 = vadd.f32 %v5202, %v304
      %v5235 = vadd.f32 %v5203, %v305
      %v5236 = vadd.f32 %v5204, %v306
      %v5237 = vadd.f32 %v5205, %v307
      %v5238 = vadd.f32 %v5206, %v308
      %v5239 = vadd.f32 %v5207, %v309
      %v5240 = vadd.f32 %v5208, %v310
      %v5241 = vadd.f32 %v5209, %v311
      %v5242 = vmax.f32 %v5210, 0.0
      %v5243 = vmax.f32 %v5211, 0.0
      %v5244 = vmax.f32 %v5212, 0.0
      %v5245 = vmax.f32 %v5213, 0.0
      %v5246 = vmax.f32 %v5214, 0.0
      %v5247 = vmax.f32 %v5215, 0.0
      %v5248 = vmax.f32 %v5216, 0.0
      %v5249 = vmax.f32 %v5217, 0.0
      %v5250 = vmax.f32 %v5218, 0.0
      %v5251 = vmax.f32 %v5219, 0.0
      %v5252 = vmax.f32 %v5220, 0.0
      %v5253 = vmax.f32 %v5221, 0.0
      %v5254 = vmax.f32 %v5222, 0.0
      %v5255 = vmax.f32 %v5223, 0.0
      %v5256 = vmax.f32 %v5224, 0.0
      %v5257 = vmax.f32 %v5225, 0.0
      %v5258 = vmax.f32 %v5226, 0.0
      %v5259 = vmax.f32 %v5227, 0.0
      %v5260 = vmax.f32 %v5228, 0.0
      %v5261 = vmax.f32 %v5229, 0.0
      %v5262 = vmax.f32 %v5230, 0.0
      %v5263 = vmax.f32 %v5231, 0.0
      %v5264 = vmax.f32 %v5232, 0.0
      %v5265 = vmax.f32 %v5233, 0.0
      %v5266 = vmax.f32 %v5234, 0.0
      %v5267 = vmax.f32 %v5235, 0.0
      %v5268 = vmax.f32 %v5236, 0.0
      %v5269 = vmax.f32 %v5237, 0.0
      %v5270 = vmax.f32 %v5238, 0.0
      %v5271 = vmax.f32 %v5239, 0.0
      %v5272 = vmax.f32 %v5240, 0.0
      %v5273 = vmax.f32 %v5241, 0.0
      %5274 = vst.msk [vmem:[%s278] sm:$0xff] %vm312, %v5242
      %5275 = vst.msk [vmem:[%s278 + $0x8] sm:$0xff] %vm312, %v5243
      %5276 = vst.msk [vmem:[%s278 + $0x10] sm:$0xff] %vm312, %v5244
      %5277 = vst.msk [vmem:[%s278 + $0x18] sm:$0xff] %vm312, %v5245
      %5278 = vst.msk [vmem:[%s278 + $0x20] sm:$0xff] %vm312, %v5246
      %5279 = vst.msk [vmem:[%s278 + $0x28] sm:$0xff] %vm312, %v5247
      %5280 = vst.msk [vmem:[%s278 + $0x30] sm:$0xff] %vm312, %v5248
      %5281 = vst.msk [vmem:[%s278 + $0x38] sm:$0xff] %vm312, %v5249
      %5282 = vst.msk [vmem:[%s278 + $0x40] sm:$0xff] %vm312, %v5250
      %5283 = vst.msk [vmem:[%s278 + $0x48] sm:$0xff] %vm312, %v5251
      %5284 = vst.msk [vmem:[%s278 + $0x50] sm:$0xff] %vm312, %v5252
      %5285 = vst.msk [vmem:[%s278 + $0x58] sm:$0xff] %vm312, %v5253
      %5286 = vst.msk [vmem:[%s278 + $0x60] sm:$0xff] %vm312, %v5254
      %5287 = vst.msk [vmem:[%s278 + $0x68] sm:$0xff] %vm312, %v5255
      %5288 = vst.msk [vmem:[%s278 + $0x70] sm:$0xff] %vm312, %v5256
      %5289 = vst.msk [vmem:[%s278 + $0x78] sm:$0xff] %vm312, %v5257
      %5290 = vst.msk [vmem:[%s278 + $0x80] sm:$0xff] %vm312, %v5258
      %5291 = vst.msk [vmem:[%s278 + $0x88] sm:$0xff] %vm312, %v5259
      %5292 = vst.msk [vmem:[%s278 + $0x90] sm:$0xff] %vm312, %v5260
      %5293 = vst.msk [vmem:[%s278 + $0x98] sm:$0xff] %vm312, %v5261
      %5294 = vst.msk [vmem:[%s278 + $0xa0] sm:$0xff] %vm312, %v5262
      %5295 = vst.msk [vmem:[%s278 + $0xa8] sm:$0xff] %vm312, %v5263
      %5296 = vst.msk [vmem:[%s278 + $0xb0] sm:$0xff] %vm312, %v5264
      %5297 = vst.msk [vmem:[%s278 + $0xb8] sm:$0xff] %vm312, %v5265
      %5298 = vst.msk [vmem:[%s278 + $0xc0] sm:$0xff] %vm312, %v5266
      %5299 = vst.msk [vmem:[%s278 + $0xc8] sm:$0xff] %vm312, %v5267
      %5300 = vst.msk [vmem:[%s278 + $0xd0] sm:$0xff] %vm312, %v5268
      %5301 = vst.msk [vmem:[%s278 + $0xd8] sm:$0xff] %vm312, %v5269
      %5302 = vst.msk [vmem:[%s278 + $0xe0] sm:$0xff] %vm312, %v5270
      %5303 = vst.msk [vmem:[%s278 + $0xe8] sm:$0xff] %vm312, %v5271
      %5304 = vst.msk [vmem:[%s278 + $0xf0] sm:$0xff] %vm312, %v5272
      %5305 = vst.msk [vmem:[%s278 + $0xf8] sm:$0xff] %vm312, %v5273
      %p5306 = scmp.lt.s32.totalorder %s18, 1
      %s5307 = scalar_select %p5306, %s18, 1
      %s5308 = smul.addr %s5307, 32
      %s5309 = smul.addr %s5308, 8
      %s5310 = scalar_lea.vmem %s7, %s5309
      // Predicated region
      $region49: #{tpu_custom_call.1} parent=47 // pred_check
        %p5311 = pneg %p188
      $region50: #{tpu_custom_call.1} parent=47 // pred_check_branch
        %5313 = sbr.rel (%p5311) target = $region52
      $region51: #{tpu_custom_call.1} parent=47 // pred_region
        _
      $region52: #{tpu_custom_call.1} parent=47 // pred_fallthru
        _
    $region48: #{tpu_custom_call.1} parent=5 // pred_fallthru
      _
    %p5314 = scmp.le.s32.totalorder 2, %s13
    // Predicated region
    $region53: #{tpu_custom_call.1} parent=5 // pred_check
      %p5315 = pneg %p5314
    $region54: #{tpu_custom_call.1} parent=5 // pred_check_branch
      %5317 = sbr.rel (%p5315) target = $region56
    $region55: #{tpu_custom_call.1} parent=5 // pred_region
      %s5318 = ssub.s32 %s13, 2
      // Predicated region
      $region57: #{tpu_custom_call.1} parent=55 // pred_check
        %p5319 = pneg %p194
      $region58: #{tpu_custom_call.1} parent=55 // pred_check_branch
        %5321 = sbr.rel (%p5319) target = $region60
      $region59: #{tpu_custom_call.1} parent=55 // pred_region
        %p5322 = scmp.lt.s32.totalorder %s19, 1
        %s5323 = scalar_select %p5322, %s19, 1
        %s5324 = smul.addr %s5323, 32
        %s5325 = smul.addr %s5324, 8
        %s5326 = scalar_lea.vmem %s7, %s5325
      $region60: #{tpu_custom_call.1} parent=55 // pred_fallthru
        _
    $region56: #{tpu_custom_call.1} parent=5 // pred_fallthru
      _
  $region6: #{tpu_custom_call.1} parent=0 // loop_footer
    %s17 = sadd.s32 1, %s13
  $region7: #{tpu_custom_call.1} parent=0 // loop_footer_branch
    %12 = sbr.rel target = $region3
  $region8: #{tpu_custom_call.1} parent=0 // loop_exit
    _

</llo_original>
